<compile_context>
chip_gen: v7x
topology: tpu7x:2x2x1
jax: 0.10.0
libtpu: 0.0.40
codegen_flags: <defaults>
</compile_context>

<pallas_src>
import jax
import jax.numpy as jnp
from jax import lax
from jax.experimental import pallas as pl
from jax.experimental.pallas import tpu as pltpu

# ----------------------------- config ---------------------------------------
IMG = 32            # args.input_size (scaled down)
PATCH = 16
IN_CH = 3
D = 128             # n_embd   (gpt2-medium: 1024)
N_HEAD = 4          # n_head   (gpt2-medium: 16)
N_LAYER = 2         # n_layer  (gpt2-medium: 24)
N_CLASSES = 10      # args.nb_classes
B = 2
N_PATCH = (IMG // PATCH) ** 2          # sequence length T
P = IN_CH * PATCH * PATCH              # flattened patch dim
M = B * N_PATCH                        # fused batch*seq rows for all matmuls
HD = D // N_HEAD
C_PAD = 128                            # lane-dense classifier output width
LN_EPS = 1e-5

# TODO(synk): dropout layers (embd/attn/resid) are identity in eval mode and
# are omitted; pretrained-weight loading / layer freezing are training-time
# concerns with no forward-pass effect.
# TODO(synk): at real GPT2-medium scale: (a) move layers onto a grid axis (or
# lax.fori_loop) with streamed / double-buffered layer weights instead of the
# all-resident VMEM layout (wfc+wout alone ~16 MB bf16 per layer), (b) tile
# attention over KV blocks (flash structure) instead of the full (H, M, M)
# score tensor, and (c) add a "parallel" grid axis over rows so v7x uses both
# TensorCores.  Unnecessary at this toy size.


# ----------------------------- kernel ---------------------------------------
def _layernorm(v, g, b):
    # statistics and affine in f32 (v5e has no bf16 VPU/EUP)
    mu = jnp.mean(v, axis=-1, keepdims=True)
    var = jnp.mean((v - mu) ** 2, axis=-1, keepdims=True)
    return (v - mu) * lax.rsqrt(var + LN_EPS) * g + b


def fused_forward_kernel(patches_ref, pos_ref, bid_row_ref, bid_col_ref,
                         w_pe_ref,
                         ln1_g_ref, ln1_b_ref, wqkv_ref, bqkv_ref,
                         wproj_ref, bproj_ref,
                         ln2_g_ref, ln2_b_ref,
                         wfc_ref, bfc_ref, wout_ref, bout_ref,
                         lnf_g_ref, lnf_b_ref, wcls_ref, bcls_ref,
                         o_ref):
    scale = 1.0 / jnp.sqrt(jnp.float32(HD))

    # causal + batch-block-diagonal mask built in-kernel (iota + O(M) batch-id
    # vectors instead of an O(M^2) f32 constant DMA'd from HBM)
    row = lax.broadcasted_iota(jnp.int32, (M, M), 0)
    col = lax.broadcasted_iota(jnp.int32, (M, M), 1)
    keep = (col <= row) & (bid_row_ref[...] == bid_col_ref[...])   # (M, M)
    mask_bias = jnp.where(keep, 0.0, -1e30).astype(jnp.float32)    # hoisted

    # ---- patch embedding (Conv2d k=16,s=16 == matmul) + position embedding --
    h = jnp.dot(patches_ref[...], w_pe_ref[...],
                preferred_element_type=jnp.float32)
    h = h + pos_ref[...]                                           # (M, D) f32

    # leading-head batched matmul dimension numbers
    dn_qkt = (((2,), (2,)), ((0,), (0,)))   # (H,M,HD) x (H,M,HD) -> (H,M,M)
    dn_pv = (((2,), (1,)), ((0,), (0,)))    # (H,M,M)  x (H,M,HD) -> (H,M,HD)

    def split_heads(x2d):                   # (M, D) bf16 -> (H, M, HD) bf16
        return jnp.stack(
            [x2d[:, hh * HD:(hh + 1) * HD] for hh in range(N_HEAD)], axis=0)

    for l in range(N_LAYER):                # static unroll (fine at N_LAYER=2)
        # ---------------- attention (pre-LN, causal) ----------------
        xn = _layernorm(h, ln1_g_ref[l], ln1_b_ref[l]).astype(jnp.bfloat16)

        # fused QKV: one lane-dense N=3D matmul
        qkv = jnp.dot(xn, wqkv_ref[l],
                      preferred_element_type=jnp.float32) + bqkv_ref[l]
        qkvb = qkv.astype(jnp.bfloat16)                           # (M, 3D)
        q = split_heads(qkvb[:, 0:D])
        k = split_heads(qkvb[:, D:2 * D])
        v = split_heads(qkvb[:, 2 * D:3 * D])

        # scores: (H, M, HD) x (H, M, HD) -> (H, M, M), f32 accumulate
        s = lax.dot_general(q, k, dn_qkt,
                            preferred_element_type=jnp.float32) * scale
        s = s + mask_bias                                          # broadcast H
        s = s - jnp.max(s, axis=-1, keepdims=True)
        p = jnp.exp(s)
        p = p * pl.reciprocal(jnp.sum(p, axis=-1, keepdims=True), approx=True)

        # context: (H, M, M) x (H, M, HD) -> (H, M, HD)
        ctx = lax.dot_general(p.astype(jnp.bfloat16), v, dn_pv,
                              preferred_element_type=jnp.float32)
        # merge heads back into the lane axis -> single (M, D) x (D, D) proj
        ctx2d = jnp.concatenate([ctx[hh] for hh in range(N_HEAD)], axis=-1)
        attn = jnp.dot(ctx2d.astype(jnp.bfloat16), wproj_ref[l],
                       preferred_element_type=jnp.float32) + bproj_ref[l]
        h = h + attn

        # ---------------- MLP (gelu_new) ----------------
        xn2 = _layernorm(h, ln2_g_ref[l], ln2_b_ref[l]).astype(jnp.bfloat16)
        hm = jnp.dot(xn2, wfc_ref[l],
                     preferred_element_type=jnp.float32) + bfc_ref[l]
        c = jnp.sqrt(jnp.float32(2.0 / jnp.pi))
        hm = 0.5 * hm * (1.0 + jnp.tanh(c * (hm + 0.044715 * hm ** 3)))
        h = h + jnp.dot(hm.astype(jnp.bfloat16), wout_ref[l],
                        preferred_element_type=jnp.float32) + bout_ref[l]

    # ---- last-token rows only -> final LN -> classifier ----
    h_last = jnp.concatenate(
        [lax.slice(h, (b * N_PATCH + N_PATCH - 1, 0),
                   (b * N_PATCH + N_PATCH, D)) for b in range(B)], axis=0)
    xf = _layernorm(h_last, lnf_g_ref[...], lnf_b_ref[...]).astype(jnp.bfloat16)
    o_ref[...] = jnp.dot(xf, wcls_ref[...],
                         preferred_element_type=jnp.float32) + bcls_ref[...]


# ----------------------------- wrapper ---------------------------------------
def model_forward(x, params):
    # patchify NCHW -> (B*T, P), pixel order (c, ph, pw) == conv-weight order
    hp = IMG // PATCH
    patches = x.reshape(B, IN_CH, hp, PATCH, hp, PATCH)
    patches = patches.transpose(0, 2, 4, 1, 3, 5).reshape(M, P)
    patches = patches.astype(jnp.bfloat16)

    # tiny O(M) batch-id vectors for the in-kernel mask (constant under jit)
    bid = (jnp.arange(M, dtype=jnp.int32) // N_PATCH)
    bid_row = bid.reshape(M, 1)
    bid_col = bid.reshape(1, M)

    vmem = pl.BlockSpec(memory_space=pltpu.MemorySpace.VMEM)
    out = pl.pallas_call(
        fused_forward_kernel,
        out_shape=jax.ShapeDtypeStruct((B, C_PAD), jnp.float32),
        in_specs=[vmem] * 21,
        out_specs=vmem,
    )(patches, params['pos'], bid_row, bid_col, params['w_pe'],
      params['ln1_g'], params['ln1_b'], params['wqkv'], params['bqkv'],
      params['wproj'], params['bproj'],
      params['ln2_g'], params['ln2_b'],
      params['wfc'], params['bfc'], params['wout'], params['bout'],
      params['lnf_g'], params['lnf_b'], params['w_cls'], params['b_cls'])

    # drop lane padding of the classifier output
    return out[:, :N_CLASSES]


# ----------------------------- init ------------------------------------------
def init_params(key):
    keys = jax.random.split(key, 3 + N_LAYER)
    bf = jnp.bfloat16

    # patch-embed: xavier_uniform over the (D, P)-flattened conv weight
    a = (6.0 / (P + D)) ** 0.5
    w_pe = jax.random.uniform(keys[0], (P, D), jnp.float32, -a, a)
    b_pe = jnp.zeros((1, D), jnp.float32)                      # conv bias
    wpe = 0.02 * jax.random.normal(keys[1], (N_PATCH, D), jnp.float32)
    # pre-tile position embedding to (M, D) once at init, fold in conv bias
    pos = jnp.tile(wpe, (B, 1)) + b_pe

    resid_scale = 1.0 / (2 * N_LAYER) ** 0.5                   # GPT-2 c_proj scaling

    ln1_g, ln1_b, ln2_g, ln2_b = [], [], [], []
    wqkv, bqkv, wproj, bproj, wfc, bfc, wout, bout = [], [], [], [], [], [], [], []
    for i in range(N_LAYER):
        k = jax.random.split(keys[2 + i], 4)
        wqkv.append(0.02 * jax.random.normal(k[0], (D, 3 * D), jnp.float32))
        bqkv.append(jnp.zeros((1, 3 * D), jnp.float32))
        wproj.append(0.02 * resid_scale *
                     jax.random.normal(k[1], (D, D), jnp.float32))
        bproj.append(jnp.zeros((1, D), jnp.float32))
        ln1_g.append(jnp.ones((1, D), jnp.float32))
        ln1_b.append(jnp.zeros((1, D), jnp.float32))
        ln2_g.append(jnp.ones((1, D), jnp.float32))
        ln2_b.append(jnp.zeros((1, D), jnp.float32))
        wfc.append(0.02 * jax.random.normal(k[2], (D, 4 * D), jnp.float32))
        bfc.append(jnp.zeros((1, 4 * D), jnp.float32))
        wout.append(0.02 * resid_scale *
                    jax.random.normal(k[3], (4 * D, D), jnp.float32))
        bout.append(jnp.zeros((1, D), jnp.float32))

    w_cls = 0.02 * jax.random.normal(keys[2 + N_LAYER], (D, N_CLASSES),
                                     jnp.float32)
    w_cls_pad = jnp.zeros((D, C_PAD), jnp.float32).at[:, :N_CLASSES].set(w_cls)

    return dict(
        w_pe=w_pe.astype(bf),
        pos=pos,
        ln1_g=jnp.stack(ln1_g), ln1_b=jnp.stack(ln1_b),
        wqkv=jnp.stack(wqkv).astype(bf), bqkv=jnp.stack(bqkv),
        wproj=jnp.stack(wproj).astype(bf), bproj=jnp.stack(bproj),
        ln2_g=jnp.stack(ln2_g), ln2_b=jnp.stack(ln2_b),
        wfc=jnp.stack(wfc).astype(bf), bfc=jnp.stack(bfc),
        wout=jnp.stack(wout).astype(bf), bout=jnp.stack(bout),
        lnf_g=jnp.ones((1, D), jnp.float32),
        lnf_b=jnp.zeros((1, D), jnp.float32),
        w_cls=w_cls_pad.astype(bf),
        b_cls=jnp.zeros((1, C_PAD), jnp.float32),
    )


# ----------------------------- main ------------------------------------------
if __name__ == "__main__":
    key = jax.random.PRNGKey(0)
    pkey, xkey = jax.random.split(key)
    params = init_params(pkey)
    x = jax.random.normal(xkey, (B, IN_CH, IMG, IMG), jnp.float32)   # NCHW

    fwd = jax.jit(model_forward)
    logits = fwd(x, params)
    jax.block_until_ready(logits)
    assert logits.shape == (B, N_CLASSES)
    assert bool(jnp.all(jnp.isfinite(logits)))
    print("KERNEL_OK")
</pallas_src>

<mosaic_0001>
module attributes {stable_mosaic.version = 11 : i64} {
  func.func @fused_forward_kernel(%arg0: memref<8x768xbf16, #tpu.memory_space<vmem>>, %arg1: memref<8x128xf32, #tpu.memory_space<vmem>>, %arg2: memref<8x1xi32, #tpu.memory_space<vmem>>, %arg3: memref<1x8xi32, #tpu.memory_space<vmem>>, %arg4: memref<768x128xbf16, #tpu.memory_space<vmem>>, %arg5: memref<2x1x128xf32, #tpu.memory_space<vmem>>, %arg6: memref<2x1x128xf32, #tpu.memory_space<vmem>>, %arg7: memref<2x128x384xbf16, #tpu.memory_space<vmem>>, %arg8: memref<2x1x384xf32, #tpu.memory_space<vmem>>, %arg9: memref<2x128x128xbf16, #tpu.memory_space<vmem>>, %arg10: memref<2x1x128xf32, #tpu.memory_space<vmem>>, %arg11: memref<2x1x128xf32, #tpu.memory_space<vmem>>, %arg12: memref<2x1x128xf32, #tpu.memory_space<vmem>>, %arg13: memref<2x128x512xbf16, #tpu.memory_space<vmem>>, %arg14: memref<2x1x512xf32, #tpu.memory_space<vmem>>, %arg15: memref<2x512x128xbf16, #tpu.memory_space<vmem>>, %arg16: memref<2x1x128xf32, #tpu.memory_space<vmem>>, %arg17: memref<1x128xf32, #tpu.memory_space<vmem>>, %arg18: memref<1x128xf32, #tpu.memory_space<vmem>>, %arg19: memref<128x128xbf16, #tpu.memory_space<vmem>>, %arg20: memref<1x128xf32, #tpu.memory_space<vmem>>, %arg21: memref<2x128xf32, #tpu.memory_space<vmem>>) attributes {dimension_semantics = [], scalar_prefetch = 0 : i64, scratch_operands = 0 : i64, tpu.core_type = #tpu.core_type<tc>} {
    %cst = arith.constant 3.200000e+01 : f32
    %0 = math.sqrt %cst : f32
    %cst_0 = arith.constant 1.000000e+00 : f32
    %1 = arith.divf %cst_0, %0 : f32
    %2 = tpu.iota {dimensions = array<i32: 0>} : vector<8x8xi32>
    %3 = tpu.iota {dimensions = array<i32: 1>} : vector<8x8xi32>
    %4 = arith.cmpi sle, %3, %2 : vector<8x8xi32>
    %c0 = arith.constant 0 : index
    %c0_1 = arith.constant 0 : index
    %5 = vector.load %arg2[%c0, %c0_1] : memref<8x1xi32, #tpu.memory_space<vmem>>, vector<8x1xi32>
    %c0_2 = arith.constant 0 : index
    %c0_3 = arith.constant 0 : index
    %6 = vector.load %arg3[%c0_2, %c0_3] : memref<1x8xi32, #tpu.memory_space<vmem>>, vector<1x8xi32>
    %7 = vector.broadcast %5 : vector<8x1xi32> to vector<8x8xi32>
    %8 = vector.broadcast %6 : vector<1x8xi32> to vector<8x8xi32>
    %9 = arith.cmpi eq, %7, %8 : vector<8x8xi32>
    %10 = arith.andi %4, %9 : vector<8x8xi1>
    %cst_4 = arith.constant 0.000000e+00 : f32
    %cst_5 = arith.constant -1.000000e+30 : f32
    %11 = vector.broadcast %cst_4 : f32 to vector<8x8xf32>
    %12 = vector.broadcast %cst_5 : f32 to vector<8x8xf32>
    %13 = arith.select %10, %11, %12 : vector<8x8xi1>, vector<8x8xf32>
    %c0_6 = arith.constant 0 : index
    %c0_7 = arith.constant 0 : index
    %14 = vector.load %arg0[%c0_6, %c0_7] : memref<8x768xbf16, #tpu.memory_space<vmem>>, vector<8x768xbf16>
    %c0_8 = arith.constant 0 : index
    %c0_9 = arith.constant 0 : index
    %15 = vector.load %arg4[%c0_8, %c0_9] : memref<768x128xbf16, #tpu.memory_space<vmem>>, vector<768x128xbf16>
    %cst_10 = arith.constant dense<0.000000e+00> : vector<8x128xf32>
    %16 = tpu.matmul %14, %15, %cst_10 {dimension_numbers = #tpu.dot_dimension_numbers<[1], [0], [0], [1], [0, 0, 1, 1], [], []>} : vector<8x768xbf16>, vector<768x128xbf16>, vector<8x128xf32> -> vector<8x128xf32>
    %c0_11 = arith.constant 0 : index
    %c0_12 = arith.constant 0 : index
    %17 = vector.load %arg1[%c0_11, %c0_12] : memref<8x128xf32, #tpu.memory_space<vmem>>, vector<8x128xf32>
    %18 = arith.addf %16, %17 : vector<8x128xf32>
    %c0_13 = arith.constant 0 : index
    %c0_14 = arith.constant 0 : index
    %c0_15 = arith.constant 0 : index
    %19 = vector.load %arg5[%c0_13, %c0_14, %c0_15] : memref<2x1x128xf32, #tpu.memory_space<vmem>>, vector<1x1x128xf32>
    %20 = vector.shape_cast %19 : vector<1x1x128xf32> to vector<1x128xf32>
    %c0_16 = arith.constant 0 : index
    %c0_17 = arith.constant 0 : index
    %c0_18 = arith.constant 0 : index
    %21 = vector.load %arg6[%c0_16, %c0_17, %c0_18] : memref<2x1x128xf32, #tpu.memory_space<vmem>>, vector<1x1x128xf32>
    %22 = vector.shape_cast %21 : vector<1x1x128xf32> to vector<1x128xf32>
    %cst_19 = arith.constant dense<0.000000e+00> : vector<8xf32>
    %23 = vector.multi_reduction <add>, %18, %cst_19 [1] : vector<8x128xf32> to vector<8xf32>
    %24 = vector.shape_cast %23 : vector<8xf32> to vector<8x1xf32>
    %cst_20 = arith.constant 1.280000e+02 : f32
    %25 = vector.broadcast %cst_20 : f32 to vector<8x1xf32>
    %26 = arith.divf %24, %25 : vector<8x1xf32>
    %27 = vector.broadcast %26 : vector<8x1xf32> to vector<8x128xf32>
    %28 = arith.subf %18, %27 : vector<8x128xf32>
    %29 = arith.mulf %28, %28 : vector<8x128xf32>
    %cst_21 = arith.constant dense<0.000000e+00> : vector<8xf32>
    %30 = vector.multi_reduction <add>, %29, %cst_21 [1] : vector<8x128xf32> to vector<8xf32>
    %31 = vector.shape_cast %30 : vector<8xf32> to vector<8x1xf32>
    %cst_22 = arith.constant 1.280000e+02 : f32
    %32 = vector.broadcast %cst_22 : f32 to vector<8x1xf32>
    %33 = arith.divf %31, %32 : vector<8x1xf32>
    %34 = vector.broadcast %26 : vector<8x1xf32> to vector<8x128xf32>
    %35 = arith.subf %18, %34 : vector<8x128xf32>
    %cst_23 = arith.constant 9.99999974E-6 : f32
    %36 = vector.broadcast %cst_23 : f32 to vector<8x1xf32>
    %37 = arith.addf %33, %36 : vector<8x1xf32>
    %38 = math.rsqrt %37 : vector<8x1xf32>
    %39 = vector.broadcast %38 : vector<8x1xf32> to vector<8x128xf32>
    %40 = arith.mulf %35, %39 : vector<8x128xf32>
    %41 = vector.broadcast %20 : vector<1x128xf32> to vector<8x128xf32>
    %42 = arith.mulf %40, %41 : vector<8x128xf32>
    %43 = vector.broadcast %22 : vector<1x128xf32> to vector<8x128xf32>
    %44 = arith.addf %42, %43 : vector<8x128xf32>
    %45 = arith.truncf %44 : vector<8x128xf32> to vector<8x128xbf16>
    %c0_24 = arith.constant 0 : index
    %c0_25 = arith.constant 0 : index
    %c0_26 = arith.constant 0 : index
    %46 = vector.load %arg7[%c0_24, %c0_25, %c0_26] : memref<2x128x384xbf16, #tpu.memory_space<vmem>>, vector<1x128x384xbf16>
    %47 = vector.shape_cast %46 : vector<1x128x384xbf16> to vector<128x384xbf16>
    %cst_27 = arith.constant dense<0.000000e+00> : vector<8x384xf32>
    %48 = tpu.matmul %45, %47, %cst_27 {dimension_numbers = #tpu.dot_dimension_numbers<[1], [0], [0], [1], [0, 0, 1, 1], [], []>} : vector<8x128xbf16>, vector<128x384xbf16>, vector<8x384xf32> -> vector<8x384xf32>
    %c0_28 = arith.constant 0 : index
    %c0_29 = arith.constant 0 : index
    %c0_30 = arith.constant 0 : index
    %49 = vector.load %arg8[%c0_28, %c0_29, %c0_30] : memref<2x1x384xf32, #tpu.memory_space<vmem>>, vector<1x1x384xf32>
    %50 = vector.shape_cast %49 : vector<1x1x384xf32> to vector<1x384xf32>
    %51 = vector.broadcast %50 : vector<1x384xf32> to vector<8x384xf32>
    %52 = arith.addf %48, %51 : vector<8x384xf32>
    %53 = arith.truncf %52 : vector<8x384xf32> to vector<8x384xbf16>
    %54 = vector.extract_strided_slice %53 {offsets = [0, 0], sizes = [8, 128], strides = [1, 1]} : vector<8x384xbf16> to vector<8x128xbf16>
    %55 = vector.extract_strided_slice %54 {offsets = [0, 0], sizes = [8, 32], strides = [1, 1]} : vector<8x128xbf16> to vector<8x32xbf16>
    %56 = vector.extract_strided_slice %54 {offsets = [0, 32], sizes = [8, 32], strides = [1, 1]} : vector<8x128xbf16> to vector<8x32xbf16>
    %57 = vector.extract_strided_slice %54 {offsets = [0, 64], sizes = [8, 32], strides = [1, 1]} : vector<8x128xbf16> to vector<8x32xbf16>
    %58 = vector.extract_strided_slice %54 {offsets = [0, 96], sizes = [8, 32], strides = [1, 1]} : vector<8x128xbf16> to vector<8x32xbf16>
    %59 = vector.shape_cast %55 : vector<8x32xbf16> to vector<1x8x32xbf16>
    %60 = vector.shape_cast %56 : vector<8x32xbf16> to vector<1x8x32xbf16>
    %61 = vector.shape_cast %57 : vector<8x32xbf16> to vector<1x8x32xbf16>
    %62 = vector.shape_cast %58 : vector<8x32xbf16> to vector<1x8x32xbf16>
    %63 = tpu.concatenate %59, %60, %61, %62 in 0 : vector<1x8x32xbf16>, vector<1x8x32xbf16>, vector<1x8x32xbf16>, vector<1x8x32xbf16> -> vector<4x8x32xbf16>
    %64 = vector.extract_strided_slice %53 {offsets = [0, 128], sizes = [8, 128], strides = [1, 1]} : vector<8x384xbf16> to vector<8x128xbf16>
    %65 = vector.extract_strided_slice %64 {offsets = [0, 0], sizes = [8, 32], strides = [1, 1]} : vector<8x128xbf16> to vector<8x32xbf16>
    %66 = vector.extract_strided_slice %64 {offsets = [0, 32], sizes = [8, 32], strides = [1, 1]} : vector<8x128xbf16> to vector<8x32xbf16>
    %67 = vector.extract_strided_slice %64 {offsets = [0, 64], sizes = [8, 32], strides = [1, 1]} : vector<8x128xbf16> to vector<8x32xbf16>
    %68 = vector.extract_strided_slice %64 {offsets = [0, 96], sizes = [8, 32], strides = [1, 1]} : vector<8x128xbf16> to vector<8x32xbf16>
    %69 = vector.shape_cast %65 : vector<8x32xbf16> to vector<1x8x32xbf16>
    %70 = vector.shape_cast %66 : vector<8x32xbf16> to vector<1x8x32xbf16>
    %71 = vector.shape_cast %67 : vector<8x32xbf16> to vector<1x8x32xbf16>
    %72 = vector.shape_cast %68 : vector<8x32xbf16> to vector<1x8x32xbf16>
    %73 = tpu.concatenate %69, %70, %71, %72 in 0 : vector<1x8x32xbf16>, vector<1x8x32xbf16>, vector<1x8x32xbf16>, vector<1x8x32xbf16> -> vector<4x8x32xbf16>
    %74 = vector.extract_strided_slice %53 {offsets = [0, 256], sizes = [8, 128], strides = [1, 1]} : vector<8x384xbf16> to vector<8x128xbf16>
    %75 = vector.extract_strided_slice %74 {offsets = [0, 0], sizes = [8, 32], strides = [1, 1]} : vector<8x128xbf16> to vector<8x32xbf16>
    %76 = vector.extract_strided_slice %74 {offsets = [0, 32], sizes = [8, 32], strides = [1, 1]} : vector<8x128xbf16> to vector<8x32xbf16>
    %77 = vector.extract_strided_slice %74 {offsets = [0, 64], sizes = [8, 32], strides = [1, 1]} : vector<8x128xbf16> to vector<8x32xbf16>
    %78 = vector.extract_strided_slice %74 {offsets = [0, 96], sizes = [8, 32], strides = [1, 1]} : vector<8x128xbf16> to vector<8x32xbf16>
    %79 = vector.shape_cast %75 : vector<8x32xbf16> to vector<1x8x32xbf16>
    %80 = vector.shape_cast %76 : vector<8x32xbf16> to vector<1x8x32xbf16>
    %81 = vector.shape_cast %77 : vector<8x32xbf16> to vector<1x8x32xbf16>
    %82 = vector.shape_cast %78 : vector<8x32xbf16> to vector<1x8x32xbf16>
    %83 = tpu.concatenate %79, %80, %81, %82 in 0 : vector<1x8x32xbf16>, vector<1x8x32xbf16>, vector<1x8x32xbf16>, vector<1x8x32xbf16> -> vector<4x8x32xbf16>
    %cst_31 = arith.constant dense<0.000000e+00> : vector<4x8x8xf32>
    %84 = tpu.matmul %63, %73, %cst_31 {dimension_numbers = #tpu.dot_dimension_numbers<[2], [2], [1], [1], [0, 0, 0, 1, 1, 1], [0], [0]>} : vector<4x8x32xbf16>, vector<4x8x32xbf16>, vector<4x8x8xf32> -> vector<4x8x8xf32>
    %85 = vector.broadcast %1 : f32 to vector<4x8x8xf32>
    %86 = arith.mulf %84, %85 : vector<4x8x8xf32>
    %87 = vector.shape_cast %13 : vector<8x8xf32> to vector<1x8x8xf32>
    %88 = vector.broadcast %87 : vector<1x8x8xf32> to vector<4x8x8xf32>
    %89 = arith.addf %86, %88 : vector<4x8x8xf32>
    %cst_32 = arith.constant dense<0xFF800000> : vector<4x8xf32>
    %90 = vector.multi_reduction <maximumf>, %89, %cst_32 [2] : vector<4x8x8xf32> to vector<4x8xf32>
    %91 = vector.shape_cast %90 : vector<4x8xf32> to vector<4x8x1xf32>
    %92 = vector.broadcast %91 : vector<4x8x1xf32> to vector<4x8x8xf32>
    %93 = arith.subf %89, %92 : vector<4x8x8xf32>
    %94 = math.exp %93 : vector<4x8x8xf32>
    %cst_33 = arith.constant dense<0.000000e+00> : vector<4x8xf32>
    %95 = vector.multi_reduction <add>, %94, %cst_33 [2] : vector<4x8x8xf32> to vector<4x8xf32>
    %96 = vector.shape_cast %95 : vector<4x8xf32> to vector<4x8x1xf32>
    %97 = tpu.reciprocal %96 {approx = true} : vector<4x8x1xf32> -> vector<4x8x1xf32>
    %98 = vector.broadcast %97 : vector<4x8x1xf32> to vector<4x8x8xf32>
    %99 = arith.mulf %94, %98 : vector<4x8x8xf32>
    %100 = arith.truncf %99 : vector<4x8x8xf32> to vector<4x8x8xbf16>
    %cst_34 = arith.constant dense<0.000000e+00> : vector<4x8x32xf32>
    %101 = tpu.matmul %100, %83, %cst_34 {dimension_numbers = #tpu.dot_dimension_numbers<[2], [1], [1], [2], [0, 0, 0, 1, 1, 2], [0], [0]>} : vector<4x8x8xbf16>, vector<4x8x32xbf16>, vector<4x8x32xf32> -> vector<4x8x32xf32>
    %102 = vector.extract_strided_slice %101 {offsets = [0, 0, 0], sizes = [1, 8, 32], strides = [1, 1, 1]} : vector<4x8x32xf32> to vector<1x8x32xf32>
    %103 = vector.shape_cast %102 : vector<1x8x32xf32> to vector<8x32xf32>
    %104 = vector.extract_strided_slice %101 {offsets = [1, 0, 0], sizes = [1, 8, 32], strides = [1, 1, 1]} : vector<4x8x32xf32> to vector<1x8x32xf32>
    %105 = vector.shape_cast %104 : vector<1x8x32xf32> to vector<8x32xf32>
    %106 = vector.extract_strided_slice %101 {offsets = [2, 0, 0], sizes = [1, 8, 32], strides = [1, 1, 1]} : vector<4x8x32xf32> to vector<1x8x32xf32>
    %107 = vector.shape_cast %106 : vector<1x8x32xf32> to vector<8x32xf32>
    %108 = vector.extract_strided_slice %101 {offsets = [3, 0, 0], sizes = [1, 8, 32], strides = [1, 1, 1]} : vector<4x8x32xf32> to vector<1x8x32xf32>
    %109 = vector.shape_cast %108 : vector<1x8x32xf32> to vector<8x32xf32>
    %110 = tpu.concatenate %103, %105, %107, %109 in 1 : vector<8x32xf32>, vector<8x32xf32>, vector<8x32xf32>, vector<8x32xf32> -> vector<8x128xf32>
    %111 = arith.truncf %110 : vector<8x128xf32> to vector<8x128xbf16>
    %c0_35 = arith.constant 0 : index
    %c0_36 = arith.constant 0 : index
    %c0_37 = arith.constant 0 : index
    %112 = vector.load %arg9[%c0_35, %c0_36, %c0_37] : memref<2x128x128xbf16, #tpu.memory_space<vmem>>, vector<1x128x128xbf16>
    %113 = vector.shape_cast %112 : vector<1x128x128xbf16> to vector<128x128xbf16>
    %cst_38 = arith.constant dense<0.000000e+00> : vector<8x128xf32>
    %114 = tpu.matmul %111, %113, %cst_38 {dimension_numbers = #tpu.dot_dimension_numbers<[1], [0], [0], [1], [0, 0, 1, 1], [], []>} : vector<8x128xbf16>, vector<128x128xbf16>, vector<8x128xf32> -> vector<8x128xf32>
    %c0_39 = arith.constant 0 : index
    %c0_40 = arith.constant 0 : index
    %c0_41 = arith.constant 0 : index
    %115 = vector.load %arg10[%c0_39, %c0_40, %c0_41] : memref<2x1x128xf32, #tpu.memory_space<vmem>>, vector<1x1x128xf32>
    %116 = vector.shape_cast %115 : vector<1x1x128xf32> to vector<1x128xf32>
    %117 = vector.broadcast %116 : vector<1x128xf32> to vector<8x128xf32>
    %118 = arith.addf %114, %117 : vector<8x128xf32>
    %119 = arith.addf %18, %118 : vector<8x128xf32>
    %c0_42 = arith.constant 0 : index
    %c0_43 = arith.constant 0 : index
    %c0_44 = arith.constant 0 : index
    %120 = vector.load %arg11[%c0_42, %c0_43, %c0_44] : memref<2x1x128xf32, #tpu.memory_space<vmem>>, vector<1x1x128xf32>
    %121 = vector.shape_cast %120 : vector<1x1x128xf32> to vector<1x128xf32>
    %c0_45 = arith.constant 0 : index
    %c0_46 = arith.constant 0 : index
    %c0_47 = arith.constant 0 : index
    %122 = vector.load %arg12[%c0_45, %c0_46, %c0_47] : memref<2x1x128xf32, #tpu.memory_space<vmem>>, vector<1x1x128xf32>
    %123 = vector.shape_cast %122 : vector<1x1x128xf32> to vector<1x128xf32>
    %cst_48 = arith.constant dense<0.000000e+00> : vector<8xf32>
    %124 = vector.multi_reduction <add>, %119, %cst_48 [1] : vector<8x128xf32> to vector<8xf32>
    %125 = vector.shape_cast %124 : vector<8xf32> to vector<8x1xf32>
    %cst_49 = arith.constant 1.280000e+02 : f32
    %126 = vector.broadcast %cst_49 : f32 to vector<8x1xf32>
    %127 = arith.divf %125, %126 : vector<8x1xf32>
    %128 = vector.broadcast %127 : vector<8x1xf32> to vector<8x128xf32>
    %129 = arith.subf %119, %128 : vector<8x128xf32>
    %130 = arith.mulf %129, %129 : vector<8x128xf32>
    %cst_50 = arith.constant dense<0.000000e+00> : vector<8xf32>
    %131 = vector.multi_reduction <add>, %130, %cst_50 [1] : vector<8x128xf32> to vector<8xf32>
    %132 = vector.shape_cast %131 : vector<8xf32> to vector<8x1xf32>
    %cst_51 = arith.constant 1.280000e+02 : f32
    %133 = vector.broadcast %cst_51 : f32 to vector<8x1xf32>
    %134 = arith.divf %132, %133 : vector<8x1xf32>
    %135 = vector.broadcast %127 : vector<8x1xf32> to vector<8x128xf32>
    %136 = arith.subf %119, %135 : vector<8x128xf32>
    %cst_52 = arith.constant 9.99999974E-6 : f32
    %137 = vector.broadcast %cst_52 : f32 to vector<8x1xf32>
    %138 = arith.addf %134, %137 : vector<8x1xf32>
    %139 = math.rsqrt %138 : vector<8x1xf32>
    %140 = vector.broadcast %139 : vector<8x1xf32> to vector<8x128xf32>
    %141 = arith.mulf %136, %140 : vector<8x128xf32>
    %142 = vector.broadcast %121 : vector<1x128xf32> to vector<8x128xf32>
    %143 = arith.mulf %141, %142 : vector<8x128xf32>
    %144 = vector.broadcast %123 : vector<1x128xf32> to vector<8x128xf32>
    %145 = arith.addf %143, %144 : vector<8x128xf32>
    %146 = arith.truncf %145 : vector<8x128xf32> to vector<8x128xbf16>
    %c0_53 = arith.constant 0 : index
    %c0_54 = arith.constant 0 : index
    %c0_55 = arith.constant 0 : index
    %147 = vector.load %arg13[%c0_53, %c0_54, %c0_55] : memref<2x128x512xbf16, #tpu.memory_space<vmem>>, vector<1x128x512xbf16>
    %148 = vector.shape_cast %147 : vector<1x128x512xbf16> to vector<128x512xbf16>
    %cst_56 = arith.constant dense<0.000000e+00> : vector<8x512xf32>
    %149 = tpu.matmul %146, %148, %cst_56 {dimension_numbers = #tpu.dot_dimension_numbers<[1], [0], [0], [1], [0, 0, 1, 1], [], []>} : vector<8x128xbf16>, vector<128x512xbf16>, vector<8x512xf32> -> vector<8x512xf32>
    %c0_57 = arith.constant 0 : index
    %c0_58 = arith.constant 0 : index
    %c0_59 = arith.constant 0 : index
    %150 = vector.load %arg14[%c0_57, %c0_58, %c0_59] : memref<2x1x512xf32, #tpu.memory_space<vmem>>, vector<1x1x512xf32>
    %151 = vector.shape_cast %150 : vector<1x1x512xf32> to vector<1x512xf32>
    %152 = vector.broadcast %151 : vector<1x512xf32> to vector<8x512xf32>
    %153 = arith.addf %149, %152 : vector<8x512xf32>
    %cst_60 = arith.constant 0.636619746 : f32
    %154 = math.sqrt %cst_60 : f32
    %cst_61 = arith.constant 5.000000e-01 : f32
    %155 = vector.broadcast %cst_61 : f32 to vector<8x512xf32>
    %156 = arith.mulf %155, %153 : vector<8x512xf32>
    %157 = arith.mulf %153, %153 : vector<8x512xf32>
    %158 = arith.mulf %153, %157 : vector<8x512xf32>
    %cst_62 = arith.constant 4.471500e-02 : f32
    %159 = vector.broadcast %cst_62 : f32 to vector<8x512xf32>
    %160 = arith.mulf %159, %158 : vector<8x512xf32>
    %161 = arith.addf %153, %160 : vector<8x512xf32>
    %162 = vector.broadcast %154 : f32 to vector<8x512xf32>
    %163 = arith.mulf %162, %161 : vector<8x512xf32>
    %164 = math.tanh %163 : vector<8x512xf32>
    %cst_63 = arith.constant 1.000000e+00 : f32
    %165 = vector.broadcast %cst_63 : f32 to vector<8x512xf32>
    %166 = arith.addf %165, %164 : vector<8x512xf32>
    %167 = arith.mulf %156, %166 : vector<8x512xf32>
    %168 = arith.truncf %167 : vector<8x512xf32> to vector<8x512xbf16>
    %c0_64 = arith.constant 0 : index
    %c0_65 = arith.constant 0 : index
    %c0_66 = arith.constant 0 : index
    %169 = vector.load %arg15[%c0_64, %c0_65, %c0_66] : memref<2x512x128xbf16, #tpu.memory_space<vmem>>, vector<1x512x128xbf16>
    %170 = vector.shape_cast %169 : vector<1x512x128xbf16> to vector<512x128xbf16>
    %cst_67 = arith.constant dense<0.000000e+00> : vector<8x128xf32>
    %171 = tpu.matmul %168, %170, %cst_67 {dimension_numbers = #tpu.dot_dimension_numbers<[1], [0], [0], [1], [0, 0, 1, 1], [], []>} : vector<8x512xbf16>, vector<512x128xbf16>, vector<8x128xf32> -> vector<8x128xf32>
    %172 = arith.addf %119, %171 : vector<8x128xf32>
    %c0_68 = arith.constant 0 : index
    %c0_69 = arith.constant 0 : index
    %c0_70 = arith.constant 0 : index
    %173 = vector.load %arg16[%c0_68, %c0_69, %c0_70] : memref<2x1x128xf32, #tpu.memory_space<vmem>>, vector<1x1x128xf32>
    %174 = vector.shape_cast %173 : vector<1x1x128xf32> to vector<1x128xf32>
    %175 = vector.broadcast %174 : vector<1x128xf32> to vector<8x128xf32>
    %176 = arith.addf %172, %175 : vector<8x128xf32>
    %c1 = arith.constant 1 : index
    %c0_71 = arith.constant 0 : index
    %c0_72 = arith.constant 0 : index
    %177 = vector.load %arg5[%c1, %c0_71, %c0_72] : memref<2x1x128xf32, #tpu.memory_space<vmem>>, vector<1x1x128xf32>
    %178 = vector.shape_cast %177 : vector<1x1x128xf32> to vector<1x128xf32>
    %c1_73 = arith.constant 1 : index
    %c0_74 = arith.constant 0 : index
    %c0_75 = arith.constant 0 : index
    %179 = vector.load %arg6[%c1_73, %c0_74, %c0_75] : memref<2x1x128xf32, #tpu.memory_space<vmem>>, vector<1x1x128xf32>
    %180 = vector.shape_cast %179 : vector<1x1x128xf32> to vector<1x128xf32>
    %cst_76 = arith.constant dense<0.000000e+00> : vector<8xf32>
    %181 = vector.multi_reduction <add>, %176, %cst_76 [1] : vector<8x128xf32> to vector<8xf32>
    %182 = vector.shape_cast %181 : vector<8xf32> to vector<8x1xf32>
    %cst_77 = arith.constant 1.280000e+02 : f32
    %183 = vector.broadcast %cst_77 : f32 to vector<8x1xf32>
    %184 = arith.divf %182, %183 : vector<8x1xf32>
    %185 = vector.broadcast %184 : vector<8x1xf32> to vector<8x128xf32>
    %186 = arith.subf %176, %185 : vector<8x128xf32>
    %187 = arith.mulf %186, %186 : vector<8x128xf32>
    %cst_78 = arith.constant dense<0.000000e+00> : vector<8xf32>
    %188 = vector.multi_reduction <add>, %187, %cst_78 [1] : vector<8x128xf32> to vector<8xf32>
    %189 = vector.shape_cast %188 : vector<8xf32> to vector<8x1xf32>
    %cst_79 = arith.constant 1.280000e+02 : f32
    %190 = vector.broadcast %cst_79 : f32 to vector<8x1xf32>
    %191 = arith.divf %189, %190 : vector<8x1xf32>
    %192 = vector.broadcast %184 : vector<8x1xf32> to vector<8x128xf32>
    %193 = arith.subf %176, %192 : vector<8x128xf32>
    %cst_80 = arith.constant 9.99999974E-6 : f32
    %194 = vector.broadcast %cst_80 : f32 to vector<8x1xf32>
    %195 = arith.addf %191, %194 : vector<8x1xf32>
    %196 = math.rsqrt %195 : vector<8x1xf32>
    %197 = vector.broadcast %196 : vector<8x1xf32> to vector<8x128xf32>
    %198 = arith.mulf %193, %197 : vector<8x128xf32>
    %199 = vector.broadcast %178 : vector<1x128xf32> to vector<8x128xf32>
    %200 = arith.mulf %198, %199 : vector<8x128xf32>
    %201 = vector.broadcast %180 : vector<1x128xf32> to vector<8x128xf32>
    %202 = arith.addf %200, %201 : vector<8x128xf32>
    %203 = arith.truncf %202 : vector<8x128xf32> to vector<8x128xbf16>
    %c1_81 = arith.constant 1 : index
    %c0_82 = arith.constant 0 : index
    %c0_83 = arith.constant 0 : index
    %204 = vector.load %arg7[%c1_81, %c0_82, %c0_83] : memref<2x128x384xbf16, #tpu.memory_space<vmem>>, vector<1x128x384xbf16>
    %205 = vector.shape_cast %204 : vector<1x128x384xbf16> to vector<128x384xbf16>
    %cst_84 = arith.constant dense<0.000000e+00> : vector<8x384xf32>
    %206 = tpu.matmul %203, %205, %cst_84 {dimension_numbers = #tpu.dot_dimension_numbers<[1], [0], [0], [1], [0, 0, 1, 1], [], []>} : vector<8x128xbf16>, vector<128x384xbf16>, vector<8x384xf32> -> vector<8x384xf32>
    %c1_85 = arith.constant 1 : index
    %c0_86 = arith.constant 0 : index
    %c0_87 = arith.constant 0 : index
    %207 = vector.load %arg8[%c1_85, %c0_86, %c0_87] : memref<2x1x384xf32, #tpu.memory_space<vmem>>, vector<1x1x384xf32>
    %208 = vector.shape_cast %207 : vector<1x1x384xf32> to vector<1x384xf32>
    %209 = vector.broadcast %208 : vector<1x384xf32> to vector<8x384xf32>
    %210 = arith.addf %206, %209 : vector<8x384xf32>
    %211 = arith.truncf %210 : vector<8x384xf32> to vector<8x384xbf16>
    %212 = vector.extract_strided_slice %211 {offsets = [0, 0], sizes = [8, 128], strides = [1, 1]} : vector<8x384xbf16> to vector<8x128xbf16>
    %213 = vector.extract_strided_slice %212 {offsets = [0, 0], sizes = [8, 32], strides = [1, 1]} : vector<8x128xbf16> to vector<8x32xbf16>
    %214 = vector.extract_strided_slice %212 {offsets = [0, 32], sizes = [8, 32], strides = [1, 1]} : vector<8x128xbf16> to vector<8x32xbf16>
    %215 = vector.extract_strided_slice %212 {offsets = [0, 64], sizes = [8, 32], strides = [1, 1]} : vector<8x128xbf16> to vector<8x32xbf16>
    %216 = vector.extract_strided_slice %212 {offsets = [0, 96], sizes = [8, 32], strides = [1, 1]} : vector<8x128xbf16> to vector<8x32xbf16>
    %217 = vector.shape_cast %213 : vector<8x32xbf16> to vector<1x8x32xbf16>
    %218 = vector.shape_cast %214 : vector<8x32xbf16> to vector<1x8x32xbf16>
    %219 = vector.shape_cast %215 : vector<8x32xbf16> to vector<1x8x32xbf16>
    %220 = vector.shape_cast %216 : vector<8x32xbf16> to vector<1x8x32xbf16>
    %221 = tpu.concatenate %217, %218, %219, %220 in 0 : vector<1x8x32xbf16>, vector<1x8x32xbf16>, vector<1x8x32xbf16>, vector<1x8x32xbf16> -> vector<4x8x32xbf16>
    %222 = vector.extract_strided_slice %211 {offsets = [0, 128], sizes = [8, 128], strides = [1, 1]} : vector<8x384xbf16> to vector<8x128xbf16>
    %223 = vector.extract_strided_slice %222 {offsets = [0, 0], sizes = [8, 32], strides = [1, 1]} : vector<8x128xbf16> to vector<8x32xbf16>
    %224 = vector.extract_strided_slice %222 {offsets = [0, 32], sizes = [8, 32], strides = [1, 1]} : vector<8x128xbf16> to vector<8x32xbf16>
    %225 = vector.extract_strided_slice %222 {offsets = [0, 64], sizes = [8, 32], strides = [1, 1]} : vector<8x128xbf16> to vector<8x32xbf16>
    %226 = vector.extract_strided_slice %222 {offsets = [0, 96], sizes = [8, 32], strides = [1, 1]} : vector<8x128xbf16> to vector<8x32xbf16>
    %227 = vector.shape_cast %223 : vector<8x32xbf16> to vector<1x8x32xbf16>
    %228 = vector.shape_cast %224 : vector<8x32xbf16> to vector<1x8x32xbf16>
    %229 = vector.shape_cast %225 : vector<8x32xbf16> to vector<1x8x32xbf16>
    %230 = vector.shape_cast %226 : vector<8x32xbf16> to vector<1x8x32xbf16>
    %231 = tpu.concatenate %227, %228, %229, %230 in 0 : vector<1x8x32xbf16>, vector<1x8x32xbf16>, vector<1x8x32xbf16>, vector<1x8x32xbf16> -> vector<4x8x32xbf16>
    %232 = vector.extract_strided_slice %211 {offsets = [0, 256], sizes = [8, 128], strides = [1, 1]} : vector<8x384xbf16> to vector<8x128xbf16>
    %233 = vector.extract_strided_slice %232 {offsets = [0, 0], sizes = [8, 32], strides = [1, 1]} : vector<8x128xbf16> to vector<8x32xbf16>
    %234 = vector.extract_strided_slice %232 {offsets = [0, 32], sizes = [8, 32], strides = [1, 1]} : vector<8x128xbf16> to vector<8x32xbf16>
    %235 = vector.extract_strided_slice %232 {offsets = [0, 64], sizes = [8, 32], strides = [1, 1]} : vector<8x128xbf16> to vector<8x32xbf16>
    %236 = vector.extract_strided_slice %232 {offsets = [0, 96], sizes = [8, 32], strides = [1, 1]} : vector<8x128xbf16> to vector<8x32xbf16>
    %237 = vector.shape_cast %233 : vector<8x32xbf16> to vector<1x8x32xbf16>
    %238 = vector.shape_cast %234 : vector<8x32xbf16> to vector<1x8x32xbf16>
    %239 = vector.shape_cast %235 : vector<8x32xbf16> to vector<1x8x32xbf16>
    %240 = vector.shape_cast %236 : vector<8x32xbf16> to vector<1x8x32xbf16>
    %241 = tpu.concatenate %237, %238, %239, %240 in 0 : vector<1x8x32xbf16>, vector<1x8x32xbf16>, vector<1x8x32xbf16>, vector<1x8x32xbf16> -> vector<4x8x32xbf16>
    %cst_88 = arith.constant dense<0.000000e+00> : vector<4x8x8xf32>
    %242 = tpu.matmul %221, %231, %cst_88 {dimension_numbers = #tpu.dot_dimension_numbers<[2], [2], [1], [1], [0, 0, 0, 1, 1, 1], [0], [0]>} : vector<4x8x32xbf16>, vector<4x8x32xbf16>, vector<4x8x8xf32> -> vector<4x8x8xf32>
    %243 = vector.broadcast %1 : f32 to vector<4x8x8xf32>
    %244 = arith.mulf %242, %243 : vector<4x8x8xf32>
    %245 = vector.shape_cast %13 : vector<8x8xf32> to vector<1x8x8xf32>
    %246 = vector.broadcast %245 : vector<1x8x8xf32> to vector<4x8x8xf32>
    %247 = arith.addf %244, %246 : vector<4x8x8xf32>
    %cst_89 = arith.constant dense<0xFF800000> : vector<4x8xf32>
    %248 = vector.multi_reduction <maximumf>, %247, %cst_89 [2] : vector<4x8x8xf32> to vector<4x8xf32>
    %249 = vector.shape_cast %248 : vector<4x8xf32> to vector<4x8x1xf32>
    %250 = vector.broadcast %249 : vector<4x8x1xf32> to vector<4x8x8xf32>
    %251 = arith.subf %247, %250 : vector<4x8x8xf32>
    %252 = math.exp %251 : vector<4x8x8xf32>
    %cst_90 = arith.constant dense<0.000000e+00> : vector<4x8xf32>
    %253 = vector.multi_reduction <add>, %252, %cst_90 [2] : vector<4x8x8xf32> to vector<4x8xf32>
    %254 = vector.shape_cast %253 : vector<4x8xf32> to vector<4x8x1xf32>
    %255 = tpu.reciprocal %254 {approx = true} : vector<4x8x1xf32> -> vector<4x8x1xf32>
    %256 = vector.broadcast %255 : vector<4x8x1xf32> to vector<4x8x8xf32>
    %257 = arith.mulf %252, %256 : vector<4x8x8xf32>
    %258 = arith.truncf %257 : vector<4x8x8xf32> to vector<4x8x8xbf16>
    %cst_91 = arith.constant dense<0.000000e+00> : vector<4x8x32xf32>
    %259 = tpu.matmul %258, %241, %cst_91 {dimension_numbers = #tpu.dot_dimension_numbers<[2], [1], [1], [2], [0, 0, 0, 1, 1, 2], [0], [0]>} : vector<4x8x8xbf16>, vector<4x8x32xbf16>, vector<4x8x32xf32> -> vector<4x8x32xf32>
    %260 = vector.extract_strided_slice %259 {offsets = [0, 0, 0], sizes = [1, 8, 32], strides = [1, 1, 1]} : vector<4x8x32xf32> to vector<1x8x32xf32>
    %261 = vector.shape_cast %260 : vector<1x8x32xf32> to vector<8x32xf32>
    %262 = vector.extract_strided_slice %259 {offsets = [1, 0, 0], sizes = [1, 8, 32], strides = [1, 1, 1]} : vector<4x8x32xf32> to vector<1x8x32xf32>
    %263 = vector.shape_cast %262 : vector<1x8x32xf32> to vector<8x32xf32>
    %264 = vector.extract_strided_slice %259 {offsets = [2, 0, 0], sizes = [1, 8, 32], strides = [1, 1, 1]} : vector<4x8x32xf32> to vector<1x8x32xf32>
    %265 = vector.shape_cast %264 : vector<1x8x32xf32> to vector<8x32xf32>
    %266 = vector.extract_strided_slice %259 {offsets = [3, 0, 0], sizes = [1, 8, 32], strides = [1, 1, 1]} : vector<4x8x32xf32> to vector<1x8x32xf32>
    %267 = vector.shape_cast %266 : vector<1x8x32xf32> to vector<8x32xf32>
    %268 = tpu.concatenate %261, %263, %265, %267 in 1 : vector<8x32xf32>, vector<8x32xf32>, vector<8x32xf32>, vector<8x32xf32> -> vector<8x128xf32>
    %269 = arith.truncf %268 : vector<8x128xf32> to vector<8x128xbf16>
    %c1_92 = arith.constant 1 : index
    %c0_93 = arith.constant 0 : index
    %c0_94 = arith.constant 0 : index
    %270 = vector.load %arg9[%c1_92, %c0_93, %c0_94] : memref<2x128x128xbf16, #tpu.memory_space<vmem>>, vector<1x128x128xbf16>
    %271 = vector.shape_cast %270 : vector<1x128x128xbf16> to vector<128x128xbf16>
    %cst_95 = arith.constant dense<0.000000e+00> : vector<8x128xf32>
    %272 = tpu.matmul %269, %271, %cst_95 {dimension_numbers = #tpu.dot_dimension_numbers<[1], [0], [0], [1], [0, 0, 1, 1], [], []>} : vector<8x128xbf16>, vector<128x128xbf16>, vector<8x128xf32> -> vector<8x128xf32>
    %c1_96 = arith.constant 1 : index
    %c0_97 = arith.constant 0 : index
    %c0_98 = arith.constant 0 : index
    %273 = vector.load %arg10[%c1_96, %c0_97, %c0_98] : memref<2x1x128xf32, #tpu.memory_space<vmem>>, vector<1x1x128xf32>
    %274 = vector.shape_cast %273 : vector<1x1x128xf32> to vector<1x128xf32>
    %275 = vector.broadcast %274 : vector<1x128xf32> to vector<8x128xf32>
    %276 = arith.addf %272, %275 : vector<8x128xf32>
    %277 = arith.addf %176, %276 : vector<8x128xf32>
    %c1_99 = arith.constant 1 : index
    %c0_100 = arith.constant 0 : index
    %c0_101 = arith.constant 0 : index
    %278 = vector.load %arg11[%c1_99, %c0_100, %c0_101] : memref<2x1x128xf32, #tpu.memory_space<vmem>>, vector<1x1x128xf32>
    %279 = vector.shape_cast %278 : vector<1x1x128xf32> to vector<1x128xf32>
    %c1_102 = arith.constant 1 : index
    %c0_103 = arith.constant 0 : index
    %c0_104 = arith.constant 0 : index
    %280 = vector.load %arg12[%c1_102, %c0_103, %c0_104] : memref<2x1x128xf32, #tpu.memory_space<vmem>>, vector<1x1x128xf32>
    %281 = vector.shape_cast %280 : vector<1x1x128xf32> to vector<1x128xf32>
    %cst_105 = arith.constant dense<0.000000e+00> : vector<8xf32>
    %282 = vector.multi_reduction <add>, %277, %cst_105 [1] : vector<8x128xf32> to vector<8xf32>
    %283 = vector.shape_cast %282 : vector<8xf32> to vector<8x1xf32>
    %cst_106 = arith.constant 1.280000e+02 : f32
    %284 = vector.broadcast %cst_106 : f32 to vector<8x1xf32>
    %285 = arith.divf %283, %284 : vector<8x1xf32>
    %286 = vector.broadcast %285 : vector<8x1xf32> to vector<8x128xf32>
    %287 = arith.subf %277, %286 : vector<8x128xf32>
    %288 = arith.mulf %287, %287 : vector<8x128xf32>
    %cst_107 = arith.constant dense<0.000000e+00> : vector<8xf32>
    %289 = vector.multi_reduction <add>, %288, %cst_107 [1] : vector<8x128xf32> to vector<8xf32>
    %290 = vector.shape_cast %289 : vector<8xf32> to vector<8x1xf32>
    %cst_108 = arith.constant 1.280000e+02 : f32
    %291 = vector.broadcast %cst_108 : f32 to vector<8x1xf32>
    %292 = arith.divf %290, %291 : vector<8x1xf32>
    %293 = vector.broadcast %285 : vector<8x1xf32> to vector<8x128xf32>
    %294 = arith.subf %277, %293 : vector<8x128xf32>
    %cst_109 = arith.constant 9.99999974E-6 : f32
    %295 = vector.broadcast %cst_109 : f32 to vector<8x1xf32>
    %296 = arith.addf %292, %295 : vector<8x1xf32>
    %297 = math.rsqrt %296 : vector<8x1xf32>
    %298 = vector.broadcast %297 : vector<8x1xf32> to vector<8x128xf32>
    %299 = arith.mulf %294, %298 : vector<8x128xf32>
    %300 = vector.broadcast %279 : vector<1x128xf32> to vector<8x128xf32>
    %301 = arith.mulf %299, %300 : vector<8x128xf32>
    %302 = vector.broadcast %281 : vector<1x128xf32> to vector<8x128xf32>
    %303 = arith.addf %301, %302 : vector<8x128xf32>
    %304 = arith.truncf %303 : vector<8x128xf32> to vector<8x128xbf16>
    %c1_110 = arith.constant 1 : index
    %c0_111 = arith.constant 0 : index
    %c0_112 = arith.constant 0 : index
    %305 = vector.load %arg13[%c1_110, %c0_111, %c0_112] : memref<2x128x512xbf16, #tpu.memory_space<vmem>>, vector<1x128x512xbf16>
    %306 = vector.shape_cast %305 : vector<1x128x512xbf16> to vector<128x512xbf16>
    %cst_113 = arith.constant dense<0.000000e+00> : vector<8x512xf32>
    %307 = tpu.matmul %304, %306, %cst_113 {dimension_numbers = #tpu.dot_dimension_numbers<[1], [0], [0], [1], [0, 0, 1, 1], [], []>} : vector<8x128xbf16>, vector<128x512xbf16>, vector<8x512xf32> -> vector<8x512xf32>
    %c1_114 = arith.constant 1 : index
    %c0_115 = arith.constant 0 : index
    %c0_116 = arith.constant 0 : index
    %308 = vector.load %arg14[%c1_114, %c0_115, %c0_116] : memref<2x1x512xf32, #tpu.memory_space<vmem>>, vector<1x1x512xf32>
    %309 = vector.shape_cast %308 : vector<1x1x512xf32> to vector<1x512xf32>
    %310 = vector.broadcast %309 : vector<1x512xf32> to vector<8x512xf32>
    %311 = arith.addf %307, %310 : vector<8x512xf32>
    %cst_117 = arith.constant 0.636619746 : f32
    %312 = math.sqrt %cst_117 : f32
    %cst_118 = arith.constant 5.000000e-01 : f32
    %313 = vector.broadcast %cst_118 : f32 to vector<8x512xf32>
    %314 = arith.mulf %313, %311 : vector<8x512xf32>
    %315 = arith.mulf %311, %311 : vector<8x512xf32>
    %316 = arith.mulf %311, %315 : vector<8x512xf32>
    %cst_119 = arith.constant 4.471500e-02 : f32
    %317 = vector.broadcast %cst_119 : f32 to vector<8x512xf32>
    %318 = arith.mulf %317, %316 : vector<8x512xf32>
    %319 = arith.addf %311, %318 : vector<8x512xf32>
    %320 = vector.broadcast %312 : f32 to vector<8x512xf32>
    %321 = arith.mulf %320, %319 : vector<8x512xf32>
    %322 = math.tanh %321 : vector<8x512xf32>
    %cst_120 = arith.constant 1.000000e+00 : f32
    %323 = vector.broadcast %cst_120 : f32 to vector<8x512xf32>
    %324 = arith.addf %323, %322 : vector<8x512xf32>
    %325 = arith.mulf %314, %324 : vector<8x512xf32>
    %326 = arith.truncf %325 : vector<8x512xf32> to vector<8x512xbf16>
    %c1_121 = arith.constant 1 : index
    %c0_122 = arith.constant 0 : index
    %c0_123 = arith.constant 0 : index
    %327 = vector.load %arg15[%c1_121, %c0_122, %c0_123] : memref<2x512x128xbf16, #tpu.memory_space<vmem>>, vector<1x512x128xbf16>
    %328 = vector.shape_cast %327 : vector<1x512x128xbf16> to vector<512x128xbf16>
    %cst_124 = arith.constant dense<0.000000e+00> : vector<8x128xf32>
    %329 = tpu.matmul %326, %328, %cst_124 {dimension_numbers = #tpu.dot_dimension_numbers<[1], [0], [0], [1], [0, 0, 1, 1], [], []>} : vector<8x512xbf16>, vector<512x128xbf16>, vector<8x128xf32> -> vector<8x128xf32>
    %330 = arith.addf %277, %329 : vector<8x128xf32>
    %c1_125 = arith.constant 1 : index
    %c0_126 = arith.constant 0 : index
    %c0_127 = arith.constant 0 : index
    %331 = vector.load %arg16[%c1_125, %c0_126, %c0_127] : memref<2x1x128xf32, #tpu.memory_space<vmem>>, vector<1x1x128xf32>
    %332 = vector.shape_cast %331 : vector<1x1x128xf32> to vector<1x128xf32>
    %333 = vector.broadcast %332 : vector<1x128xf32> to vector<8x128xf32>
    %334 = arith.addf %330, %333 : vector<8x128xf32>
    %335 = vector.extract_strided_slice %334 {offsets = [3, 0], sizes = [1, 128], strides = [1, 1]} : vector<8x128xf32> to vector<1x128xf32>
    %336 = vector.extract_strided_slice %334 {offsets = [7, 0], sizes = [1, 128], strides = [1, 1]} : vector<8x128xf32> to vector<1x128xf32>
    %337 = tpu.concatenate %335, %336 in 0 : vector<1x128xf32>, vector<1x128xf32> -> vector<2x128xf32>
    %c0_128 = arith.constant 0 : index
    %c0_129 = arith.constant 0 : index
    %338 = vector.load %arg17[%c0_128, %c0_129] : memref<1x128xf32, #tpu.memory_space<vmem>>, vector<1x128xf32>
    %c0_130 = arith.constant 0 : index
    %c0_131 = arith.constant 0 : index
    %339 = vector.load %arg18[%c0_130, %c0_131] : memref<1x128xf32, #tpu.memory_space<vmem>>, vector<1x128xf32>
    %cst_132 = arith.constant dense<0.000000e+00> : vector<2xf32>
    %340 = vector.multi_reduction <add>, %337, %cst_132 [1] : vector<2x128xf32> to vector<2xf32>
    %341 = vector.shape_cast %340 : vector<2xf32> to vector<2x1xf32>
    %cst_133 = arith.constant 1.280000e+02 : f32
    %342 = vector.broadcast %cst_133 : f32 to vector<2x1xf32>
    %343 = arith.divf %341, %342 : vector<2x1xf32>
    %344 = vector.broadcast %343 : vector<2x1xf32> to vector<2x128xf32>
    %345 = arith.subf %337, %344 : vector<2x128xf32>
    %346 = arith.mulf %345, %345 : vector<2x128xf32>
    %cst_134 = arith.constant dense<0.000000e+00> : vector<2xf32>
    %347 = vector.multi_reduction <add>, %346, %cst_134 [1] : vector<2x128xf32> to vector<2xf32>
    %348 = vector.shape_cast %347 : vector<2xf32> to vector<2x1xf32>
    %cst_135 = arith.constant 1.280000e+02 : f32
    %349 = vector.broadcast %cst_135 : f32 to vector<2x1xf32>
    %350 = arith.divf %348, %349 : vector<2x1xf32>
    %351 = vector.broadcast %343 : vector<2x1xf32> to vector<2x128xf32>
    %352 = arith.subf %337, %351 : vector<2x128xf32>
    %cst_136 = arith.constant 9.99999974E-6 : f32
    %353 = vector.broadcast %cst_136 : f32 to vector<2x1xf32>
    %354 = arith.addf %350, %353 : vector<2x1xf32>
    %355 = math.rsqrt %354 : vector<2x1xf32>
    %356 = vector.broadcast %355 : vector<2x1xf32> to vector<2x128xf32>
    %357 = arith.mulf %352, %356 : vector<2x128xf32>
    %358 = vector.broadcast %338 : vector<1x128xf32> to vector<2x128xf32>
    %359 = arith.mulf %357, %358 : vector<2x128xf32>
    %360 = vector.broadcast %339 : vector<1x128xf32> to vector<2x128xf32>
    %361 = arith.addf %359, %360 : vector<2x128xf32>
    %362 = arith.truncf %361 : vector<2x128xf32> to vector<2x128xbf16>
    %c0_137 = arith.constant 0 : index
    %c0_138 = arith.constant 0 : index
    %363 = vector.load %arg19[%c0_137, %c0_138] : memref<128x128xbf16, #tpu.memory_space<vmem>>, vector<128x128xbf16>
    %cst_139 = arith.constant dense<0.000000e+00> : vector<2x128xf32>
    %364 = tpu.matmul %362, %363, %cst_139 {dimension_numbers = #tpu.dot_dimension_numbers<[1], [0], [0], [1], [0, 0, 1, 1], [], []>} : vector<2x128xbf16>, vector<128x128xbf16>, vector<2x128xf32> -> vector<2x128xf32>
    %c0_140 = arith.constant 0 : index
    %c0_141 = arith.constant 0 : index
    %365 = vector.load %arg20[%c0_140, %c0_141] : memref<1x128xf32, #tpu.memory_space<vmem>>, vector<1x128xf32>
    %366 = vector.broadcast %365 : vector<1x128xf32> to vector<2x128xf32>
    %367 = arith.addf %364, %366 : vector<2x128xf32>
    %c0_142 = arith.constant 0 : index
    %c0_143 = arith.constant 0 : index
    %368 = vector.load %arg21[%c0_142, %c0_143] : memref<2x128xf32, #tpu.memory_space<vmem>>, vector<2x128xf32>
    tpu.vector_store %arg21[%c0_142, %c0_143], %367 {strides = array<i32>} : memref<2x128xf32, #tpu.memory_space<vmem>>, vector<2x128xf32>,
    return
  }
}

</mosaic_0001>

<llo_original>
// kernel: model_forward.1
$region0: #{model_forward.1}
  #allocation0 [shape = 'u32[]', space=smem, size = 0x4, offset = 0x4, fixed_abs, tag = 'smem constant byte address 0x4 - core index']
  #allocation1 [shape = 'u32[144,128]{1,0:T(1,128)}', space=vmem, size = 0x12000, scoped, tag = 'internal scratch']
  %s0 = inlined_call_operand.vmem [shape: bf16[8,768], index: 0, kind: input, shape index: {}]
  %s1 = inlined_call_operand.vmem [shape: f32[8,128], index: 1, kind: input, shape index: {}]
  %s2 = inlined_call_operand.vmem [shape: s32[8,1], index: 2, kind: input, shape index: {}]
  %s3 = inlined_call_operand.vmem [shape: s32[1,8], index: 3, kind: input, shape index: {}]
  %s4 = inlined_call_operand.hbm [shape: bf16[768,128], index: 4, kind: input, shape index: {}]
  %s5 = inlined_call_operand.vmem [shape: f32[2,1,128], index: 5, kind: input, shape index: {}]
  %s6 = inlined_call_operand.vmem [shape: f32[2,1,128], index: 6, kind: input, shape index: {}]
  %s7 = inlined_call_operand.hbm [shape: bf16[2,128,384], index: 7, kind: input, shape index: {}]
  %s8 = inlined_call_operand.vmem [shape: f32[2,1,384], index: 8, kind: input, shape index: {}]
  %s9 = inlined_call_operand.vmem [shape: bf16[2,128,128], index: 9, kind: input, shape index: {}]
  %s10 = inlined_call_operand.vmem [shape: f32[2,1,128], index: 10, kind: input, shape index: {}]
  %s11 = inlined_call_operand.vmem [shape: f32[2,1,128], index: 11, kind: input, shape index: {}]
  %s12 = inlined_call_operand.vmem [shape: f32[2,1,128], index: 12, kind: input, shape index: {}]
  %s13 = inlined_call_operand.vmem [shape: bf16[2,128,512], index: 13, kind: input, shape index: {}]
  %s14 = inlined_call_operand.vmem [shape: f32[2,1,512], index: 14, kind: input, shape index: {}]
  %s15 = inlined_call_operand.vmem [shape: bf16[2,512,128], index: 15, kind: input, shape index: {}]
  %s16 = inlined_call_operand.vmem [shape: f32[2,1,128], index: 16, kind: input, shape index: {}]
  %s17 = inlined_call_operand.vmem [shape: f32[1,128], index: 17, kind: input, shape index: {}]
  %s18 = inlined_call_operand.vmem [shape: f32[1,128], index: 18, kind: input, shape index: {}]
  %s19 = inlined_call_operand.hbm [shape: bf16[128,128], index: 19, kind: input, shape index: {}]
  %s20 = inlined_call_operand.vmem [shape: f32[1,128], index: 20, kind: input, shape index: {}]
  %s21 = inlined_call_operand.hbm [shape: f32[2,128], index: 21, kind: output, shape index: {}]
  %s22 = sld [smem:[#allocation0]]
  $region106: #{model_forward.1} parent=0
    _
  %s24 = ssub.s32 1, %s22
  %s25 = scalar_select 0, %s24, %s22
  $region1: #{model_forward.1} parent=0
    #allocation2 [shape = 'u8[196608]{0}', space=vmem, size = 0x30000, scoped, tag = 'input window, operand 4, single buffered']
    #allocation3 [shape = 's32[1]{0}', space=sflag, size = 0x4, scoped, tag = 'scoped memory for model_forward.1']
    #allocation4 [shape = 's32[1]{0}', space=sflag, size = 0x4, scoped, tag = 'scoped memory for model_forward.1']
    #allocation5 [shape = 'u8[196608]{0}', space=vmem, size = 0x30000, scoped, tag = 'input window, operand 7, single buffered']
    #allocation6 [shape = 's32[1]{0}', space=sflag, size = 0x4, scoped, tag = 'scoped memory for model_forward.1']
    #allocation7 [shape = 'u8[32768]{0}', space=vmem, size = 0x8000, scoped, tag = 'input window, operand 19, single buffered']
    #allocation8 [shape = 'u8[1024]{0}', space=vmem, size = 0x400, scoped, tag = 'output window, operand 0, single buffered']
    %26 = vsyncpa [#allocation3], 0
    %27 = vsyncpa [#allocation6], 0
    %28 = vsyncpa [#allocation4], 0
    // Predicated region
    $region2: #{model_forward.1} parent=1 // pred_check
      _
    $region3: #{model_forward.1} parent=1 // pred_check_branch
      %30 = sbr.rel (0) target = $region5
    $region4: #{model_forward.1} parent=1 // pred_region
      _
    $region5: #{model_forward.1} parent=1 // pred_fallthru
      _
    // Predicated region
    $region6: #{model_forward.1} parent=1 // pred_check
      _
    $region7: #{model_forward.1} parent=1 // pred_check_branch
      %32 = sbr.rel (0) target = $region9
    $region8: #{model_forward.1} parent=1 // pred_region
      _
    $region9: #{model_forward.1} parent=1 // pred_fallthru
      _
    // Predicated region
    $region10: #{model_forward.1} parent=1 // pred_check
      _
    $region11: #{model_forward.1} parent=1 // pred_check_branch
      %34 = sbr.rel (0) target = $region13
    $region12: #{model_forward.1} parent=1 // pred_region
      _
    $region13: #{model_forward.1} parent=1 // pred_fallthru
      _
    // Predicated region
    $region14: #{model_forward.1} parent=1 // pred_check
      _
    $region15: #{model_forward.1} parent=1 // pred_check_branch
      %36 = sbr.rel (0) target = $region17
    $region16: #{model_forward.1} parent=1 // pred_region
      _
    $region17: #{model_forward.1} parent=1 // pred_fallthru
      _
    // Predicated region
    $region18: #{model_forward.1} parent=1 // pred_check
      _
    $region19: #{model_forward.1} parent=1 // pred_check_branch
      %38 = sbr.rel (0) target = $region21
    $region20: #{model_forward.1} parent=1 // pred_region
      %s40 = ssub.s32 6144, 6144
      %41 = vsyncadd [#allocation3], %s40
      %s42 = sshll.u32 [#allocation2], 4
      %s43 = int_to_ptr.vmem [resolvable:$true] %s42
      %48 = dma.hbm_to_vmem [thread:$0]  %s4, 6144, %s43, [#allocation3], 64, 64, 4
    $region21: #{model_forward.1} parent=1 // pred_fallthru
      _
    // Predicated region
    $region22: #{model_forward.1} parent=1 // pred_check
      _
    $region23: #{model_forward.1} parent=1 // pred_check_branch
      %50 = sbr.rel (0) target = $region25
    $region24: #{model_forward.1} parent=1 // pred_region
      _
    $region25: #{model_forward.1} parent=1 // pred_fallthru
      _
    // Predicated region
    $region26: #{model_forward.1} parent=1 // pred_check
      _
    $region27: #{model_forward.1} parent=1 // pred_check_branch
      %52 = sbr.rel (0) target = $region29
    $region28: #{model_forward.1} parent=1 // pred_region
      _
    $region29: #{model_forward.1} parent=1 // pred_fallthru
      _
    // Predicated region
    $region30: #{model_forward.1} parent=1 // pred_check
      _
    $region31: #{model_forward.1} parent=1 // pred_check_branch
      %54 = sbr.rel (0) target = $region33
    $region32: #{model_forward.1} parent=1 // pred_region
      %s56 = ssub.s32 6144, 6144
      %57 = vsyncadd [#allocation6], %s56
      %s58 = sshll.u32 [#allocation5], 4
      %s59 = int_to_ptr.vmem [resolvable:$true] %s58
      %64 = dma.hbm_to_vmem [thread:$0]  %s7, 6144, %s59, [#allocation6], 192, 192, 12
    $region33: #{model_forward.1} parent=1 // pred_fallthru
      _
    // Predicated region
    $region34: #{model_forward.1} parent=1 // pred_check
      _
    $region35: #{model_forward.1} parent=1 // pred_check_branch
      %66 = sbr.rel (0) target = $region37
    $region36: #{model_forward.1} parent=1 // pred_region
      _
    $region37: #{model_forward.1} parent=1 // pred_fallthru
      _
    // Predicated region
    $region38: #{model_forward.1} parent=1 // pred_check
      _
    $region39: #{model_forward.1} parent=1 // pred_check_branch
      %68 = sbr.rel (0) target = $region41
    $region40: #{model_forward.1} parent=1 // pred_region
      _
    $region41: #{model_forward.1} parent=1 // pred_fallthru
      _
    // Predicated region
    $region42: #{model_forward.1} parent=1 // pred_check
      _
    $region43: #{model_forward.1} parent=1 // pred_check_branch
      %70 = sbr.rel (0) target = $region45
    $region44: #{model_forward.1} parent=1 // pred_region
      _
    $region45: #{model_forward.1} parent=1 // pred_fallthru
      _
    // Predicated region
    $region46: #{model_forward.1} parent=1 // pred_check
      _
    $region47: #{model_forward.1} parent=1 // pred_check_branch
      %72 = sbr.rel (0) target = $region49
    $region48: #{model_forward.1} parent=1 // pred_region
      _
    $region49: #{model_forward.1} parent=1 // pred_fallthru
      _
    // Predicated region
    $region50: #{model_forward.1} parent=1 // pred_check
      _
    $region51: #{model_forward.1} parent=1 // pred_check_branch
      %74 = sbr.rel (0) target = $region53
    $region52: #{model_forward.1} parent=1 // pred_region
      _
    $region53: #{model_forward.1} parent=1 // pred_fallthru
      _
    // Predicated region
    $region54: #{model_forward.1} parent=1 // pred_check
      _
    $region55: #{model_forward.1} parent=1 // pred_check_branch
      %76 = sbr.rel (0) target = $region57
    $region56: #{model_forward.1} parent=1 // pred_region
      _
    $region57: #{model_forward.1} parent=1 // pred_fallthru
      _
    // Predicated region
    $region58: #{model_forward.1} parent=1 // pred_check
      _
    $region59: #{model_forward.1} parent=1 // pred_check_branch
      %78 = sbr.rel (0) target = $region61
    $region60: #{model_forward.1} parent=1 // pred_region
      _
    $region61: #{model_forward.1} parent=1 // pred_fallthru
      _
    // Predicated region
    $region62: #{model_forward.1} parent=1 // pred_check
      _
    $region63: #{model_forward.1} parent=1 // pred_check_branch
      %80 = sbr.rel (0) target = $region65
    $region64: #{model_forward.1} parent=1 // pred_region
      _
    $region65: #{model_forward.1} parent=1 // pred_fallthru
      _
    // Predicated region
    $region66: #{model_forward.1} parent=1 // pred_check
      _
    $region67: #{model_forward.1} parent=1 // pred_check_branch
      %82 = sbr.rel (0) target = $region69
    $region68: #{model_forward.1} parent=1 // pred_region
      _
    $region69: #{model_forward.1} parent=1 // pred_fallthru
      _
    // Predicated region
    $region70: #{model_forward.1} parent=1 // pred_check
      _
    $region71: #{model_forward.1} parent=1 // pred_check_branch
      %84 = sbr.rel (0) target = $region73
    $region72: #{model_forward.1} parent=1 // pred_region
      _
    $region73: #{model_forward.1} parent=1 // pred_fallthru
      _
    // Predicated region
    $region74: #{model_forward.1} parent=1 // pred_check
      _
    $region75: #{model_forward.1} parent=1 // pred_check_branch
      %86 = sbr.rel (0) target = $region77
    $region76: #{model_forward.1} parent=1 // pred_region
      _
    $region77: #{model_forward.1} parent=1 // pred_fallthru
      _
    // Predicated region
    $region78: #{model_forward.1} parent=1 // pred_check
      _
    $region79: #{model_forward.1} parent=1 // pred_check_branch
      %88 = sbr.rel (0) target = $region81
    $region80: #{model_forward.1} parent=1 // pred_region
      %s90 = ssub.s32 1024, 1024
      %91 = vsyncadd [#allocation6], %s90
      %s92 = sshll.u32 [#allocation7], 4
      %s93 = int_to_ptr.vmem [resolvable:$true] %s92
      %98 = dma.hbm_to_vmem [thread:$0]  %s19, 1024, %s93, [#allocation6], 64, 64, 4
    $region81: #{model_forward.1} parent=1 // pred_fallthru
      _
    // Predicated region
    $region82: #{model_forward.1} parent=1 // pred_check
      _
    $region83: #{model_forward.1} parent=1 // pred_check_branch
      %100 = sbr.rel (0) target = $region85
    $region84: #{model_forward.1} parent=1 // pred_region
      _
    $region85: #{model_forward.1} parent=1 // pred_fallthru
      _
    // Predicated region
    $region86: #{model_forward.1} parent=1 // pred_check
      _
    $region87: #{model_forward.1} parent=1 // pred_check_branch
      %102 = sbr.rel (0) target = $region89
    $region88: #{model_forward.1} parent=1 // pred_region
      %103 = dma.done [#allocation3], 6144
    $region89: #{model_forward.1} parent=1 // pred_fallthru
      _
    // Predicated region
    $region90: #{model_forward.1} parent=1 // pred_check
      _
    $region91: #{model_forward.1} parent=1 // pred_check_branch
      %105 = sbr.rel (0) target = $region93
    $region92: #{model_forward.1} parent=1 // pred_region
      %106 = dma.done [#allocation6], 6144
    $region93: #{model_forward.1} parent=1 // pred_fallthru
      _
    // Predicated region
    $region94: #{model_forward.1} parent=1 // pred_check
      _
    $region95: #{model_forward.1} parent=1 // pred_check_branch
      %108 = sbr.rel (0) target = $region97
    $region96: #{model_forward.1} parent=1 // pred_region
      %109 = dma.done [#allocation6], 1024
    $region97: #{model_forward.1} parent=1 // pred_fallthru
      _
    %v111 = vlaneseq
    %v112 = vshrl.u32 %v111, 7
    %v113 = vlaneseq
    %v114 = vand.u32 %v113, 127
    %vm115 = vcmp.le.s32.totalorder %v114, %v112
    %v116 = vld [vmem:[%s2] sm:$0xff]
    %v117 = vld [vmem:[%s3] sm:$0x1]
    %118 = vset.pattern.permute.xlu0 0
    %119 = vperm.xlu0 %118, %v116
    %v120 = vpop.permute.xlu0 %119
    %v121 = vlaneseq
    %v122 = vshrl.u32 %v121, 7
    %v123 = vsub.s32 0, %v122
    %v124 = vrot.slane %v117, %v123
    %vm125 = vcmp.eq.s32.totalorder %v120, %v124
    %vm126 = vmand %vm115, %vm125
    %v127 = vsel %vm126, 0.0, -1e+30
    %v128 = vld [vmem:[%s0] sm:$0xff]
    %v129 = vld [vmem:[%s0 + $0x8] sm:$0xff]
    %v130 = vld [vmem:[%s0 + $0x10] sm:$0xff]
    %v131 = vld [vmem:[#allocation2] sm:$0xf]
    %v132 = vld [vmem:[#allocation2 + $0x4] sm:$0xf]
    %v133 = vld [vmem:[#allocation2 + $0x8] sm:$0xf]
    %v134 = vld [vmem:[#allocation2 + $0xc] sm:$0xf]
    %v135 = vld [vmem:[#allocation2 + $0x10] sm:$0xf]
    %v136 = vld [vmem:[#allocation2 + $0x14] sm:$0xf]
    %v137 = vld [vmem:[#allocation2 + $0x18] sm:$0xf]
    %v138 = vld [vmem:[#allocation2 + $0x1c] sm:$0xf]
    %v139 = vld [vmem:[#allocation2 + $0x20] sm:$0xf]
    %v140 = vld [vmem:[#allocation2 + $0x24] sm:$0xf]
    %v141 = vld [vmem:[#allocation2 + $0x28] sm:$0xf]
    %v142 = vld [vmem:[#allocation2 + $0x2c] sm:$0xf]
    %v143 = vld [vmem:[#allocation2 + $0x30] sm:$0xf]
    %v144 = vld [vmem:[#allocation2 + $0x34] sm:$0xf]
    %v145 = vld [vmem:[#allocation2 + $0x38] sm:$0xf]
    %v146 = vld [vmem:[#allocation2 + $0x3c] sm:$0xf]
    %v147 = vld [vmem:[#allocation2 + $0x40] sm:$0xf]
    %v148 = vld [vmem:[#allocation2 + $0x44] sm:$0xf]
    %v149 = vld [vmem:[#allocation2 + $0x48] sm:$0xf]
    %v150 = vld [vmem:[#allocation2 + $0x4c] sm:$0xf]
    %v151 = vld [vmem:[#allocation2 + $0x50] sm:$0xf]
    %v152 = vld [vmem:[#allocation2 + $0x54] sm:$0xf]
    %v153 = vld [vmem:[#allocation2 + $0x58] sm:$0xf]
    %v154 = vld [vmem:[#allocation2 + $0x5c] sm:$0xf]
    %v155 = vld [vmem:[#allocation2 + $0x60] sm:$0xf]
    %v156 = vld [vmem:[#allocation2 + $0x64] sm:$0xf]
    %v157 = vld [vmem:[#allocation2 + $0x68] sm:$0xf]
    %v158 = vld [vmem:[#allocation2 + $0x6c] sm:$0xf]
    %v159 = vld [vmem:[#allocation2 + $0x70] sm:$0xf]
    %v160 = vld [vmem:[#allocation2 + $0x74] sm:$0xf]
    %v161 = vld [vmem:[#allocation2 + $0x78] sm:$0xf]
    %v162 = vld [vmem:[#allocation2 + $0x7c] sm:$0xf]
    %v163 = vld [vmem:[#allocation2 + $0x80] sm:$0xf]
    %v164 = vld [vmem:[#allocation2 + $0x84] sm:$0xf]
    %v165 = vld [vmem:[#allocation2 + $0x88] sm:$0xf]
    %v166 = vld [vmem:[#allocation2 + $0x8c] sm:$0xf]
    %v167 = vld [vmem:[#allocation2 + $0x90] sm:$0xf]
    %v168 = vld [vmem:[#allocation2 + $0x94] sm:$0xf]
    %v169 = vld [vmem:[#allocation2 + $0x98] sm:$0xf]
    %v170 = vld [vmem:[#allocation2 + $0x9c] sm:$0xf]
    %v171 = vld [vmem:[#allocation2 + $0xa0] sm:$0xf]
    %v172 = vld [vmem:[#allocation2 + $0xa4] sm:$0xf]
    %v173 = vld [vmem:[#allocation2 + $0xa8] sm:$0xf]
    %v174 = vld [vmem:[#allocation2 + $0xac] sm:$0xf]
    %v175 = vld [vmem:[#allocation2 + $0xb0] sm:$0xf]
    %v176 = vld [vmem:[#allocation2 + $0xb4] sm:$0xf]
    %v177 = vld [vmem:[#allocation2 + $0xb8] sm:$0xf]
    %v178 = vld [vmem:[#allocation2 + $0xbc] sm:$0xf]
    %v179 = vld [vmem:[#allocation2 + $0xc0] sm:$0xf]
    %v180 = vld [vmem:[#allocation2 + $0xc4] sm:$0xf]
    %v181 = vld [vmem:[#allocation2 + $0xc8] sm:$0xf]
    %v182 = vld [vmem:[#allocation2 + $0xcc] sm:$0xf]
    %v183 = vld [vmem:[#allocation2 + $0xd0] sm:$0xf]
    %v184 = vld [vmem:[#allocation2 + $0xd4] sm:$0xf]
    %v185 = vld [vmem:[#allocation2 + $0xd8] sm:$0xf]
    %v186 = vld [vmem:[#allocation2 + $0xdc] sm:$0xf]
    %v187 = vld [vmem:[#allocation2 + $0xe0] sm:$0xf]
    %v188 = vld [vmem:[#allocation2 + $0xe4] sm:$0xf]
    %v189 = vld [vmem:[#allocation2 + $0xe8] sm:$0xf]
    %v190 = vld [vmem:[#allocation2 + $0xec] sm:$0xf]
    %v191 = vld [vmem:[#allocation2 + $0xf0] sm:$0xf]
    %v192 = vld [vmem:[#allocation2 + $0xf4] sm:$0xf]
    %v193 = vld [vmem:[#allocation2 + $0xf8] sm:$0xf]
    %v194 = vld [vmem:[#allocation2 + $0xfc] sm:$0xf]
    %v195 = vld [vmem:[#allocation2 + $0x100] sm:$0xf]
    %v196 = vld [vmem:[#allocation2 + $0x104] sm:$0xf]
    %v197 = vld [vmem:[#allocation2 + $0x108] sm:$0xf]
    %v198 = vld [vmem:[#allocation2 + $0x10c] sm:$0xf]
    %v199 = vld [vmem:[#allocation2 + $0x110] sm:$0xf]
    %v200 = vld [vmem:[#allocation2 + $0x114] sm:$0xf]
    %v201 = vld [vmem:[#allocation2 + $0x118] sm:$0xf]
    %v202 = vld [vmem:[#allocation2 + $0x11c] sm:$0xf]
    %v203 = vld [vmem:[#allocation2 + $0x120] sm:$0xf]
    %v204 = vld [vmem:[#allocation2 + $0x124] sm:$0xf]
    %v205 = vld [vmem:[#allocation2 + $0x128] sm:$0xf]
    %v206 = vld [vmem:[#allocation2 + $0x12c] sm:$0xf]
    %v207 = vld [vmem:[#allocation2 + $0x130] sm:$0xf]
    %v208 = vld [vmem:[#allocation2 + $0x134] sm:$0xf]
    %v209 = vld [vmem:[#allocation2 + $0x138] sm:$0xf]
    %v210 = vld [vmem:[#allocation2 + $0x13c] sm:$0xf]
    %v211 = vld [vmem:[#allocation2 + $0x140] sm:$0xf]
    %v212 = vld [vmem:[#allocation2 + $0x144] sm:$0xf]
    %v213 = vld [vmem:[#allocation2 + $0x148] sm:$0xf]
    %v214 = vld [vmem:[#allocation2 + $0x14c] sm:$0xf]
    %v215 = vld [vmem:[#allocation2 + $0x150] sm:$0xf]
    %v216 = vld [vmem:[#allocation2 + $0x154] sm:$0xf]
    %v217 = vld [vmem:[#allocation2 + $0x158] sm:$0xf]
    %v218 = vld [vmem:[#allocation2 + $0x15c] sm:$0xf]
    %v219 = vld [vmem:[#allocation2 + $0x160] sm:$0xf]
    %v220 = vld [vmem:[#allocation2 + $0x164] sm:$0xf]
    %v221 = vld [vmem:[#allocation2 + $0x168] sm:$0xf]
    %v222 = vld [vmem:[#allocation2 + $0x16c] sm:$0xf]
    %v223 = vld [vmem:[#allocation2 + $0x170] sm:$0xf]
    %v224 = vld [vmem:[#allocation2 + $0x174] sm:$0xf]
    %v225 = vld [vmem:[#allocation2 + $0x178] sm:$0xf]
    %v226 = vld [vmem:[#allocation2 + $0x17c] sm:$0xf]
    %v227 = vld [vmem:[%s1] sm:$0xff]
    %v231 = vunpack.c.l.b16 %v128
    %v232 = vunpack.c.h.b16 %v128
    %v233 = vunpack.c.l.b16 %v129
    %v234 = vunpack.c.h.b16 %v129
    %v235 = vunpack.c.l.b16 %v130
    %v236 = vunpack.c.h.b16 %v130
    %v237 = vpack.c.b16 %v231, %v231
    %v238 = vpack.c.b16 %v232, %v232
    %v239 = vpack.c.b16 %v233, %v233
    %v240 = vpack.c.b16 %v234, %v234
    %v241 = vpack.c.b16 %v235, %v235
    %v242 = vpack.c.b16 %v236, %v236
    %v345 = vunpack.c.l.b16 %v131
    %v346 = vunpack.c.l.b16 %v132
    %v347 = vunpack.c.l.b16 %v133
    %v348 = vunpack.c.l.b16 %v134
    %v349 = vunpack.c.l.b16 %v135
    %v350 = vunpack.c.l.b16 %v136
    %v351 = vunpack.c.l.b16 %v137
    %v352 = vunpack.c.l.b16 %v138
    %v353 = vunpack.c.l.b16 %v139
    %v354 = vunpack.c.l.b16 %v140
    %v355 = vunpack.c.l.b16 %v141
    %v356 = vunpack.c.l.b16 %v142
    %v357 = vunpack.c.l.b16 %v143
    %v358 = vunpack.c.l.b16 %v144
    %v359 = vunpack.c.l.b16 %v145
    %v360 = vunpack.c.l.b16 %v146
    %v361 = vunpack.c.l.b16 %v147
    %v362 = vunpack.c.l.b16 %v148
    %v363 = vunpack.c.l.b16 %v149
    %v364 = vunpack.c.l.b16 %v150
    %v365 = vunpack.c.l.b16 %v151
    %v366 = vunpack.c.l.b16 %v152
    %v367 = vunpack.c.l.b16 %v153
    %v368 = vunpack.c.l.b16 %v154
    %v369 = vunpack.c.l.b16 %v155
    %v370 = vunpack.c.l.b16 %v156
    %v371 = vunpack.c.l.b16 %v157
    %v372 = vunpack.c.l.b16 %v158
    %v373 = vunpack.c.l.b16 %v159
    %v374 = vunpack.c.l.b16 %v160
    %v375 = vunpack.c.l.b16 %v161
    %v376 = vunpack.c.l.b16 %v162
    %v377 = vunpack.c.l.b16 %v163
    %v378 = vunpack.c.l.b16 %v164
    %v379 = vunpack.c.l.b16 %v165
    %v380 = vunpack.c.l.b16 %v166
    %v381 = vunpack.c.l.b16 %v167
    %v382 = vunpack.c.l.b16 %v168
    %v383 = vunpack.c.l.b16 %v169
    %v384 = vunpack.c.l.b16 %v170
    %v385 = vunpack.c.l.b16 %v171
    %v386 = vunpack.c.l.b16 %v172
    %v387 = vunpack.c.l.b16 %v173
    %v388 = vunpack.c.l.b16 %v174
    %v389 = vunpack.c.l.b16 %v175
    %v390 = vunpack.c.l.b16 %v176
    %v391 = vunpack.c.l.b16 %v177
    %v392 = vunpack.c.l.b16 %v178
    %v393 = vunpack.c.l.b16 %v179
    %v394 = vunpack.c.l.b16 %v180
    %v395 = vunpack.c.l.b16 %v181
    %v396 = vunpack.c.l.b16 %v182
    %v397 = vunpack.c.l.b16 %v183
    %v398 = vunpack.c.l.b16 %v184
    %v399 = vunpack.c.l.b16 %v185
    %v400 = vunpack.c.l.b16 %v186
    %v401 = vunpack.c.l.b16 %v187
    %v402 = vunpack.c.l.b16 %v188
    %v403 = vunpack.c.l.b16 %v189
    %v404 = vunpack.c.l.b16 %v190
    %v405 = vunpack.c.l.b16 %v191
    %v406 = vunpack.c.l.b16 %v192
    %v407 = vunpack.c.l.b16 %v193
    %v408 = vunpack.c.l.b16 %v194
    %v409 = vunpack.c.l.b16 %v195
    %v410 = vunpack.c.l.b16 %v196
    %v411 = vunpack.c.l.b16 %v197
    %v412 = vunpack.c.l.b16 %v198
    %v413 = vunpack.c.l.b16 %v199
    %v414 = vunpack.c.l.b16 %v200
    %v415 = vunpack.c.l.b16 %v201
    %v416 = vunpack.c.l.b16 %v202
    %v417 = vunpack.c.l.b16 %v203
    %v418 = vunpack.c.l.b16 %v204
    %v419 = vunpack.c.l.b16 %v205
    %v420 = vunpack.c.l.b16 %v206
    %v421 = vunpack.c.l.b16 %v207
    %v422 = vunpack.c.l.b16 %v208
    %v423 = vunpack.c.l.b16 %v209
    %v424 = vunpack.c.l.b16 %v210
    %v425 = vunpack.c.l.b16 %v211
    %v426 = vunpack.c.l.b16 %v212
    %v427 = vunpack.c.l.b16 %v213
    %v428 = vunpack.c.l.b16 %v214
    %v429 = vunpack.c.l.b16 %v215
    %v430 = vunpack.c.l.b16 %v216
    %v431 = vunpack.c.l.b16 %v217
    %v432 = vunpack.c.l.b16 %v218
    %v433 = vunpack.c.l.b16 %v219
    %v434 = vunpack.c.l.b16 %v220
    %v435 = vunpack.c.l.b16 %v221
    %v436 = vunpack.c.l.b16 %v222
    %v437 = vunpack.c.l.b16 %v223
    %v438 = vunpack.c.l.b16 %v224
    %v439 = vunpack.c.l.b16 %v225
    %v440 = vunpack.c.l.b16 %v226
    %v441 = vpack.c.b16 %v346, %v345
    %v442 = vpack.c.b16 %v348, %v347
    %v443 = vpack.c.b16 %v350, %v349
    %v444 = vpack.c.b16 %v352, %v351
    %v445 = vpack.c.b16 %v354, %v353
    %v446 = vpack.c.b16 %v356, %v355
    %v447 = vpack.c.b16 %v358, %v357
    %v448 = vpack.c.b16 %v360, %v359
    %v449 = vpack.c.b16 %v362, %v361
    %v450 = vpack.c.b16 %v364, %v363
    %v451 = vpack.c.b16 %v366, %v365
    %v452 = vpack.c.b16 %v368, %v367
    %v453 = vpack.c.b16 %v370, %v369
    %v454 = vpack.c.b16 %v372, %v371
    %v455 = vpack.c.b16 %v374, %v373
    %v456 = vpack.c.b16 %v376, %v375
    %v457 = vpack.c.b16 %v378, %v377
    %v458 = vpack.c.b16 %v380, %v379
    %v459 = vpack.c.b16 %v382, %v381
    %v460 = vpack.c.b16 %v384, %v383
    %v461 = vpack.c.b16 %v386, %v385
    %v462 = vpack.c.b16 %v388, %v387
    %v463 = vpack.c.b16 %v390, %v389
    %v464 = vpack.c.b16 %v392, %v391
    %v465 = vpack.c.b16 %v394, %v393
    %v466 = vpack.c.b16 %v396, %v395
    %v467 = vpack.c.b16 %v398, %v397
    %v468 = vpack.c.b16 %v400, %v399
    %v469 = vpack.c.b16 %v402, %v401
    %v470 = vpack.c.b16 %v404, %v403
    %v471 = vpack.c.b16 %v406, %v405
    %v472 = vpack.c.b16 %v408, %v407
    %v473 = vpack.c.b16 %v410, %v409
    %v474 = vpack.c.b16 %v412, %v411
    %v475 = vpack.c.b16 %v414, %v413
    %v476 = vpack.c.b16 %v416, %v415
    %v477 = vpack.c.b16 %v418, %v417
    %v478 = vpack.c.b16 %v420, %v419
    %v479 = vpack.c.b16 %v422, %v421
    %v480 = vpack.c.b16 %v424, %v423
    %v481 = vpack.c.b16 %v426, %v425
    %v482 = vpack.c.b16 %v428, %v427
    %v483 = vpack.c.b16 %v430, %v429
    %v484 = vpack.c.b16 %v432, %v431
    %v485 = vpack.c.b16 %v434, %v433
    %v486 = vpack.c.b16 %v436, %v435
    %v487 = vpack.c.b16 %v438, %v437
    %v488 = vpack.c.b16 %v440, %v439
    %537 = vmatprep.subr.bf16.mxu0 0
    %538 = vmatpush1.bf16.msra.mxu0 %v441
    %539 = vmatprep.subr.bf16.mxu0 0
    %540 = vmatpush1.bf16.msra.mxu0 %v442
    %541 = vmatprep.subr.bf16.mxu0 0
    %542 = vmatpush1.bf16.msra.mxu0 %v443
    %543 = vmatprep.subr.bf16.mxu0 0
    %544 = vmatpush1.bf16.msra.mxu0 %v444
    %545 = vmatprep.subr.bf16.mxu0 0
    %546 = vmatpush1.bf16.msra.mxu0 %v445
    %547 = vmatprep.subr.bf16.mxu0 0
    %548 = vmatpush1.bf16.msra.mxu0 %v446
    %549 = vmatprep.subr.bf16.mxu0 0
    %550 = vmatpush1.bf16.msra.mxu0 %v447
    %551 = vmatprep.subr.bf16.mxu0 0
    %552 = vmatpush1.bf16.msra.mxu0 %v448
    %553 = vmatprep.subr.bf16.mxu0 0
    %554 = vmatpush1.bf16.msra.mxu0 %v449
    %555 = vmatprep.subr.bf16.mxu0 0
    %556 = vmatpush1.bf16.msra.mxu0 %v450
    %557 = vmatprep.subr.bf16.mxu0 0
    %558 = vmatpush1.bf16.msra.mxu0 %v451
    %559 = vmatprep.subr.bf16.mxu0 0
    %560 = vmatpush1.bf16.msra.mxu0 %v452
    %561 = vmatprep.subr.bf16.mxu0 0
    %562 = vmatpush1.bf16.msra.mxu0 %v453
    %563 = vmatprep.subr.bf16.mxu0 0
    %564 = vmatpush1.bf16.msra.mxu0 %v454
    %565 = vmatprep.subr.bf16.mxu0 0
    %566 = vmatpush1.bf16.msra.mxu0 %v455
    %567 = vmatprep.subr.bf16.mxu0 0
    %568 = vmatpush1.bf16.msra.mxu0 %v456
    %569 = vmatprep.mubr.bf16.mxu0 %v238
    %570 = vmatmul.mubr.bf16.gmra.mrb[0].mxu0 %v237
    %v571 = vpop.f32.mrb[0].mxu0
    %v572 = vadd.f32 %v227, %v571
    %v573 = vpop.f32.mrb[0].mxu0
    %v574 = vpop.f32.mrb[0].mxu0
    %v575 = vpop.f32.mrb[0].mxu0
    %576 = vdwg.mxu0
    %577 = vmatprep.subr.bf16.mxu0 0
    %578 = vmatpush1.bf16.msra.mxu0 %v457
    %579 = vmatprep.subr.bf16.mxu0 0
    %580 = vmatpush1.bf16.msra.mxu0 %v458
    %581 = vmatprep.subr.bf16.mxu0 0
    %582 = vmatpush1.bf16.msra.mxu0 %v459
    %583 = vmatprep.subr.bf16.mxu0 0
    %584 = vmatpush1.bf16.msra.mxu0 %v460
    %585 = vmatprep.subr.bf16.mxu0 0
    %586 = vmatpush1.bf16.msra.mxu0 %v461
    %587 = vmatprep.subr.bf16.mxu0 0
    %588 = vmatpush1.bf16.msra.mxu0 %v462
    %589 = vmatprep.subr.bf16.mxu0 0
    %590 = vmatpush1.bf16.msra.mxu0 %v463
    %591 = vmatprep.subr.bf16.mxu0 0
    %592 = vmatpush1.bf16.msra.mxu0 %v464
    %593 = vmatprep.subr.bf16.mxu0 0
    %594 = vmatpush1.bf16.msra.mxu0 %v465
    %595 = vmatprep.subr.bf16.mxu0 0
    %596 = vmatpush1.bf16.msra.mxu0 %v466
    %597 = vmatprep.subr.bf16.mxu0 0
    %598 = vmatpush1.bf16.msra.mxu0 %v467
    %599 = vmatprep.subr.bf16.mxu0 0
    %600 = vmatpush1.bf16.msra.mxu0 %v468
    %601 = vmatprep.subr.bf16.mxu0 0
    %602 = vmatpush1.bf16.msra.mxu0 %v469
    %603 = vmatprep.subr.bf16.mxu0 0
    %604 = vmatpush1.bf16.msra.mxu0 %v470
    %605 = vmatprep.subr.bf16.mxu0 0
    %606 = vmatpush1.bf16.msra.mxu0 %v471
    %607 = vmatprep.subr.bf16.mxu0 0
    %608 = vmatpush1.bf16.msra.mxu0 %v472
    %609 = vmatprep.mubr.bf16.mxu0 %v240
    %610 = vmatmul.mubr.bf16.gmra.mrb[0].mxu0 %v239
    %v611 = vpop.f32.mrb[0].mxu0
    %v612 = vadd.f32 %v572, %v611
    %v613 = vpop.f32.mrb[0].mxu0
    %v614 = vpop.f32.mrb[0].mxu0
    %v615 = vpop.f32.mrb[0].mxu0
    %616 = vdwg.mxu0
    %617 = vmatprep.subr.bf16.mxu0 0
    %618 = vmatpush1.bf16.msra.mxu0 %v473
    %619 = vmatprep.subr.bf16.mxu0 0
    %620 = vmatpush1.bf16.msra.mxu0 %v474
    %621 = vmatprep.subr.bf16.mxu0 0
    %622 = vmatpush1.bf16.msra.mxu0 %v475
    %623 = vmatprep.subr.bf16.mxu0 0
    %624 = vmatpush1.bf16.msra.mxu0 %v476
    %625 = vmatprep.subr.bf16.mxu0 0
    %626 = vmatpush1.bf16.msra.mxu0 %v477
    %627 = vmatprep.subr.bf16.mxu0 0
    %628 = vmatpush1.bf16.msra.mxu0 %v478
    %629 = vmatprep.subr.bf16.mxu0 0
    %630 = vmatpush1.bf16.msra.mxu0 %v479
    %631 = vmatprep.subr.bf16.mxu0 0
    %632 = vmatpush1.bf16.msra.mxu0 %v480
    %633 = vmatprep.subr.bf16.mxu0 0
    %634 = vmatpush1.bf16.msra.mxu0 %v481
    %635 = vmatprep.subr.bf16.mxu0 0
    %636 = vmatpush1.bf16.msra.mxu0 %v482
    %637 = vmatprep.subr.bf16.mxu0 0
    %638 = vmatpush1.bf16.msra.mxu0 %v483
    %639 = vmatprep.subr.bf16.mxu0 0
    %640 = vmatpush1.bf16.msra.mxu0 %v484
    %641 = vmatprep.subr.bf16.mxu0 0
    %642 = vmatpush1.bf16.msra.mxu0 %v485
    %643 = vmatprep.subr.bf16.mxu0 0
    %644 = vmatpush1.bf16.msra.mxu0 %v486
    %645 = vmatprep.subr.bf16.mxu0 0
    %646 = vmatpush1.bf16.msra.mxu0 %v487
    %647 = vmatprep.subr.bf16.mxu0 0
    %648 = vmatpush1.bf16.msra.mxu0 %v488
    %649 = vmatprep.mubr.bf16.mxu0 %v242
    %650 = vmatmul.mubr.bf16.gmra.mrb[0].mxu0 %v241
    %v651 = vpop.f32.mrb[0].mxu0
    %v652 = vadd.f32 %v612, %v651
    %v653 = vpop.f32.mrb[0].mxu0
    %v654 = vpop.f32.mrb[0].mxu0
    %v655 = vpop.f32.mrb[0].mxu0
    %656 = vdwg.mxu0
    %v657 = vld [vmem:[%s5] sm:$0x1]
    %v658 = vld [vmem:[%s6] sm:$0x1]
    %659 = vadd.xlane.f32.xlu0 %v652
    %v660 = vpop.xlane.xlu0 %659
    %v661 = vrcp.pop 128.0
    %v662 = vmul.f32 %v660, %v661
    %v663 = vsub.f32 %v652, %v662
    %v664 = vmul.f32 %v663, %v663
    %665 = vadd.xlane.f32.xlu0 %v664
    %v666 = vpop.xlane.xlu0 %665
    %v667 = vmul.f32 %v666, %v661
    %v668 = vadd.f32 %v667, 1e-05
    %v669 = vrsqrt.pop %v668
    %v670 = vmul.f32 %v663, %v669
    %v672 = vlaneseq
    %v673 = vshrl.u32 %v672, 7
    %v674 = vsub.s32 0, %v673
    %v675 = vrot.slane %v657, %v674
    %v677 = vmul.f32 %v670, %v675
    %v679 = vlaneseq
    %v680 = vshrl.u32 %v679, 7
    %v681 = vsub.s32 0, %v680
    %v682 = vrot.slane %v658, %v681
    %v684 = vadd.f32 %v677, %v682
    %v685 = vpack.c.bf16 %v684, %v684
    %v686 = vld [vmem:[#allocation5] sm:$0xff]
    %v687 = vld [vmem:[#allocation5 + $0x8] sm:$0xf]
    %v688 = vld [vmem:[#allocation5 + $0xc] sm:$0xff]
    %v689 = vld [vmem:[#allocation5 + $0x14] sm:$0xf]
    %v690 = vld [vmem:[#allocation5 + $0x18] sm:$0xff]
    %v691 = vld [vmem:[#allocation5 + $0x20] sm:$0xf]
    %v692 = vld [vmem:[#allocation5 + $0x24] sm:$0xff]
    %v693 = vld [vmem:[#allocation5 + $0x2c] sm:$0xf]
    %v694 = vld [vmem:[#allocation5 + $0x30] sm:$0xff]
    %v695 = vld [vmem:[#allocation5 + $0x38] sm:$0xf]
    %v696 = vld [vmem:[#allocation5 + $0x3c] sm:$0xff]
    %v697 = vld [vmem:[#allocation5 + $0x44] sm:$0xf]
    %v698 = vld [vmem:[#allocation5 + $0x48] sm:$0xff]
    %v699 = vld [vmem:[#allocation5 + $0x50] sm:$0xf]
    %v700 = vld [vmem:[#allocation5 + $0x54] sm:$0xff]
    %v701 = vld [vmem:[#allocation5 + $0x5c] sm:$0xf]
    %v702 = vld [vmem:[#allocation5 + $0x60] sm:$0xff]
    %v703 = vld [vmem:[#allocation5 + $0x68] sm:$0xf]
    %v704 = vld [vmem:[#allocation5 + $0x6c] sm:$0xff]
    %v705 = vld [vmem:[#allocation5 + $0x74] sm:$0xf]
    %v706 = vld [vmem:[#allocation5 + $0x78] sm:$0xff]
    %v707 = vld [vmem:[#allocation5 + $0x80] sm:$0xf]
    %v708 = vld [vmem:[#allocation5 + $0x84] sm:$0xff]
    %v709 = vld [vmem:[#allocation5 + $0x8c] sm:$0xf]
    %v710 = vld [vmem:[#allocation5 + $0x90] sm:$0xff]
    %v711 = vld [vmem:[#allocation5 + $0x98] sm:$0xf]
    %v712 = vld [vmem:[#allocation5 + $0x9c] sm:$0xff]
    %v713 = vld [vmem:[#allocation5 + $0xa4] sm:$0xf]
    %v714 = vld [vmem:[#allocation5 + $0xa8] sm:$0xff]
    %v715 = vld [vmem:[#allocation5 + $0xb0] sm:$0xf]
    %v716 = vld [vmem:[#allocation5 + $0xb4] sm:$0xff]
    %v717 = vld [vmem:[#allocation5 + $0xbc] sm:$0xf]
    %v718 = vld [vmem:[%s8] sm:$0x7]
    %v720 = vlaneseq
    %v721 = vshrl.u32 %v720, 7
    %v722 = vsub.s32 0, %v721
    %v723 = vrot.slane %v718, %v722
    %v724 = vlaneseq
    %v725 = vshrl.u32 %v724, 7
    %v726 = vsub.s32 1, %v725
    %v727 = vrot.slane %v718, %v726
    %v728 = vlaneseq
    %v729 = vshrl.u32 %v728, 7
    %v730 = vsub.s32 2, %v729
    %v731 = vrot.slane %v718, %v730
    %v767 = vunpack.c.l.b16 %v686
    %v768 = vunpack.c.h.b16 %v686
    %v769 = vunpack.c.l.b16 %v687
    %v770 = vunpack.c.l.b16 %v688
    %v771 = vunpack.c.h.b16 %v688
    %v772 = vunpack.c.l.b16 %v689
    %v773 = vunpack.c.l.b16 %v690
    %v774 = vunpack.c.h.b16 %v690
    %v775 = vunpack.c.l.b16 %v691
    %v776 = vunpack.c.l.b16 %v692
    %v777 = vunpack.c.h.b16 %v692
    %v778 = vunpack.c.l.b16 %v693
    %v779 = vunpack.c.l.b16 %v694
    %v780 = vunpack.c.h.b16 %v694
    %v781 = vunpack.c.l.b16 %v695
    %v782 = vunpack.c.l.b16 %v696
    %v783 = vunpack.c.h.b16 %v696
    %v784 = vunpack.c.l.b16 %v697
    %v785 = vunpack.c.l.b16 %v698
    %v786 = vunpack.c.h.b16 %v698
    %v787 = vunpack.c.l.b16 %v699
    %v788 = vunpack.c.l.b16 %v700
    %v789 = vunpack.c.h.b16 %v700
    %v790 = vunpack.c.l.b16 %v701
    %v791 = vunpack.c.l.b16 %v702
    %v792 = vunpack.c.h.b16 %v702
    %v793 = vunpack.c.l.b16 %v703
    %v794 = vunpack.c.l.b16 %v704
    %v795 = vunpack.c.h.b16 %v704
    %v796 = vunpack.c.l.b16 %v705
    %v797 = vunpack.c.l.b16 %v706
    %v798 = vunpack.c.h.b16 %v706
    %v799 = vunpack.c.l.b16 %v707
    %v800 = vunpack.c.l.b16 %v708
    %v801 = vunpack.c.h.b16 %v708
    %v802 = vunpack.c.l.b16 %v709
    %v803 = vunpack.c.l.b16 %v710
    %v804 = vunpack.c.h.b16 %v710
    %v805 = vunpack.c.l.b16 %v711
    %v806 = vunpack.c.l.b16 %v712
    %v807 = vunpack.c.h.b16 %v712
    %v808 = vunpack.c.l.b16 %v713
    %v809 = vunpack.c.l.b16 %v714
    %v810 = vunpack.c.h.b16 %v714
    %v811 = vunpack.c.l.b16 %v715
    %v812 = vunpack.c.l.b16 %v716
    %v813 = vunpack.c.h.b16 %v716
    %v814 = vunpack.c.l.b16 %v717
    %v815 = vpack.c.b16 %v770, %v767
    %v816 = vpack.c.b16 %v771, %v768
    %v817 = vpack.c.b16 %v772, %v769
    %v818 = vpack.c.b16 %v776, %v773
    %v819 = vpack.c.b16 %v777, %v774
    %v820 = vpack.c.b16 %v778, %v775
    %v821 = vpack.c.b16 %v782, %v779
    %v822 = vpack.c.b16 %v783, %v780
    %v823 = vpack.c.b16 %v784, %v781
    %v824 = vpack.c.b16 %v788, %v785
    %v825 = vpack.c.b16 %v789, %v786
    %v826 = vpack.c.b16 %v790, %v787
    %v827 = vpack.c.b16 %v794, %v791
    %v828 = vpack.c.b16 %v795, %v792
    %v829 = vpack.c.b16 %v796, %v793
    %v830 = vpack.c.b16 %v800, %v797
    %v831 = vpack.c.b16 %v801, %v798
    %v832 = vpack.c.b16 %v802, %v799
    %v833 = vpack.c.b16 %v806, %v803
    %v834 = vpack.c.b16 %v807, %v804
    %v835 = vpack.c.b16 %v808, %v805
    %v836 = vpack.c.b16 %v812, %v809
    %v837 = vpack.c.b16 %v813, %v810
    %v838 = vpack.c.b16 %v814, %v811
    %863 = vmatprep.subr.bf16.mxu0 %v816
    %864 = vmatpush1.bf16.msra.mxu0 %v815
    %865 = vmatprep.subr.bf16.mxu0 %v819
    %866 = vmatpush1.bf16.msra.mxu0 %v818
    %867 = vmatprep.subr.bf16.mxu0 %v822
    %868 = vmatpush1.bf16.msra.mxu0 %v821
    %869 = vmatprep.subr.bf16.mxu0 %v825
    %870 = vmatpush1.bf16.msra.mxu0 %v824
    %871 = vmatprep.subr.bf16.mxu0 %v828
    %872 = vmatpush1.bf16.msra.mxu0 %v827
    %873 = vmatprep.subr.bf16.mxu0 %v831
    %874 = vmatpush1.bf16.msra.mxu0 %v830
    %875 = vmatprep.subr.bf16.mxu0 %v834
    %876 = vmatpush1.bf16.msra.mxu0 %v833
    %877 = vmatprep.subr.bf16.mxu0 %v837
    %878 = vmatpush1.bf16.msra.mxu0 %v836
    %879 = vmatprep.subr.bf16.mxu0 0
    %880 = vmatpush1.bf16.msra.mxu0 0
    %881 = vmatprep.subr.bf16.mxu0 0
    %882 = vmatpush1.bf16.msra.mxu0 0
    %883 = vmatprep.subr.bf16.mxu0 0
    %884 = vmatpush1.bf16.msra.mxu0 0
    %885 = vmatprep.subr.bf16.mxu0 0
    %886 = vmatpush1.bf16.msra.mxu0 0
    %887 = vmatprep.subr.bf16.mxu0 0
    %888 = vmatpush1.bf16.msra.mxu0 0
    %889 = vmatprep.subr.bf16.mxu0 0
    %890 = vmatpush1.bf16.msra.mxu0 0
    %891 = vmatprep.subr.bf16.mxu0 0
    %892 = vmatpush1.bf16.msra.mxu0 0
    %893 = vmatprep.subr.bf16.mxu0 0
    %894 = vmatpush1.bf16.msra.mxu0 0
    %895 = vmatprep.mubr.bf16.mxu0 0
    %896 = vmatmul.mubr.bf16.gmra.mrb[0].mxu0 %v685
    %v897 = vpop.f32.mrb[0].mxu0
    %v898 = vadd.f32 %v723, %v897
    %v899 = vpop.f32.mrb[0].mxu0
    %v900 = vadd.f32 %v727, %v899
    %v901 = vpop.f32.mrb[0].mxu0
    %v902 = vpop.f32.mrb[0].mxu0
    %903 = vdwg.mxu0
    %904 = vmatprep.subr.bf16.mxu0 0
    %905 = vmatpush1.bf16.msra.mxu0 %v817
    %906 = vmatprep.subr.bf16.mxu0 0
    %907 = vmatpush1.bf16.msra.mxu0 %v820
    %908 = vmatprep.subr.bf16.mxu0 0
    %909 = vmatpush1.bf16.msra.mxu0 %v823
    %910 = vmatprep.subr.bf16.mxu0 0
    %911 = vmatpush1.bf16.msra.mxu0 %v826
    %912 = vmatprep.subr.bf16.mxu0 0
    %913 = vmatpush1.bf16.msra.mxu0 %v829
    %914 = vmatprep.subr.bf16.mxu0 0
    %915 = vmatpush1.bf16.msra.mxu0 %v832
    %916 = vmatprep.subr.bf16.mxu0 0
    %917 = vmatpush1.bf16.msra.mxu0 %v835
    %918 = vmatprep.subr.bf16.mxu0 0
    %919 = vmatpush1.bf16.msra.mxu0 %v838
    %920 = vmatprep.subr.bf16.mxu0 0
    %921 = vmatpush1.bf16.msra.mxu0 0
    %922 = vmatprep.subr.bf16.mxu0 0
    %923 = vmatpush1.bf16.msra.mxu0 0
    %924 = vmatprep.subr.bf16.mxu0 0
    %925 = vmatpush1.bf16.msra.mxu0 0
    %926 = vmatprep.subr.bf16.mxu0 0
    %927 = vmatpush1.bf16.msra.mxu0 0
    %928 = vmatprep.subr.bf16.mxu0 0
    %929 = vmatpush1.bf16.msra.mxu0 0
    %930 = vmatprep.subr.bf16.mxu0 0
    %931 = vmatpush1.bf16.msra.mxu0 0
    %932 = vmatprep.subr.bf16.mxu0 0
    %933 = vmatpush1.bf16.msra.mxu0 0
    %934 = vmatprep.subr.bf16.mxu0 0
    %935 = vmatpush1.bf16.msra.mxu0 0
    %936 = vmatprep.mubr.bf16.mxu0 0
    %937 = vmatmul.mubr.bf16.gmra.mrb[0].mxu0 %v685
    %v938 = vpop.f32.mrb[0].mxu0
    %v939 = vadd.f32 %v731, %v938
    %v940 = vpop.f32.mrb[0].mxu0
    %v941 = vpop.f32.mrb[0].mxu0
    %v942 = vpop.f32.mrb[0].mxu0
    %943 = vdwg.mxu0
    %v944 = vpack.c.bf16 %v898, %v898
    %v945 = vpack.c.bf16 %v900, %v900
    %v946 = vpack.c.bf16 %v939, %v939
    %948 = vrot.lane.b32.xlu0 %v944, 96
    %v949 = vpop.permute.xlu0 %948
    %950 = vrot.lane.b32.xlu0 %v944, 64
    %v951 = vpop.permute.xlu0 %950
    %952 = vrot.lane.b32.xlu0 %v944, 32
    %v953 = vpop.permute.xlu0 %952
    %955 = vrot.lane.b32.xlu0 %v945, 96
    %v956 = vpop.permute.xlu0 %955
    %957 = vrot.lane.b32.xlu0 %v945, 64
    %v958 = vpop.permute.xlu0 %957
    %959 = vrot.lane.b32.xlu0 %v945, 32
    %v960 = vpop.permute.xlu0 %959
    %962 = vrot.lane.b32.xlu0 %v946, 96
    %v963 = vpop.permute.xlu0 %962
    %964 = vrot.lane.b32.xlu0 %v946, 64
    %v965 = vpop.permute.xlu0 %964
    %966 = vrot.lane.b32.xlu0 %v946, 32
    %v967 = vpop.permute.xlu0 %966
    %vm968 = vcmask 261120
    %v970 = vsel %vm968, %v944, 0
    %v973 = vsel %vm968, %v945, 0
    %975 = vmatprep.subr.bf16.mxu0 0
    %976 = vmatpush1.bf16.xpose.msra.mxu0 %v973
    %977 = vmatprep.subr.bf16.mxu0 0
    %978 = vmatpush1.bf16.xpose.msra.mxu0 0
    %979 = vmatprep.subr.bf16.mxu0 0
    %980 = vmatpush1.bf16.xpose.msra.mxu0 0
    %981 = vmatprep.subr.bf16.mxu0 0
    %982 = vmatpush1.bf16.xpose.msra.mxu0 0
    %983 = vmatprep.subr.bf16.mxu0 0
    %984 = vmatpush1.bf16.xpose.msra.mxu0 0
    %985 = vmatprep.subr.bf16.mxu0 0
    %986 = vmatpush1.bf16.xpose.msra.mxu0 0
    %987 = vmatprep.subr.bf16.mxu0 0
    %988 = vmatpush1.bf16.xpose.msra.mxu0 0
    %989 = vmatprep.subr.bf16.mxu0 0
    %990 = vmatpush1.bf16.xpose.msra.mxu0 0
    %991 = vmatprep.subr.bf16.mxu0 0
    %992 = vmatpush1.bf16.xpose.msra.mxu0 0
    %993 = vmatprep.subr.bf16.mxu0 0
    %994 = vmatpush1.bf16.xpose.msra.mxu0 0
    %995 = vmatprep.subr.bf16.mxu0 0
    %996 = vmatpush1.bf16.xpose.msra.mxu0 0
    %997 = vmatprep.subr.bf16.mxu0 0
    %998 = vmatpush1.bf16.xpose.msra.mxu0 0
    %999 = vmatprep.subr.bf16.mxu0 0
    %1000 = vmatpush1.bf16.xpose.msra.mxu0 0
    %1001 = vmatprep.subr.bf16.mxu0 0
    %1002 = vmatpush1.bf16.xpose.msra.mxu0 0
    %1003 = vmatprep.subr.bf16.mxu0 0
    %1004 = vmatpush1.bf16.xpose.msra.mxu0 0
    %1005 = vmatprep.subr.bf16.mxu0 0
    %1006 = vmatpush1.bf16.xpose.msra.mxu0 0
    %1007 = vmatprep.mubr.bf16.mxu0 0
    %1008 = vmatmul.mubr.bf16.gmra.mrb[0].mxu0 %v970
    %v1009 = vpop.f32.mrb[0].mxu0
    %v1010 = vadd.f32 0.0, %v1009
    %v1011 = vpop.f32.mrb[0].mxu0
    %v1012 = vpop.f32.mrb[0].mxu0
    %v1013 = vpop.f32.mrb[0].mxu0
    %1014 = vdwg.mxu0
    %v1016 = vsel %vm968, %v949, 0
    %v1019 = vsel %vm968, %v956, 0
    %1021 = vmatprep.subr.bf16.mxu0 0
    %1022 = vmatpush1.bf16.xpose.msra.mxu0 %v1019
    %1023 = vmatprep.subr.bf16.mxu0 0
    %1024 = vmatpush1.bf16.xpose.msra.mxu0 0
    %1025 = vmatprep.subr.bf16.mxu0 0
    %1026 = vmatpush1.bf16.xpose.msra.mxu0 0
    %1027 = vmatprep.subr.bf16.mxu0 0
    %1028 = vmatpush1.bf16.xpose.msra.mxu0 0
    %1029 = vmatprep.subr.bf16.mxu0 0
    %1030 = vmatpush1.bf16.xpose.msra.mxu0 0
    %1031 = vmatprep.subr.bf16.mxu0 0
    %1032 = vmatpush1.bf16.xpose.msra.mxu0 0
    %1033 = vmatprep.subr.bf16.mxu0 0
    %1034 = vmatpush1.bf16.xpose.msra.mxu0 0
    %1035 = vmatprep.subr.bf16.mxu0 0
    %1036 = vmatpush1.bf16.xpose.msra.mxu0 0
    %1037 = vmatprep.subr.bf16.mxu0 0
    %1038 = vmatpush1.bf16.xpose.msra.mxu0 0
    %1039 = vmatprep.subr.bf16.mxu0 0
    %1040 = vmatpush1.bf16.xpose.msra.mxu0 0
    %1041 = vmatprep.subr.bf16.mxu0 0
    %1042 = vmatpush1.bf16.xpose.msra.mxu0 0
    %1043 = vmatprep.subr.bf16.mxu0 0
    %1044 = vmatpush1.bf16.xpose.msra.mxu0 0
    %1045 = vmatprep.subr.bf16.mxu0 0
    %1046 = vmatpush1.bf16.xpose.msra.mxu0 0
    %1047 = vmatprep.subr.bf16.mxu0 0
    %1048 = vmatpush1.bf16.xpose.msra.mxu0 0
    %1049 = vmatprep.subr.bf16.mxu0 0
    %1050 = vmatpush1.bf16.xpose.msra.mxu0 0
    %1051 = vmatprep.subr.bf16.mxu0 0
    %1052 = vmatpush1.bf16.xpose.msra.mxu0 0
    %1053 = vmatprep.mubr.bf16.mxu0 0
    %1054 = vmatmul.mubr.bf16.gmra.mrb[0].mxu0 %v1016
    %v1055 = vpop.f32.mrb[0].mxu0
    %v1056 = vadd.f32 0.0, %v1055
    %v1057 = vpop.f32.mrb[0].mxu0
    %v1058 = vpop.f32.mrb[0].mxu0
    %v1059 = vpop.f32.mrb[0].mxu0
    %1060 = vdwg.mxu0
    %v1062 = vsel %vm968, %v951, 0
    %v1065 = vsel %vm968, %v958, 0
    %1067 = vmatprep.subr.bf16.mxu0 0
    %1068 = vmatpush1.bf16.xpose.msra.mxu0 %v1065
    %1069 = vmatprep.subr.bf16.mxu0 0
    %1070 = vmatpush1.bf16.xpose.msra.mxu0 0
    %1071 = vmatprep.subr.bf16.mxu0 0
    %1072 = vmatpush1.bf16.xpose.msra.mxu0 0
    %1073 = vmatprep.subr.bf16.mxu0 0
    %1074 = vmatpush1.bf16.xpose.msra.mxu0 0
    %1075 = vmatprep.subr.bf16.mxu0 0
    %1076 = vmatpush1.bf16.xpose.msra.mxu0 0
    %1077 = vmatprep.subr.bf16.mxu0 0
    %1078 = vmatpush1.bf16.xpose.msra.mxu0 0
    %1079 = vmatprep.subr.bf16.mxu0 0
    %1080 = vmatpush1.bf16.xpose.msra.mxu0 0
    %1081 = vmatprep.subr.bf16.mxu0 0
    %1082 = vmatpush1.bf16.xpose.msra.mxu0 0
    %1083 = vmatprep.subr.bf16.mxu0 0
    %1084 = vmatpush1.bf16.xpose.msra.mxu0 0
    %1085 = vmatprep.subr.bf16.mxu0 0
    %1086 = vmatpush1.bf16.xpose.msra.mxu0 0
    %1087 = vmatprep.subr.bf16.mxu0 0
    %1088 = vmatpush1.bf16.xpose.msra.mxu0 0
    %1089 = vmatprep.subr.bf16.mxu0 0
    %1090 = vmatpush1.bf16.xpose.msra.mxu0 0
    %1091 = vmatprep.subr.bf16.mxu0 0
    %1092 = vmatpush1.bf16.xpose.msra.mxu0 0
    %1093 = vmatprep.subr.bf16.mxu0 0
    %1094 = vmatpush1.bf16.xpose.msra.mxu0 0
    %1095 = vmatprep.subr.bf16.mxu0 0
    %1096 = vmatpush1.bf16.xpose.msra.mxu0 0
    %1097 = vmatprep.subr.bf16.mxu0 0
    %1098 = vmatpush1.bf16.xpose.msra.mxu0 0
    %1099 = vmatprep.mubr.bf16.mxu0 0
    %1100 = vmatmul.mubr.bf16.gmra.mrb[0].mxu0 %v1062
    %v1101 = vpop.f32.mrb[0].mxu0
    %v1102 = vadd.f32 0.0, %v1101
    %v1103 = vpop.f32.mrb[0].mxu0
    %v1104 = vpop.f32.mrb[0].mxu0
    %v1105 = vpop.f32.mrb[0].mxu0
    %1106 = vdwg.mxu0
    %v1108 = vsel %vm968, %v953, 0
    %v1111 = vsel %vm968, %v960, 0
    %1113 = vmatprep.subr.bf16.mxu0 0
    %1114 = vmatpush1.bf16.xpose.msra.mxu0 %v1111
    %1115 = vmatprep.subr.bf16.mxu0 0
    %1116 = vmatpush1.bf16.xpose.msra.mxu0 0
    %1117 = vmatprep.subr.bf16.mxu0 0
    %1118 = vmatpush1.bf16.xpose.msra.mxu0 0
    %1119 = vmatprep.subr.bf16.mxu0 0
    %1120 = vmatpush1.bf16.xpose.msra.mxu0 0
    %1121 = vmatprep.subr.bf16.mxu0 0
    %1122 = vmatpush1.bf16.xpose.msra.mxu0 0
    %1123 = vmatprep.subr.bf16.mxu0 0
    %1124 = vmatpush1.bf16.xpose.msra.mxu0 0
    %1125 = vmatprep.subr.bf16.mxu0 0
    %1126 = vmatpush1.bf16.xpose.msra.mxu0 0
    %1127 = vmatprep.subr.bf16.mxu0 0
    %1128 = vmatpush1.bf16.xpose.msra.mxu0 0
    %1129 = vmatprep.subr.bf16.mxu0 0
    %1130 = vmatpush1.bf16.xpose.msra.mxu0 0
    %1131 = vmatprep.subr.bf16.mxu0 0
    %1132 = vmatpush1.bf16.xpose.msra.mxu0 0
    %1133 = vmatprep.subr.bf16.mxu0 0
    %1134 = vmatpush1.bf16.xpose.msra.mxu0 0
    %1135 = vmatprep.subr.bf16.mxu0 0
    %1136 = vmatpush1.bf16.xpose.msra.mxu0 0
    %1137 = vmatprep.subr.bf16.mxu0 0
    %1138 = vmatpush1.bf16.xpose.msra.mxu0 0
    %1139 = vmatprep.subr.bf16.mxu0 0
    %1140 = vmatpush1.bf16.xpose.msra.mxu0 0
    %1141 = vmatprep.subr.bf16.mxu0 0
    %1142 = vmatpush1.bf16.xpose.msra.mxu0 0
    %1143 = vmatprep.subr.bf16.mxu0 0
    %1144 = vmatpush1.bf16.xpose.msra.mxu0 0
    %1145 = vmatprep.mubr.bf16.mxu0 0
    %1146 = vmatmul.mubr.bf16.gmra.mrb[0].mxu0 %v1108
    %v1147 = vpop.f32.mrb[0].mxu0
    %v1148 = vadd.f32 0.0, %v1147
    %v1149 = vpop.f32.mrb[0].mxu0
    %v1150 = vpop.f32.mrb[0].mxu0
    %v1151 = vpop.f32.mrb[0].mxu0
    %1152 = vdwg.mxu0
    %v1153 = vmul.f32 %v1010, 0.17677669
    %v1154 = vmul.f32 %v1056, 0.17677669
    %v1155 = vmul.f32 %v1102, 0.17677669
    %v1156 = vmul.f32 %v1148, 0.17677669
    %v1157 = vadd.f32 %v1153, %v127
    %v1158 = vadd.f32 %v1154, %v127
    %v1159 = vadd.f32 %v1155, %v127
    %v1160 = vadd.f32 %v1156, %v127
    %vm1161 = vcmask 64512
    %v1162 = vsel %vm1161, %v1157, -inf
    %1163 = vmax.xlane.f32.xlu0 %v1162
    %v1164 = vpop.xlane.xlu0 %1163
    %v1165 = vsel %vm1161, %v1158, -inf
    %1166 = vmax.xlane.f32.xlu0 %v1165
    %v1167 = vpop.xlane.xlu0 %1166
    %v1168 = vsel %vm1161, %v1159, -inf
    %1169 = vmax.xlane.f32.xlu0 %v1168
    %v1170 = vpop.xlane.xlu0 %1169
    %v1171 = vsel %vm1161, %v1160, -inf
    %1172 = vmax.xlane.f32.xlu0 %v1171
    %v1173 = vpop.xlane.xlu0 %1172
    %v1174 = vsub.f32 %v1157, %v1164
    %v1175 = vsub.f32 %v1158, %v1167
    %v1176 = vsub.f32 %v1159, %v1170
    %v1177 = vsub.f32 %v1160, %v1173
    %v1178 = vmul.f32 %v1174, 1.442695
    %v1179 = vpow.pop %v1178
    %v1180 = vmul.f32 %v1175, 1.442695
    %v1181 = vpow.pop %v1180
    %v1182 = vmul.f32 %v1176, 1.442695
    %v1183 = vpow.pop %v1182
    %v1184 = vmul.f32 %v1177, 1.442695
    %v1185 = vpow.pop %v1184
    %v1186 = vsel %vm1161, %v1179, 0.0
    %1187 = vadd.xlane.f32.xlu0 %v1186
    %v1188 = vpop.xlane.xlu0 %1187
    %v1189 = vsel %vm1161, %v1181, 0.0
    %1190 = vadd.xlane.f32.xlu0 %v1189
    %v1191 = vpop.xlane.xlu0 %1190
    %v1192 = vsel %vm1161, %v1183, 0.0
    %1193 = vadd.xlane.f32.xlu0 %v1192
    %v1194 = vpop.xlane.xlu0 %1193
    %v1195 = vsel %vm1161, %v1185, 0.0
    %1196 = vadd.xlane.f32.xlu0 %v1195
    %v1197 = vpop.xlane.xlu0 %1196
    %v1198 = vrcp.pop %v1188
    %v1199 = vrcp.pop %v1191
    %v1200 = vrcp.pop %v1194
    %v1201 = vrcp.pop %v1197
    %v1202 = vmul.f32 %v1179, %v1198
    %v1203 = vmul.f32 %v1181, %v1199
    %v1204 = vmul.f32 %v1183, %v1200
    %v1205 = vmul.f32 %v1185, %v1201
    %v1206 = vpack.c.bf16 %v1202, %v1202
    %v1207 = vpack.c.bf16 %v1203, %v1203
    %v1208 = vpack.c.bf16 %v1204, %v1204
    %v1209 = vpack.c.bf16 %v1205, %v1205
    %v1211 = vsel %vm1161, %v1206, 0
    %vm1213 = vcmask 1043456
    %v1215 = vsel %vm1213, %v946, 0
    %1217 = vmatprep.subr.bf16.mxu0 0
    %1218 = vmatpush1.bf16.msra.mxu0 %v1215
    %1219 = vmatprep.subr.bf16.mxu0 0
    %1220 = vmatpush1.bf16.msra.mxu0 0
    %1221 = vmatprep.subr.bf16.mxu0 0
    %1222 = vmatpush1.bf16.msra.mxu0 0
    %1223 = vmatprep.subr.bf16.mxu0 0
    %1224 = vmatpush1.bf16.msra.mxu0 0
    %1225 = vmatprep.subr.bf16.mxu0 0
    %1226 = vmatpush1.bf16.msra.mxu0 0
    %1227 = vmatprep.subr.bf16.mxu0 0
    %1228 = vmatpush1.bf16.msra.mxu0 0
    %1229 = vmatprep.subr.bf16.mxu0 0
    %1230 = vmatpush1.bf16.msra.mxu0 0
    %1231 = vmatprep.subr.bf16.mxu0 0
    %1232 = vmatpush1.bf16.msra.mxu0 0
    %1233 = vmatprep.subr.bf16.mxu0 0
    %1234 = vmatpush1.bf16.msra.mxu0 0
    %1235 = vmatprep.subr.bf16.mxu0 0
    %1236 = vmatpush1.bf16.msra.mxu0 0
    %1237 = vmatprep.subr.bf16.mxu0 0
    %1238 = vmatpush1.bf16.msra.mxu0 0
    %1239 = vmatprep.subr.bf16.mxu0 0
    %1240 = vmatpush1.bf16.msra.mxu0 0
    %1241 = vmatprep.subr.bf16.mxu0 0
    %1242 = vmatpush1.bf16.msra.mxu0 0
    %1243 = vmatprep.subr.bf16.mxu0 0
    %1244 = vmatpush1.bf16.msra.mxu0 0
    %1245 = vmatprep.subr.bf16.mxu0 0
    %1246 = vmatpush1.bf16.msra.mxu0 0
    %1247 = vmatprep.subr.bf16.mxu0 0
    %1248 = vmatpush1.bf16.msra.mxu0 0
    %1249 = vmatprep.mubr.bf16.mxu0 0
    %1250 = vmatmul.mubr.bf16.gmra.mrb[0].mxu0 %v1211
    %v1251 = vpop.f32.mrb[0].mxu0
    %v1252 = vadd.f32 0.0, %v1251
    %v1253 = vpop.f32.mrb[0].mxu0
    %v1254 = vpop.f32.mrb[0].mxu0
    %v1255 = vpop.f32.mrb[0].mxu0
    %1256 = vdwg.mxu0
    %v1258 = vsel %vm1161, %v1207, 0
    %v1261 = vsel %vm1213, %v963, 0
    %1263 = vmatprep.subr.bf16.mxu0 0
    %1264 = vmatpush1.bf16.msra.mxu0 %v1261
    %1265 = vmatprep.subr.bf16.mxu0 0
    %1266 = vmatpush1.bf16.msra.mxu0 0
    %1267 = vmatprep.subr.bf16.mxu0 0
    %1268 = vmatpush1.bf16.msra.mxu0 0
    %1269 = vmatprep.subr.bf16.mxu0 0
    %1270 = vmatpush1.bf16.msra.mxu0 0
    %1271 = vmatprep.subr.bf16.mxu0 0
    %1272 = vmatpush1.bf16.msra.mxu0 0
    %1273 = vmatprep.subr.bf16.mxu0 0
    %1274 = vmatpush1.bf16.msra.mxu0 0
    %1275 = vmatprep.subr.bf16.mxu0 0
    %1276 = vmatpush1.bf16.msra.mxu0 0
    %1277 = vmatprep.subr.bf16.mxu0 0
    %1278 = vmatpush1.bf16.msra.mxu0 0
    %1279 = vmatprep.subr.bf16.mxu0 0
    %1280 = vmatpush1.bf16.msra.mxu0 0
    %1281 = vmatprep.subr.bf16.mxu0 0
    %1282 = vmatpush1.bf16.msra.mxu0 0
    %1283 = vmatprep.subr.bf16.mxu0 0
    %1284 = vmatpush1.bf16.msra.mxu0 0
    %1285 = vmatprep.subr.bf16.mxu0 0
    %1286 = vmatpush1.bf16.msra.mxu0 0
    %1287 = vmatprep.subr.bf16.mxu0 0
    %1288 = vmatpush1.bf16.msra.mxu0 0
    %1289 = vmatprep.subr.bf16.mxu0 0
    %1290 = vmatpush1.bf16.msra.mxu0 0
    %1291 = vmatprep.subr.bf16.mxu0 0
    %1292 = vmatpush1.bf16.msra.mxu0 0
    %1293 = vmatprep.subr.bf16.mxu0 0
    %1294 = vmatpush1.bf16.msra.mxu0 0
    %1295 = vmatprep.mubr.bf16.mxu0 0
    %1296 = vmatmul.mubr.bf16.gmra.mrb[0].mxu0 %v1258
    %v1297 = vpop.f32.mrb[0].mxu0
    %v1298 = vadd.f32 0.0, %v1297
    %v1299 = vpop.f32.mrb[0].mxu0
    %v1300 = vpop.f32.mrb[0].mxu0
    %v1301 = vpop.f32.mrb[0].mxu0
    %1302 = vdwg.mxu0
    %v1304 = vsel %vm1161, %v1208, 0
    %v1307 = vsel %vm1213, %v965, 0
    %1309 = vmatprep.subr.bf16.mxu0 0
    %1310 = vmatpush1.bf16.msra.mxu0 %v1307
    %1311 = vmatprep.subr.bf16.mxu0 0
    %1312 = vmatpush1.bf16.msra.mxu0 0
    %1313 = vmatprep.subr.bf16.mxu0 0
    %1314 = vmatpush1.bf16.msra.mxu0 0
    %1315 = vmatprep.subr.bf16.mxu0 0
    %1316 = vmatpush1.bf16.msra.mxu0 0
    %1317 = vmatprep.subr.bf16.mxu0 0
    %1318 = vmatpush1.bf16.msra.mxu0 0
    %1319 = vmatprep.subr.bf16.mxu0 0
    %1320 = vmatpush1.bf16.msra.mxu0 0
    %1321 = vmatprep.subr.bf16.mxu0 0
    %1322 = vmatpush1.bf16.msra.mxu0 0
    %1323 = vmatprep.subr.bf16.mxu0 0
    %1324 = vmatpush1.bf16.msra.mxu0 0
    %1325 = vmatprep.subr.bf16.mxu0 0
    %1326 = vmatpush1.bf16.msra.mxu0 0
    %1327 = vmatprep.subr.bf16.mxu0 0
    %1328 = vmatpush1.bf16.msra.mxu0 0
    %1329 = vmatprep.subr.bf16.mxu0 0
    %1330 = vmatpush1.bf16.msra.mxu0 0
    %1331 = vmatprep.subr.bf16.mxu0 0
    %1332 = vmatpush1.bf16.msra.mxu0 0
    %1333 = vmatprep.subr.bf16.mxu0 0
    %1334 = vmatpush1.bf16.msra.mxu0 0
    %1335 = vmatprep.subr.bf16.mxu0 0
    %1336 = vmatpush1.bf16.msra.mxu0 0
    %1337 = vmatprep.subr.bf16.mxu0 0
    %1338 = vmatpush1.bf16.msra.mxu0 0
    %1339 = vmatprep.subr.bf16.mxu0 0
    %1340 = vmatpush1.bf16.msra.mxu0 0
    %1341 = vmatprep.mubr.bf16.mxu0 0
    %1342 = vmatmul.mubr.bf16.gmra.mrb[0].mxu0 %v1304
    %v1343 = vpop.f32.mrb[0].mxu0
    %v1344 = vadd.f32 0.0, %v1343
    %v1345 = vpop.f32.mrb[0].mxu0
    %v1346 = vpop.f32.mrb[0].mxu0
    %v1347 = vpop.f32.mrb[0].mxu0
    %1348 = vdwg.mxu0
    %v1350 = vsel %vm1161, %v1209, 0
    %v1353 = vsel %vm1213, %v967, 0
    %1355 = vmatprep.subr.bf16.mxu0 0
    %1356 = vmatpush1.bf16.msra.mxu0 %v1353
    %1357 = vmatprep.subr.bf16.mxu0 0
    %1358 = vmatpush1.bf16.msra.mxu0 0
    %1359 = vmatprep.subr.bf16.mxu0 0
    %1360 = vmatpush1.bf16.msra.mxu0 0
    %1361 = vmatprep.subr.bf16.mxu0 0
    %1362 = vmatpush1.bf16.msra.mxu0 0
    %1363 = vmatprep.subr.bf16.mxu0 0
    %1364 = vmatpush1.bf16.msra.mxu0 0
    %1365 = vmatprep.subr.bf16.mxu0 0
    %1366 = vmatpush1.bf16.msra.mxu0 0
    %1367 = vmatprep.subr.bf16.mxu0 0
    %1368 = vmatpush1.bf16.msra.mxu0 0
    %1369 = vmatprep.subr.bf16.mxu0 0
    %1370 = vmatpush1.bf16.msra.mxu0 0
    %1371 = vmatprep.subr.bf16.mxu0 0
    %1372 = vmatpush1.bf16.msra.mxu0 0
    %1373 = vmatprep.subr.bf16.mxu0 0
    %1374 = vmatpush1.bf16.msra.mxu0 0
    %1375 = vmatprep.subr.bf16.mxu0 0
    %1376 = vmatpush1.bf16.msra.mxu0 0
    %1377 = vmatprep.subr.bf16.mxu0 0
    %1378 = vmatpush1.bf16.msra.mxu0 0
    %1379 = vmatprep.subr.bf16.mxu0 0
    %1380 = vmatpush1.bf16.msra.mxu0 0
    %1381 = vmatprep.subr.bf16.mxu0 0
    %1382 = vmatpush1.bf16.msra.mxu0 0
    %1383 = vmatprep.subr.bf16.mxu0 0
    %1384 = vmatpush1.bf16.msra.mxu0 0
    %1385 = vmatprep.subr.bf16.mxu0 0
    %1386 = vmatpush1.bf16.msra.mxu0 0
    %1387 = vmatprep.mubr.bf16.mxu0 0
    %1388 = vmatmul.mubr.bf16.gmra.mrb[0].mxu0 %v1350
    %v1389 = vpop.f32.mrb[0].mxu0
    %v1390 = vadd.f32 0.0, %v1389
    %v1391 = vpop.f32.mrb[0].mxu0
    %v1392 = vpop.f32.mrb[0].mxu0
    %v1393 = vpop.f32.mrb[0].mxu0
    %1394 = vdwg.mxu0
    %1396 = vrot.lane.b32.xlu0 %v1298, 32
    %v1397 = vpop.permute.xlu0 %1396
    %1400 = vrot.lane.b32.xlu0 %v1344, 64
    %v1401 = vpop.permute.xlu0 %1400
    %1404 = vrot.lane.b32.xlu0 %v1390, 96
    %v1405 = vpop.permute.xlu0 %1404
    %v1407 = vsel %vm968, %v1252, %v1397
    %vm1408 = vcmask 523264
    %v1409 = vsel %vm1408, %v1407, %v1401
    %vm1410 = vcmask 785408
    %v1411 = vsel %vm1410, %v1409, %v1405
    %v1412 = vpack.c.bf16 %v1411, %v1411
    %v1413 = vld [vmem:[%s9] sm:$0xf]
    %v1414 = vld [vmem:[%s9 + $0x4] sm:$0xf]
    %v1415 = vld [vmem:[%s9 + $0x8] sm:$0xf]
    %v1416 = vld [vmem:[%s9 + $0xc] sm:$0xf]
    %v1417 = vld [vmem:[%s9 + $0x10] sm:$0xf]
    %v1418 = vld [vmem:[%s9 + $0x14] sm:$0xf]
    %v1419 = vld [vmem:[%s9 + $0x18] sm:$0xf]
    %v1420 = vld [vmem:[%s9 + $0x1c] sm:$0xf]
    %v1421 = vld [vmem:[%s9 + $0x20] sm:$0xf]
    %v1422 = vld [vmem:[%s9 + $0x24] sm:$0xf]
    %v1423 = vld [vmem:[%s9 + $0x28] sm:$0xf]
    %v1424 = vld [vmem:[%s9 + $0x2c] sm:$0xf]
    %v1425 = vld [vmem:[%s9 + $0x30] sm:$0xf]
    %v1426 = vld [vmem:[%s9 + $0x34] sm:$0xf]
    %v1427 = vld [vmem:[%s9 + $0x38] sm:$0xf]
    %v1428 = vld [vmem:[%s9 + $0x3c] sm:$0xf]
    %v1429 = vld [vmem:[%s10] sm:$0x1]
    %v1431 = vlaneseq
    %v1432 = vshrl.u32 %v1431, 7
    %v1433 = vsub.s32 0, %v1432
    %v1434 = vrot.slane %v1429, %v1433
    %v1452 = vunpack.c.l.b16 %v1413
    %v1453 = vunpack.c.l.b16 %v1414
    %v1454 = vunpack.c.l.b16 %v1415
    %v1455 = vunpack.c.l.b16 %v1416
    %v1456 = vunpack.c.l.b16 %v1417
    %v1457 = vunpack.c.l.b16 %v1418
    %v1458 = vunpack.c.l.b16 %v1419
    %v1459 = vunpack.c.l.b16 %v1420
    %v1460 = vunpack.c.l.b16 %v1421
    %v1461 = vunpack.c.l.b16 %v1422
    %v1462 = vunpack.c.l.b16 %v1423
    %v1463 = vunpack.c.l.b16 %v1424
    %v1464 = vunpack.c.l.b16 %v1425
    %v1465 = vunpack.c.l.b16 %v1426
    %v1466 = vunpack.c.l.b16 %v1427
    %v1467 = vunpack.c.l.b16 %v1428
    %v1468 = vpack.c.b16 %v1453, %v1452
    %v1469 = vpack.c.b16 %v1455, %v1454
    %v1470 = vpack.c.b16 %v1457, %v1456
    %v1471 = vpack.c.b16 %v1459, %v1458
    %v1472 = vpack.c.b16 %v1461, %v1460
    %v1473 = vpack.c.b16 %v1463, %v1462
    %v1474 = vpack.c.b16 %v1465, %v1464
    %v1475 = vpack.c.b16 %v1467, %v1466
    %1484 = vmatprep.subr.bf16.mxu0 0
    %1485 = vmatpush1.bf16.msra.mxu0 %v1468
    %1486 = vmatprep.subr.bf16.mxu0 0
    %1487 = vmatpush1.bf16.msra.mxu0 %v1469
    %1488 = vmatprep.subr.bf16.mxu0 0
    %1489 = vmatpush1.bf16.msra.mxu0 %v1470
    %1490 = vmatprep.subr.bf16.mxu0 0
    %1491 = vmatpush1.bf16.msra.mxu0 %v1471
    %1492 = vmatprep.subr.bf16.mxu0 0
    %1493 = vmatpush1.bf16.msra.mxu0 %v1472
    %1494 = vmatprep.subr.bf16.mxu0 0
    %1495 = vmatpush1.bf16.msra.mxu0 %v1473
    %1496 = vmatprep.subr.bf16.mxu0 0
    %1497 = vmatpush1.bf16.msra.mxu0 %v1474
    %1498 = vmatprep.subr.bf16.mxu0 0
    %1499 = vmatpush1.bf16.msra.mxu0 %v1475
    %1500 = vmatprep.subr.bf16.mxu0 0
    %1501 = vmatpush1.bf16.msra.mxu0 0
    %1502 = vmatprep.subr.bf16.mxu0 0
    %1503 = vmatpush1.bf16.msra.mxu0 0
    %1504 = vmatprep.subr.bf16.mxu0 0
    %1505 = vmatpush1.bf16.msra.mxu0 0
    %1506 = vmatprep.subr.bf16.mxu0 0
    %1507 = vmatpush1.bf16.msra.mxu0 0
    %1508 = vmatprep.subr.bf16.mxu0 0
    %1509 = vmatpush1.bf16.msra.mxu0 0
    %1510 = vmatprep.subr.bf16.mxu0 0
    %1511 = vmatpush1.bf16.msra.mxu0 0
    %1512 = vmatprep.subr.bf16.mxu0 0
    %1513 = vmatpush1.bf16.msra.mxu0 0
    %1514 = vmatprep.subr.bf16.mxu0 0
    %1515 = vmatpush1.bf16.msra.mxu0 0
    %1516 = vmatprep.mubr.bf16.mxu0 0
    %1517 = vmatmul.mubr.bf16.gmra.mrb[0].mxu0 %v1412
    %v1518 = vpop.f32.mrb[0].mxu0
    %v1519 = vadd.f32 %v1434, %v1518
    %v1520 = vpop.f32.mrb[0].mxu0
    %v1521 = vpop.f32.mrb[0].mxu0
    %v1522 = vpop.f32.mrb[0].mxu0
    %1523 = vdwg.mxu0
    %v1524 = vadd.f32 %v652, %v1519
    %v1525 = vld [vmem:[%s11] sm:$0x1]
    %v1526 = vld [vmem:[%s12] sm:$0x1]
    %1527 = vadd.xlane.f32.xlu0 %v1524
    %v1528 = vpop.xlane.xlu0 %1527
    %v1529 = vmul.f32 %v1528, %v661
    %v1530 = vsub.f32 %v1524, %v1529
    %v1531 = vmul.f32 %v1530, %v1530
    %1532 = vadd.xlane.f32.xlu0 %v1531
    %v1533 = vpop.xlane.xlu0 %1532
    %v1534 = vmul.f32 %v1533, %v661
    %v1535 = vadd.f32 %v1534, 1e-05
    %v1536 = vrsqrt.pop %v1535
    %v1537 = vmul.f32 %v1530, %v1536
    %v1539 = vlaneseq
    %v1540 = vshrl.u32 %v1539, 7
    %v1541 = vsub.s32 0, %v1540
    %v1542 = vrot.slane %v1525, %v1541
    %v1544 = vmul.f32 %v1537, %v1542
    %v1546 = vlaneseq
    %v1547 = vshrl.u32 %v1546, 7
    %v1548 = vsub.s32 0, %v1547
    %v1549 = vrot.slane %v1526, %v1548
    %v1551 = vadd.f32 %v1544, %v1549
    %v1552 = vpack.c.bf16 %v1551, %v1551
    %v1553 = vld [vmem:[%s13] sm:$0xff]
    %v1554 = vld [vmem:[%s13 + $0x8] sm:$0xff]
    %v1555 = vld [vmem:[%s13 + $0x10] sm:$0xff]
    %v1556 = vld [vmem:[%s13 + $0x18] sm:$0xff]
    %v1557 = vld [vmem:[%s13 + $0x20] sm:$0xff]
    %v1558 = vld [vmem:[%s13 + $0x28] sm:$0xff]
    %v1559 = vld [vmem:[%s13 + $0x30] sm:$0xff]
    %v1560 = vld [vmem:[%s13 + $0x38] sm:$0xff]
    %v1561 = vld [vmem:[%s13 + $0x40] sm:$0xff]
    %v1562 = vld [vmem:[%s13 + $0x48] sm:$0xff]
    %v1563 = vld [vmem:[%s13 + $0x50] sm:$0xff]
    %v1564 = vld [vmem:[%s13 + $0x58] sm:$0xff]
    %v1565 = vld [vmem:[%s13 + $0x60] sm:$0xff]
    %v1566 = vld [vmem:[%s13 + $0x68] sm:$0xff]
    %v1567 = vld [vmem:[%s13 + $0x70] sm:$0xff]
    %v1568 = vld [vmem:[%s13 + $0x78] sm:$0xff]
    %v1569 = vld [vmem:[%s13 + $0x80] sm:$0xff]
    %v1570 = vld [vmem:[%s13 + $0x88] sm:$0xff]
    %v1571 = vld [vmem:[%s13 + $0x90] sm:$0xff]
    %v1572 = vld [vmem:[%s13 + $0x98] sm:$0xff]
    %v1573 = vld [vmem:[%s13 + $0xa0] sm:$0xff]
    %v1574 = vld [vmem:[%s13 + $0xa8] sm:$0xff]
    %v1575 = vld [vmem:[%s13 + $0xb0] sm:$0xff]
    %v1576 = vld [vmem:[%s13 + $0xb8] sm:$0xff]
    %v1577 = vld [vmem:[%s13 + $0xc0] sm:$0xff]
    %v1578 = vld [vmem:[%s13 + $0xc8] sm:$0xff]
    %v1579 = vld [vmem:[%s13 + $0xd0] sm:$0xff]
    %v1580 = vld [vmem:[%s13 + $0xd8] sm:$0xff]
    %v1581 = vld [vmem:[%s13 + $0xe0] sm:$0xff]
    %v1582 = vld [vmem:[%s13 + $0xe8] sm:$0xff]
    %v1583 = vld [vmem:[%s13 + $0xf0] sm:$0xff]
    %v1584 = vld [vmem:[%s13 + $0xf8] sm:$0xff]
    %v1585 = vld [vmem:[%s14] sm:$0xf]
    %v1587 = vlaneseq
    %v1588 = vshrl.u32 %v1587, 7
    %v1589 = vsub.s32 0, %v1588
    %v1590 = vrot.slane %v1585, %v1589
    %v1591 = vlaneseq
    %v1592 = vshrl.u32 %v1591, 7
    %v1593 = vsub.s32 1, %v1592
    %v1594 = vrot.slane %v1585, %v1593
    %v1595 = vlaneseq
    %v1596 = vshrl.u32 %v1595, 7
    %v1597 = vsub.s32 2, %v1596
    %v1598 = vrot.slane %v1585, %v1597
    %v1599 = vlaneseq
    %v1600 = vshrl.u32 %v1599, 7
    %v1601 = vsub.s32 3, %v1600
    %v1602 = vrot.slane %v1585, %v1601
    %v1639 = vunpack.c.l.b16 %v1553
    %v1640 = vunpack.c.h.b16 %v1553
    %v1641 = vunpack.c.l.b16 %v1554
    %v1642 = vunpack.c.h.b16 %v1554
    %v1643 = vunpack.c.l.b16 %v1555
    %v1644 = vunpack.c.h.b16 %v1555
    %v1645 = vunpack.c.l.b16 %v1556
    %v1646 = vunpack.c.h.b16 %v1556
    %v1647 = vunpack.c.l.b16 %v1557
    %v1648 = vunpack.c.h.b16 %v1557
    %v1649 = vunpack.c.l.b16 %v1558
    %v1650 = vunpack.c.h.b16 %v1558
    %v1651 = vunpack.c.l.b16 %v1559
    %v1652 = vunpack.c.h.b16 %v1559
    %v1653 = vunpack.c.l.b16 %v1560
    %v1654 = vunpack.c.h.b16 %v1560
    %v1655 = vunpack.c.l.b16 %v1561
    %v1656 = vunpack.c.h.b16 %v1561
    %v1657 = vunpack.c.l.b16 %v1562
    %v1658 = vunpack.c.h.b16 %v1562
    %v1659 = vunpack.c.l.b16 %v1563
    %v1660 = vunpack.c.h.b16 %v1563
    %v1661 = vunpack.c.l.b16 %v1564
    %v1662 = vunpack.c.h.b16 %v1564
    %v1663 = vunpack.c.l.b16 %v1565
    %v1664 = vunpack.c.h.b16 %v1565
    %v1665 = vunpack.c.l.b16 %v1566
    %v1666 = vunpack.c.h.b16 %v1566
    %v1667 = vunpack.c.l.b16 %v1567
    %v1668 = vunpack.c.h.b16 %v1567
    %v1669 = vunpack.c.l.b16 %v1568
    %v1670 = vunpack.c.h.b16 %v1568
    %v1671 = vunpack.c.l.b16 %v1569
    %v1672 = vunpack.c.h.b16 %v1569
    %v1673 = vunpack.c.l.b16 %v1570
    %v1674 = vunpack.c.h.b16 %v1570
    %v1675 = vunpack.c.l.b16 %v1571
    %v1676 = vunpack.c.h.b16 %v1571
    %v1677 = vunpack.c.l.b16 %v1572
    %v1678 = vunpack.c.h.b16 %v1572
    %v1679 = vunpack.c.l.b16 %v1573
    %v1680 = vunpack.c.h.b16 %v1573
    %v1681 = vunpack.c.l.b16 %v1574
    %v1682 = vunpack.c.h.b16 %v1574
    %v1683 = vunpack.c.l.b16 %v1575
    %v1684 = vunpack.c.h.b16 %v1575
    %v1685 = vunpack.c.l.b16 %v1576
    %v1686 = vunpack.c.h.b16 %v1576
    %v1687 = vunpack.c.l.b16 %v1577
    %v1688 = vunpack.c.h.b16 %v1577
    %v1689 = vunpack.c.l.b16 %v1578
    %v1690 = vunpack.c.h.b16 %v1578
    %v1691 = vunpack.c.l.b16 %v1579
    %v1692 = vunpack.c.h.b16 %v1579
    %v1693 = vunpack.c.l.b16 %v1580
    %v1694 = vunpack.c.h.b16 %v1580
    %v1695 = vunpack.c.l.b16 %v1581
    %v1696 = vunpack.c.h.b16 %v1581
    %v1697 = vunpack.c.l.b16 %v1582
    %v1698 = vunpack.c.h.b16 %v1582
    %v1699 = vunpack.c.l.b16 %v1583
    %v1700 = vunpack.c.h.b16 %v1583
    %v1701 = vunpack.c.l.b16 %v1584
    %v1702 = vunpack.c.h.b16 %v1584
    %v1703 = vpack.c.b16 %v1643, %v1639
    %v1704 = vpack.c.b16 %v1644, %v1640
    %v1705 = vpack.c.b16 %v1645, %v1641
    %v1706 = vpack.c.b16 %v1646, %v1642
    %v1707 = vpack.c.b16 %v1651, %v1647
    %v1708 = vpack.c.b16 %v1652, %v1648
    %v1709 = vpack.c.b16 %v1653, %v1649
    %v1710 = vpack.c.b16 %v1654, %v1650
    %v1711 = vpack.c.b16 %v1659, %v1655
    %v1712 = vpack.c.b16 %v1660, %v1656
    %v1713 = vpack.c.b16 %v1661, %v1657
    %v1714 = vpack.c.b16 %v1662, %v1658
    %v1715 = vpack.c.b16 %v1667, %v1663
    %v1716 = vpack.c.b16 %v1668, %v1664
    %v1717 = vpack.c.b16 %v1669, %v1665
    %v1718 = vpack.c.b16 %v1670, %v1666
    %v1719 = vpack.c.b16 %v1675, %v1671
    %v1720 = vpack.c.b16 %v1676, %v1672
    %v1721 = vpack.c.b16 %v1677, %v1673
    %v1722 = vpack.c.b16 %v1678, %v1674
    %v1723 = vpack.c.b16 %v1683, %v1679
    %v1724 = vpack.c.b16 %v1684, %v1680
    %v1725 = vpack.c.b16 %v1685, %v1681
    %v1726 = vpack.c.b16 %v1686, %v1682
    %v1727 = vpack.c.b16 %v1691, %v1687
    %v1728 = vpack.c.b16 %v1692, %v1688
    %v1729 = vpack.c.b16 %v1693, %v1689
    %v1730 = vpack.c.b16 %v1694, %v1690
    %v1731 = vpack.c.b16 %v1699, %v1695
    %v1732 = vpack.c.b16 %v1700, %v1696
    %v1733 = vpack.c.b16 %v1701, %v1697
    %v1734 = vpack.c.b16 %v1702, %v1698
    %1767 = vmatprep.subr.bf16.mxu0 %v1704
    %1768 = vmatpush1.bf16.msra.mxu0 %v1703
    %1769 = vmatprep.subr.bf16.mxu0 %v1708
    %1770 = vmatpush1.bf16.msra.mxu0 %v1707
    %1771 = vmatprep.subr.bf16.mxu0 %v1712
    %1772 = vmatpush1.bf16.msra.mxu0 %v1711
    %1773 = vmatprep.subr.bf16.mxu0 %v1716
    %1774 = vmatpush1.bf16.msra.mxu0 %v1715
    %1775 = vmatprep.subr.bf16.mxu0 %v1720
    %1776 = vmatpush1.bf16.msra.mxu0 %v1719
    %1777 = vmatprep.subr.bf16.mxu0 %v1724
    %1778 = vmatpush1.bf16.msra.mxu0 %v1723
    %1779 = vmatprep.subr.bf16.mxu0 %v1728
    %1780 = vmatpush1.bf16.msra.mxu0 %v1727
    %1781 = vmatprep.subr.bf16.mxu0 %v1732
    %1782 = vmatpush1.bf16.msra.mxu0 %v1731
    %1783 = vmatprep.subr.bf16.mxu0 0
    %1784 = vmatpush1.bf16.msra.mxu0 0
    %1785 = vmatprep.subr.bf16.mxu0 0
    %1786 = vmatpush1.bf16.msra.mxu0 0
    %1787 = vmatprep.subr.bf16.mxu0 0
    %1788 = vmatpush1.bf16.msra.mxu0 0
    %1789 = vmatprep.subr.bf16.mxu0 0
    %1790 = vmatpush1.bf16.msra.mxu0 0
    %1791 = vmatprep.subr.bf16.mxu0 0
    %1792 = vmatpush1.bf16.msra.mxu0 0
    %1793 = vmatprep.subr.bf16.mxu0 0
    %1794 = vmatpush1.bf16.msra.mxu0 0
    %1795 = vmatprep.subr.bf16.mxu0 0
    %1796 = vmatpush1.bf16.msra.mxu0 0
    %1797 = vmatprep.subr.bf16.mxu0 0
    %1798 = vmatpush1.bf16.msra.mxu0 0
    %1799 = vmatprep.mubr.bf16.mxu0 0
    %1800 = vmatmul.mubr.bf16.gmra.mrb[0].mxu0 %v1552
    %v1801 = vpop.f32.mrb[0].mxu0
    %v1802 = vadd.f32 %v1590, %v1801
    %v1803 = vpop.f32.mrb[0].mxu0
    %v1804 = vadd.f32 %v1594, %v1803
    %v1805 = vpop.f32.mrb[0].mxu0
    %v1806 = vpop.f32.mrb[0].mxu0
    %1807 = vdwg.mxu0
    %1808 = vmatprep.subr.bf16.mxu0 %v1706
    %1809 = vmatpush1.bf16.msra.mxu0 %v1705
    %1810 = vmatprep.subr.bf16.mxu0 %v1710
    %1811 = vmatpush1.bf16.msra.mxu0 %v1709
    %1812 = vmatprep.subr.bf16.mxu0 %v1714
    %1813 = vmatpush1.bf16.msra.mxu0 %v1713
    %1814 = vmatprep.subr.bf16.mxu0 %v1718
    %1815 = vmatpush1.bf16.msra.mxu0 %v1717
    %1816 = vmatprep.subr.bf16.mxu0 %v1722
    %1817 = vmatpush1.bf16.msra.mxu0 %v1721
    %1818 = vmatprep.subr.bf16.mxu0 %v1726
    %1819 = vmatpush1.bf16.msra.mxu0 %v1725
    %1820 = vmatprep.subr.bf16.mxu0 %v1730
    %1821 = vmatpush1.bf16.msra.mxu0 %v1729
    %1822 = vmatprep.subr.bf16.mxu0 %v1734
    %1823 = vmatpush1.bf16.msra.mxu0 %v1733
    %1824 = vmatprep.subr.bf16.mxu0 0
    %1825 = vmatpush1.bf16.msra.mxu0 0
    %1826 = vmatprep.subr.bf16.mxu0 0
    %1827 = vmatpush1.bf16.msra.mxu0 0
    %1828 = vmatprep.subr.bf16.mxu0 0
    %1829 = vmatpush1.bf16.msra.mxu0 0
    %1830 = vmatprep.subr.bf16.mxu0 0
    %1831 = vmatpush1.bf16.msra.mxu0 0
    %1832 = vmatprep.subr.bf16.mxu0 0
    %1833 = vmatpush1.bf16.msra.mxu0 0
    %1834 = vmatprep.subr.bf16.mxu0 0
    %1835 = vmatpush1.bf16.msra.mxu0 0
    %1836 = vmatprep.subr.bf16.mxu0 0
    %1837 = vmatpush1.bf16.msra.mxu0 0
    %1838 = vmatprep.subr.bf16.mxu0 0
    %1839 = vmatpush1.bf16.msra.mxu0 0
    %1840 = vmatprep.mubr.bf16.mxu0 0
    %1841 = vmatmul.mubr.bf16.gmra.mrb[0].mxu0 %v1552
    %v1842 = vpop.f32.mrb[0].mxu0
    %v1843 = vadd.f32 %v1598, %v1842
    %v1844 = vpop.f32.mrb[0].mxu0
    %v1845 = vadd.f32 %v1602, %v1844
    %v1846 = vpop.f32.mrb[0].mxu0
    %v1847 = vpop.f32.mrb[0].mxu0
    %1848 = vdwg.mxu0
    %v1849 = vmul.f32 %v1802, 0.5
    %v1850 = vmul.f32 %v1804, 0.5
    %v1851 = vmul.f32 %v1843, 0.5
    %v1852 = vmul.f32 %v1845, 0.5
    %v1853 = vmul.f32 %v1802, %v1802
    %v1854 = vmul.f32 %v1804, %v1804
    %v1855 = vmul.f32 %v1843, %v1843
    %v1856 = vmul.f32 %v1845, %v1845
    %v1857 = vmul.f32 %v1802, %v1853
    %v1858 = vmul.f32 %v1804, %v1854
    %v1859 = vmul.f32 %v1843, %v1855
    %v1860 = vmul.f32 %v1845, %v1856
    %v1861 = vmul.f32 %v1857, 0.044715
    %v1862 = vmul.f32 %v1858, 0.044715
    %v1863 = vmul.f32 %v1859, 0.044715
    %v1864 = vmul.f32 %v1860, 0.044715
    %v1865 = vadd.f32 %v1802, %v1861
    %v1866 = vadd.f32 %v1804, %v1862
    %v1867 = vadd.f32 %v1843, %v1863
    %v1868 = vadd.f32 %v1845, %v1864
    %v1869 = vmul.f32 %v1865, 0.7978845
    %v1870 = vmul.f32 %v1866, 0.7978845
    %v1871 = vmul.f32 %v1867, 0.7978845
    %v1872 = vmul.f32 %v1868, 0.7978845
    %v1873 = vtanh.pop %v1869
    %v1874 = vtanh.pop %v1870
    %v1875 = vtanh.pop %v1871
    %v1876 = vtanh.pop %v1872
    %v1877 = vadd.f32 %v1873, 1.0
    %v1878 = vadd.f32 %v1874, 1.0
    %v1879 = vadd.f32 %v1875, 1.0
    %v1880 = vadd.f32 %v1876, 1.0
    %v1881 = vmul.f32 %v1849, %v1877
    %v1882 = vmul.f32 %v1850, %v1878
    %v1883 = vmul.f32 %v1851, %v1879
    %v1884 = vmul.f32 %v1852, %v1880
    %v1885 = vpack.c.bf16 %v1881, %v1881
    %v1886 = vpack.c.bf16 %v1882, %v1882
    %v1887 = vpack.c.bf16 %v1883, %v1883
    %v1888 = vpack.c.bf16 %v1884, %v1884
    %v1889 = vld [vmem:[%s15] sm:$0xf]
    %v1890 = vld [vmem:[%s15 + $0x4] sm:$0xf]
    %v1891 = vld [vmem:[%s15 + $0x8] sm:$0xf]
    %v1892 = vld [vmem:[%s15 + $0xc] sm:$0xf]
    %v1893 = vld [vmem:[%s15 + $0x10] sm:$0xf]
    %v1894 = vld [vmem:[%s15 + $0x14] sm:$0xf]
    %v1895 = vld [vmem:[%s15 + $0x18] sm:$0xf]
    %v1896 = vld [vmem:[%s15 + $0x1c] sm:$0xf]
    %v1897 = vld [vmem:[%s15 + $0x20] sm:$0xf]
    %v1898 = vld [vmem:[%s15 + $0x24] sm:$0xf]
    %v1899 = vld [vmem:[%s15 + $0x28] sm:$0xf]
    %v1900 = vld [vmem:[%s15 + $0x2c] sm:$0xf]
    %v1901 = vld [vmem:[%s15 + $0x30] sm:$0xf]
    %v1902 = vld [vmem:[%s15 + $0x34] sm:$0xf]
    %v1903 = vld [vmem:[%s15 + $0x38] sm:$0xf]
    %v1904 = vld [vmem:[%s15 + $0x3c] sm:$0xf]
    %v1905 = vld [vmem:[%s15 + $0x40] sm:$0xf]
    %v1906 = vld [vmem:[%s15 + $0x44] sm:$0xf]
    %v1907 = vld [vmem:[%s15 + $0x48] sm:$0xf]
    %v1908 = vld [vmem:[%s15 + $0x4c] sm:$0xf]
    %v1909 = vld [vmem:[%s15 + $0x50] sm:$0xf]
    %v1910 = vld [vmem:[%s15 + $0x54] sm:$0xf]
    %v1911 = vld [vmem:[%s15 + $0x58] sm:$0xf]
    %v1912 = vld [vmem:[%s15 + $0x5c] sm:$0xf]
    %v1913 = vld [vmem:[%s15 + $0x60] sm:$0xf]
    %v1914 = vld [vmem:[%s15 + $0x64] sm:$0xf]
    %v1915 = vld [vmem:[%s15 + $0x68] sm:$0xf]
    %v1916 = vld [vmem:[%s15 + $0x6c] sm:$0xf]
    %v1917 = vld [vmem:[%s15 + $0x70] sm:$0xf]
    %v1918 = vld [vmem:[%s15 + $0x74] sm:$0xf]
    %v1919 = vld [vmem:[%s15 + $0x78] sm:$0xf]
    %v1920 = vld [vmem:[%s15 + $0x7c] sm:$0xf]
    %v1921 = vld [vmem:[%s15 + $0x80] sm:$0xf]
    %v1922 = vld [vmem:[%s15 + $0x84] sm:$0xf]
    %v1923 = vld [vmem:[%s15 + $0x88] sm:$0xf]
    %v1924 = vld [vmem:[%s15 + $0x8c] sm:$0xf]
    %v1925 = vld [vmem:[%s15 + $0x90] sm:$0xf]
    %v1926 = vld [vmem:[%s15 + $0x94] sm:$0xf]
    %v1927 = vld [vmem:[%s15 + $0x98] sm:$0xf]
    %v1928 = vld [vmem:[%s15 + $0x9c] sm:$0xf]
    %v1929 = vld [vmem:[%s15 + $0xa0] sm:$0xf]
    %v1930 = vld [vmem:[%s15 + $0xa4] sm:$0xf]
    %v1931 = vld [vmem:[%s15 + $0xa8] sm:$0xf]
    %v1932 = vld [vmem:[%s15 + $0xac] sm:$0xf]
    %v1933 = vld [vmem:[%s15 + $0xb0] sm:$0xf]
    %v1934 = vld [vmem:[%s15 + $0xb4] sm:$0xf]
    %v1935 = vld [vmem:[%s15 + $0xb8] sm:$0xf]
    %v1936 = vld [vmem:[%s15 + $0xbc] sm:$0xf]
    %v1937 = vld [vmem:[%s15 + $0xc0] sm:$0xf]
    %v1938 = vld [vmem:[%s15 + $0xc4] sm:$0xf]
    %v1939 = vld [vmem:[%s15 + $0xc8] sm:$0xf]
    %v1940 = vld [vmem:[%s15 + $0xcc] sm:$0xf]
    %v1941 = vld [vmem:[%s15 + $0xd0] sm:$0xf]
    %v1942 = vld [vmem:[%s15 + $0xd4] sm:$0xf]
    %v1943 = vld [vmem:[%s15 + $0xd8] sm:$0xf]
    %v1944 = vld [vmem:[%s15 + $0xdc] sm:$0xf]
    %v1945 = vld [vmem:[%s15 + $0xe0] sm:$0xf]
    %v1946 = vld [vmem:[%s15 + $0xe4] sm:$0xf]
    %v1947 = vld [vmem:[%s15 + $0xe8] sm:$0xf]
    %v1948 = vld [vmem:[%s15 + $0xec] sm:$0xf]
    %v1949 = vld [vmem:[%s15 + $0xf0] sm:$0xf]
    %v1950 = vld [vmem:[%s15 + $0xf4] sm:$0xf]
    %v1951 = vld [vmem:[%s15 + $0xf8] sm:$0xf]
    %v1952 = vld [vmem:[%s15 + $0xfc] sm:$0xf]
    %v2017 = vunpack.c.l.b16 %v1889
    %v2018 = vunpack.c.l.b16 %v1890
    %v2019 = vunpack.c.l.b16 %v1891
    %v2020 = vunpack.c.l.b16 %v1892
    %v2021 = vunpack.c.l.b16 %v1893
    %v2022 = vunpack.c.l.b16 %v1894
    %v2023 = vunpack.c.l.b16 %v1895
    %v2024 = vunpack.c.l.b16 %v1896
    %v2025 = vunpack.c.l.b16 %v1897
    %v2026 = vunpack.c.l.b16 %v1898
    %v2027 = vunpack.c.l.b16 %v1899
    %v2028 = vunpack.c.l.b16 %v1900
    %v2029 = vunpack.c.l.b16 %v1901
    %v2030 = vunpack.c.l.b16 %v1902
    %v2031 = vunpack.c.l.b16 %v1903
    %v2032 = vunpack.c.l.b16 %v1904
    %v2033 = vunpack.c.l.b16 %v1905
    %v2034 = vunpack.c.l.b16 %v1906
    %v2035 = vunpack.c.l.b16 %v1907
    %v2036 = vunpack.c.l.b16 %v1908
    %v2037 = vunpack.c.l.b16 %v1909
    %v2038 = vunpack.c.l.b16 %v1910
    %v2039 = vunpack.c.l.b16 %v1911
    %v2040 = vunpack.c.l.b16 %v1912
    %v2041 = vunpack.c.l.b16 %v1913
    %v2042 = vunpack.c.l.b16 %v1914
    %v2043 = vunpack.c.l.b16 %v1915
    %v2044 = vunpack.c.l.b16 %v1916
    %v2045 = vunpack.c.l.b16 %v1917
    %v2046 = vunpack.c.l.b16 %v1918
    %v2047 = vunpack.c.l.b16 %v1919
    %v2048 = vunpack.c.l.b16 %v1920
    %v2049 = vunpack.c.l.b16 %v1921
    %v2050 = vunpack.c.l.b16 %v1922
    %v2051 = vunpack.c.l.b16 %v1923
    %v2052 = vunpack.c.l.b16 %v1924
    %v2053 = vunpack.c.l.b16 %v1925
    %v2054 = vunpack.c.l.b16 %v1926
    %v2055 = vunpack.c.l.b16 %v1927
    %v2056 = vunpack.c.l.b16 %v1928
    %v2057 = vunpack.c.l.b16 %v1929
    %v2058 = vunpack.c.l.b16 %v1930
    %v2059 = vunpack.c.l.b16 %v1931
    %v2060 = vunpack.c.l.b16 %v1932
    %v2061 = vunpack.c.l.b16 %v1933
    %v2062 = vunpack.c.l.b16 %v1934
    %v2063 = vunpack.c.l.b16 %v1935
    %v2064 = vunpack.c.l.b16 %v1936
    %v2065 = vunpack.c.l.b16 %v1937
    %v2066 = vunpack.c.l.b16 %v1938
    %v2067 = vunpack.c.l.b16 %v1939
    %v2068 = vunpack.c.l.b16 %v1940
    %v2069 = vunpack.c.l.b16 %v1941
    %v2070 = vunpack.c.l.b16 %v1942
    %v2071 = vunpack.c.l.b16 %v1943
    %v2072 = vunpack.c.l.b16 %v1944
    %v2073 = vunpack.c.l.b16 %v1945
    %v2074 = vunpack.c.l.b16 %v1946
    %v2075 = vunpack.c.l.b16 %v1947
    %v2076 = vunpack.c.l.b16 %v1948
    %v2077 = vunpack.c.l.b16 %v1949
    %v2078 = vunpack.c.l.b16 %v1950
    %v2079 = vunpack.c.l.b16 %v1951
    %v2080 = vunpack.c.l.b16 %v1952
    %v2081 = vpack.c.b16 %v2018, %v2017
    %v2082 = vpack.c.b16 %v2020, %v2019
    %v2083 = vpack.c.b16 %v2022, %v2021
    %v2084 = vpack.c.b16 %v2024, %v2023
    %v2085 = vpack.c.b16 %v2026, %v2025
    %v2086 = vpack.c.b16 %v2028, %v2027
    %v2087 = vpack.c.b16 %v2030, %v2029
    %v2088 = vpack.c.b16 %v2032, %v2031
    %v2089 = vpack.c.b16 %v2034, %v2033
    %v2090 = vpack.c.b16 %v2036, %v2035
    %v2091 = vpack.c.b16 %v2038, %v2037
    %v2092 = vpack.c.b16 %v2040, %v2039
    %v2093 = vpack.c.b16 %v2042, %v2041
    %v2094 = vpack.c.b16 %v2044, %v2043
    %v2095 = vpack.c.b16 %v2046, %v2045
    %v2096 = vpack.c.b16 %v2048, %v2047
    %v2097 = vpack.c.b16 %v2050, %v2049
    %v2098 = vpack.c.b16 %v2052, %v2051
    %v2099 = vpack.c.b16 %v2054, %v2053
    %v2100 = vpack.c.b16 %v2056, %v2055
    %v2101 = vpack.c.b16 %v2058, %v2057
    %v2102 = vpack.c.b16 %v2060, %v2059
    %v2103 = vpack.c.b16 %v2062, %v2061
    %v2104 = vpack.c.b16 %v2064, %v2063
    %v2105 = vpack.c.b16 %v2066, %v2065
    %v2106 = vpack.c.b16 %v2068, %v2067
    %v2107 = vpack.c.b16 %v2070, %v2069
    %v2108 = vpack.c.b16 %v2072, %v2071
    %v2109 = vpack.c.b16 %v2074, %v2073
    %v2110 = vpack.c.b16 %v2076, %v2075
    %v2111 = vpack.c.b16 %v2078, %v2077
    %v2112 = vpack.c.b16 %v2080, %v2079
    %2145 = vmatprep.subr.bf16.mxu0 0
    %2146 = vmatpush1.bf16.msra.mxu0 %v2081
    %2147 = vmatprep.subr.bf16.mxu0 0
    %2148 = vmatpush1.bf16.msra.mxu0 %v2082
    %2149 = vmatprep.subr.bf16.mxu0 0
    %2150 = vmatpush1.bf16.msra.mxu0 %v2083
    %2151 = vmatprep.subr.bf16.mxu0 0
    %2152 = vmatpush1.bf16.msra.mxu0 %v2084
    %2153 = vmatprep.subr.bf16.mxu0 0
    %2154 = vmatpush1.bf16.msra.mxu0 %v2085
    %2155 = vmatprep.subr.bf16.mxu0 0
    %2156 = vmatpush1.bf16.msra.mxu0 %v2086
    %2157 = vmatprep.subr.bf16.mxu0 0
    %2158 = vmatpush1.bf16.msra.mxu0 %v2087
    %2159 = vmatprep.subr.bf16.mxu0 0
    %2160 = vmatpush1.bf16.msra.mxu0 %v2088
    %2161 = vmatprep.subr.bf16.mxu0 0
    %2162 = vmatpush1.bf16.msra.mxu0 %v2089
    %2163 = vmatprep.subr.bf16.mxu0 0
    %2164 = vmatpush1.bf16.msra.mxu0 %v2090
    %2165 = vmatprep.subr.bf16.mxu0 0
    %2166 = vmatpush1.bf16.msra.mxu0 %v2091
    %2167 = vmatprep.subr.bf16.mxu0 0
    %2168 = vmatpush1.bf16.msra.mxu0 %v2092
    %2169 = vmatprep.subr.bf16.mxu0 0
    %2170 = vmatpush1.bf16.msra.mxu0 %v2093
    %2171 = vmatprep.subr.bf16.mxu0 0
    %2172 = vmatpush1.bf16.msra.mxu0 %v2094
    %2173 = vmatprep.subr.bf16.mxu0 0
    %2174 = vmatpush1.bf16.msra.mxu0 %v2095
    %2175 = vmatprep.subr.bf16.mxu0 0
    %2176 = vmatpush1.bf16.msra.mxu0 %v2096
    %2177 = vmatprep.mubr.bf16.mxu0 %v1886
    %2178 = vmatmul.mubr.bf16.gmra.mrb[0].mxu0 %v1885
    %v2179 = vpop.f32.mrb[0].mxu0
    %v2180 = vadd.f32 0.0, %v2179
    %v2181 = vpop.f32.mrb[0].mxu0
    %v2182 = vpop.f32.mrb[0].mxu0
    %v2183 = vpop.f32.mrb[0].mxu0
    %2184 = vdwg.mxu0
    %2185 = vmatprep.subr.bf16.mxu0 0
    %2186 = vmatpush1.bf16.msra.mxu0 %v2097
    %2187 = vmatprep.subr.bf16.mxu0 0
    %2188 = vmatpush1.bf16.msra.mxu0 %v2098
    %2189 = vmatprep.subr.bf16.mxu0 0
    %2190 = vmatpush1.bf16.msra.mxu0 %v2099
    %2191 = vmatprep.subr.bf16.mxu0 0
    %2192 = vmatpush1.bf16.msra.mxu0 %v2100
    %2193 = vmatprep.subr.bf16.mxu0 0
    %2194 = vmatpush1.bf16.msra.mxu0 %v2101
    %2195 = vmatprep.subr.bf16.mxu0 0
    %2196 = vmatpush1.bf16.msra.mxu0 %v2102
    %2197 = vmatprep.subr.bf16.mxu0 0
    %2198 = vmatpush1.bf16.msra.mxu0 %v2103
    %2199 = vmatprep.subr.bf16.mxu0 0
    %2200 = vmatpush1.bf16.msra.mxu0 %v2104
    %2201 = vmatprep.subr.bf16.mxu0 0
    %2202 = vmatpush1.bf16.msra.mxu0 %v2105
    %2203 = vmatprep.subr.bf16.mxu0 0
    %2204 = vmatpush1.bf16.msra.mxu0 %v2106
    %2205 = vmatprep.subr.bf16.mxu0 0
    %2206 = vmatpush1.bf16.msra.mxu0 %v2107
    %2207 = vmatprep.subr.bf16.mxu0 0
    %2208 = vmatpush1.bf16.msra.mxu0 %v2108
    %2209 = vmatprep.subr.bf16.mxu0 0
    %2210 = vmatpush1.bf16.msra.mxu0 %v2109
    %2211 = vmatprep.subr.bf16.mxu0 0
    %2212 = vmatpush1.bf16.msra.mxu0 %v2110
    %2213 = vmatprep.subr.bf16.mxu0 0
    %2214 = vmatpush1.bf16.msra.mxu0 %v2111
    %2215 = vmatprep.subr.bf16.mxu0 0
    %2216 = vmatpush1.bf16.msra.mxu0 %v2112
    %2217 = vmatprep.mubr.bf16.mxu0 %v1888
    %2218 = vmatmul.mubr.bf16.gmra.mrb[0].mxu0 %v1887
    %v2219 = vpop.f32.mrb[0].mxu0
    %v2220 = vadd.f32 %v2180, %v2219
    %v2221 = vpop.f32.mrb[0].mxu0
    %v2222 = vpop.f32.mrb[0].mxu0
    %v2223 = vpop.f32.mrb[0].mxu0
    %2224 = vdwg.mxu0
    %v2225 = vadd.f32 %v1524, %v2220
    %v2226 = vld [vmem:[%s16] sm:$0x1]
    %v2228 = vlaneseq
    %v2229 = vshrl.u32 %v2228, 7
    %v2230 = vsub.s32 0, %v2229
    %v2231 = vrot.slane %v2226, %v2230
    %v2233 = vadd.f32 %v2225, %v2231
    %s2234 = scalar_lea.vmem %s5, 1
    %v2235 = vld [vmem:[%s2234] sm:$0x1]
    %s2236 = scalar_lea.vmem %s6, 1
    %v2237 = vld [vmem:[%s2236] sm:$0x1]
    %2238 = vadd.xlane.f32.xlu0 %v2233
    %v2239 = vpop.xlane.xlu0 %2238
    %v2240 = vmul.f32 %v2239, %v661
    %v2241 = vsub.f32 %v2233, %v2240
    %v2242 = vmul.f32 %v2241, %v2241
    %2243 = vadd.xlane.f32.xlu0 %v2242
    %v2244 = vpop.xlane.xlu0 %2243
    %v2245 = vmul.f32 %v2244, %v661
    %v2246 = vadd.f32 %v2245, 1e-05
    %v2247 = vrsqrt.pop %v2246
    %v2248 = vmul.f32 %v2241, %v2247
    %v2250 = vlaneseq
    %v2251 = vshrl.u32 %v2250, 7
    %v2252 = vsub.s32 0, %v2251
    %v2253 = vrot.slane %v2235, %v2252
    %v2255 = vmul.f32 %v2248, %v2253
    %v2257 = vlaneseq
    %v2258 = vshrl.u32 %v2257, 7
    %v2259 = vsub.s32 0, %v2258
    %v2260 = vrot.slane %v2237, %v2259
    %v2262 = vadd.f32 %v2255, %v2260
    %v2263 = vpack.c.bf16 %v2262, %v2262
    %s2264 = scalar_lea.vmem [#allocation5], 192
    %v2265 = vld [vmem:[%s2264] sm:$0xff]
    %v2266 = vld [vmem:[%s2264 + $0x8] sm:$0xf]
    %v2267 = vld [vmem:[%s2264 + $0xc] sm:$0xff]
    %v2268 = vld [vmem:[%s2264 + $0x14] sm:$0xf]
    %v2269 = vld [vmem:[%s2264 + $0x18] sm:$0xff]
    %v2270 = vld [vmem:[%s2264 + $0x20] sm:$0xf]
    %v2271 = vld [vmem:[%s2264 + $0x24] sm:$0xff]
    %v2272 = vld [vmem:[%s2264 + $0x2c] sm:$0xf]
    %v2273 = vld [vmem:[%s2264 + $0x30] sm:$0xff]
    %v2274 = vld [vmem:[%s2264 + $0x38] sm:$0xf]
    %v2275 = vld [vmem:[%s2264 + $0x3c] sm:$0xff]
    %v2276 = vld [vmem:[%s2264 + $0x44] sm:$0xf]
    %v2277 = vld [vmem:[%s2264 + $0x48] sm:$0xff]
    %v2278 = vld [vmem:[%s2264 + $0x50] sm:$0xf]
    %v2279 = vld [vmem:[%s2264 + $0x54] sm:$0xff]
    %v2280 = vld [vmem:[%s2264 + $0x5c] sm:$0xf]
    %v2281 = vld [vmem:[%s2264 + $0x60] sm:$0xff]
    %v2282 = vld [vmem:[%s2264 + $0x68] sm:$0xf]
    %v2283 = vld [vmem:[%s2264 + $0x6c] sm:$0xff]
    %v2284 = vld [vmem:[%s2264 + $0x74] sm:$0xf]
    %v2285 = vld [vmem:[%s2264 + $0x78] sm:$0xff]
    %v2286 = vld [vmem:[%s2264 + $0x80] sm:$0xf]
    %v2287 = vld [vmem:[%s2264 + $0x84] sm:$0xff]
    %v2288 = vld [vmem:[%s2264 + $0x8c] sm:$0xf]
    %v2289 = vld [vmem:[%s2264 + $0x90] sm:$0xff]
    %v2290 = vld [vmem:[%s2264 + $0x98] sm:$0xf]
    %v2291 = vld [vmem:[%s2264 + $0x9c] sm:$0xff]
    %v2292 = vld [vmem:[%s2264 + $0xa4] sm:$0xf]
    %v2293 = vld [vmem:[%s2264 + $0xa8] sm:$0xff]
    %v2294 = vld [vmem:[%s2264 + $0xb0] sm:$0xf]
    %v2295 = vld [vmem:[%s2264 + $0xb4] sm:$0xff]
    %v2296 = vld [vmem:[%s2264 + $0xbc] sm:$0xf]
    %s2297 = scalar_lea.vmem %s8, 3
    %v2298 = vld [vmem:[%s2297] sm:$0x7]
    %v2300 = vlaneseq
    %v2301 = vshrl.u32 %v2300, 7
    %v2302 = vsub.s32 0, %v2301
    %v2303 = vrot.slane %v2298, %v2302
    %v2304 = vlaneseq
    %v2305 = vshrl.u32 %v2304, 7
    %v2306 = vsub.s32 1, %v2305
    %v2307 = vrot.slane %v2298, %v2306
    %v2308 = vlaneseq
    %v2309 = vshrl.u32 %v2308, 7
    %v2310 = vsub.s32 2, %v2309
    %v2311 = vrot.slane %v2298, %v2310
    %v2347 = vunpack.c.l.b16 %v2265
    %v2348 = vunpack.c.h.b16 %v2265
    %v2349 = vunpack.c.l.b16 %v2266
    %v2350 = vunpack.c.l.b16 %v2267
    %v2351 = vunpack.c.h.b16 %v2267
    %v2352 = vunpack.c.l.b16 %v2268
    %v2353 = vunpack.c.l.b16 %v2269
    %v2354 = vunpack.c.h.b16 %v2269
    %v2355 = vunpack.c.l.b16 %v2270
    %v2356 = vunpack.c.l.b16 %v2271
    %v2357 = vunpack.c.h.b16 %v2271
    %v2358 = vunpack.c.l.b16 %v2272
    %v2359 = vunpack.c.l.b16 %v2273
    %v2360 = vunpack.c.h.b16 %v2273
    %v2361 = vunpack.c.l.b16 %v2274
    %v2362 = vunpack.c.l.b16 %v2275
    %v2363 = vunpack.c.h.b16 %v2275
    %v2364 = vunpack.c.l.b16 %v2276
    %v2365 = vunpack.c.l.b16 %v2277
    %v2366 = vunpack.c.h.b16 %v2277
    %v2367 = vunpack.c.l.b16 %v2278
    %v2368 = vunpack.c.l.b16 %v2279
    %v2369 = vunpack.c.h.b16 %v2279
    %v2370 = vunpack.c.l.b16 %v2280
    %v2371 = vunpack.c.l.b16 %v2281
    %v2372 = vunpack.c.h.b16 %v2281
    %v2373 = vunpack.c.l.b16 %v2282
    %v2374 = vunpack.c.l.b16 %v2283
    %v2375 = vunpack.c.h.b16 %v2283
    %v2376 = vunpack.c.l.b16 %v2284
    %v2377 = vunpack.c.l.b16 %v2285
    %v2378 = vunpack.c.h.b16 %v2285
    %v2379 = vunpack.c.l.b16 %v2286
    %v2380 = vunpack.c.l.b16 %v2287
    %v2381 = vunpack.c.h.b16 %v2287
    %v2382 = vunpack.c.l.b16 %v2288
    %v2383 = vunpack.c.l.b16 %v2289
    %v2384 = vunpack.c.h.b16 %v2289
    %v2385 = vunpack.c.l.b16 %v2290
    %v2386 = vunpack.c.l.b16 %v2291
    %v2387 = vunpack.c.h.b16 %v2291
    %v2388 = vunpack.c.l.b16 %v2292
    %v2389 = vunpack.c.l.b16 %v2293
    %v2390 = vunpack.c.h.b16 %v2293
    %v2391 = vunpack.c.l.b16 %v2294
    %v2392 = vunpack.c.l.b16 %v2295
    %v2393 = vunpack.c.h.b16 %v2295
    %v2394 = vunpack.c.l.b16 %v2296
    %v2395 = vpack.c.b16 %v2350, %v2347
    %v2396 = vpack.c.b16 %v2351, %v2348
    %v2397 = vpack.c.b16 %v2352, %v2349
    %v2398 = vpack.c.b16 %v2356, %v2353
    %v2399 = vpack.c.b16 %v2357, %v2354
    %v2400 = vpack.c.b16 %v2358, %v2355
    %v2401 = vpack.c.b16 %v2362, %v2359
    %v2402 = vpack.c.b16 %v2363, %v2360
    %v2403 = vpack.c.b16 %v2364, %v2361
    %v2404 = vpack.c.b16 %v2368, %v2365
    %v2405 = vpack.c.b16 %v2369, %v2366
    %v2406 = vpack.c.b16 %v2370, %v2367
    %v2407 = vpack.c.b16 %v2374, %v2371
    %v2408 = vpack.c.b16 %v2375, %v2372
    %v2409 = vpack.c.b16 %v2376, %v2373
    %v2410 = vpack.c.b16 %v2380, %v2377
    %v2411 = vpack.c.b16 %v2381, %v2378
    %v2412 = vpack.c.b16 %v2382, %v2379
    %v2413 = vpack.c.b16 %v2386, %v2383
    %v2414 = vpack.c.b16 %v2387, %v2384
    %v2415 = vpack.c.b16 %v2388, %v2385
    %v2416 = vpack.c.b16 %v2392, %v2389
    %v2417 = vpack.c.b16 %v2393, %v2390
    %v2418 = vpack.c.b16 %v2394, %v2391
    %2443 = vmatprep.subr.bf16.mxu0 %v2396
    %2444 = vmatpush1.bf16.msra.mxu0 %v2395
    %2445 = vmatprep.subr.bf16.mxu0 %v2399
    %2446 = vmatpush1.bf16.msra.mxu0 %v2398
    %2447 = vmatprep.subr.bf16.mxu0 %v2402
    %2448 = vmatpush1.bf16.msra.mxu0 %v2401
    %2449 = vmatprep.subr.bf16.mxu0 %v2405
    %2450 = vmatpush1.bf16.msra.mxu0 %v2404
    %2451 = vmatprep.subr.bf16.mxu0 %v2408
    %2452 = vmatpush1.bf16.msra.mxu0 %v2407
    %2453 = vmatprep.subr.bf16.mxu0 %v2411
    %2454 = vmatpush1.bf16.msra.mxu0 %v2410
    %2455 = vmatprep.subr.bf16.mxu0 %v2414
    %2456 = vmatpush1.bf16.msra.mxu0 %v2413
    %2457 = vmatprep.subr.bf16.mxu0 %v2417
    %2458 = vmatpush1.bf16.msra.mxu0 %v2416
    %2459 = vmatprep.subr.bf16.mxu0 0
    %2460 = vmatpush1.bf16.msra.mxu0 0
    %2461 = vmatprep.subr.bf16.mxu0 0
    %2462 = vmatpush1.bf16.msra.mxu0 0
    %2463 = vmatprep.subr.bf16.mxu0 0
    %2464 = vmatpush1.bf16.msra.mxu0 0
    %2465 = vmatprep.subr.bf16.mxu0 0
    %2466 = vmatpush1.bf16.msra.mxu0 0
    %2467 = vmatprep.subr.bf16.mxu0 0
    %2468 = vmatpush1.bf16.msra.mxu0 0
    %2469 = vmatprep.subr.bf16.mxu0 0
    %2470 = vmatpush1.bf16.msra.mxu0 0
    %2471 = vmatprep.subr.bf16.mxu0 0
    %2472 = vmatpush1.bf16.msra.mxu0 0
    %2473 = vmatprep.subr.bf16.mxu0 0
    %2474 = vmatpush1.bf16.msra.mxu0 0
    %2475 = vmatprep.mubr.bf16.mxu0 0
    %2476 = vmatmul.mubr.bf16.gmra.mrb[0].mxu0 %v2263
    %v2477 = vpop.f32.mrb[0].mxu0
    %v2478 = vadd.f32 %v2303, %v2477
    %v2479 = vpop.f32.mrb[0].mxu0
    %v2480 = vadd.f32 %v2307, %v2479
    %v2481 = vpop.f32.mrb[0].mxu0
    %v2482 = vpop.f32.mrb[0].mxu0
    %2483 = vdwg.mxu0
    %2484 = vmatprep.subr.bf16.mxu0 0
    %2485 = vmatpush1.bf16.msra.mxu0 %v2397
    %2486 = vmatprep.subr.bf16.mxu0 0
    %2487 = vmatpush1.bf16.msra.mxu0 %v2400
    %2488 = vmatprep.subr.bf16.mxu0 0
    %2489 = vmatpush1.bf16.msra.mxu0 %v2403
    %2490 = vmatprep.subr.bf16.mxu0 0
    %2491 = vmatpush1.bf16.msra.mxu0 %v2406
    %2492 = vmatprep.subr.bf16.mxu0 0
    %2493 = vmatpush1.bf16.msra.mxu0 %v2409
    %2494 = vmatprep.subr.bf16.mxu0 0
    %2495 = vmatpush1.bf16.msra.mxu0 %v2412
    %2496 = vmatprep.subr.bf16.mxu0 0
    %2497 = vmatpush1.bf16.msra.mxu0 %v2415
    %2498 = vmatprep.subr.bf16.mxu0 0
    %2499 = vmatpush1.bf16.msra.mxu0 %v2418
    %2500 = vmatprep.subr.bf16.mxu0 0
    %2501 = vmatpush1.bf16.msra.mxu0 0
    %2502 = vmatprep.subr.bf16.mxu0 0
    %2503 = vmatpush1.bf16.msra.mxu0 0
    %2504 = vmatprep.subr.bf16.mxu0 0
    %2505 = vmatpush1.bf16.msra.mxu0 0
    %2506 = vmatprep.subr.bf16.mxu0 0
    %2507 = vmatpush1.bf16.msra.mxu0 0
    %2508 = vmatprep.subr.bf16.mxu0 0
    %2509 = vmatpush1.bf16.msra.mxu0 0
    %2510 = vmatprep.subr.bf16.mxu0 0
    %2511 = vmatpush1.bf16.msra.mxu0 0
    %2512 = vmatprep.subr.bf16.mxu0 0
    %2513 = vmatpush1.bf16.msra.mxu0 0
    %2514 = vmatprep.subr.bf16.mxu0 0
    %2515 = vmatpush1.bf16.msra.mxu0 0
    %2516 = vmatprep.mubr.bf16.mxu0 0
    %2517 = vmatmul.mubr.bf16.gmra.mrb[0].mxu0 %v2263
    %v2518 = vpop.f32.mrb[0].mxu0
    %v2519 = vadd.f32 %v2311, %v2518
    %v2520 = vpop.f32.mrb[0].mxu0
    %v2521 = vpop.f32.mrb[0].mxu0
    %v2522 = vpop.f32.mrb[0].mxu0
    %2523 = vdwg.mxu0
    %v2524 = vpack.c.bf16 %v2478, %v2478
    %v2525 = vpack.c.bf16 %v2480, %v2480
    %v2526 = vpack.c.bf16 %v2519, %v2519
    %2528 = vrot.lane.b32.xlu0 %v2524, 96
    %v2529 = vpop.permute.xlu0 %2528
    %2530 = vrot.lane.b32.xlu0 %v2524, 64
    %v2531 = vpop.permute.xlu0 %2530
    %2532 = vrot.lane.b32.xlu0 %v2524, 32
    %v2533 = vpop.permute.xlu0 %2532
    %2535 = vrot.lane.b32.xlu0 %v2525, 96
    %v2536 = vpop.permute.xlu0 %2535
    %2537 = vrot.lane.b32.xlu0 %v2525, 64
    %v2538 = vpop.permute.xlu0 %2537
    %2539 = vrot.lane.b32.xlu0 %v2525, 32
    %v2540 = vpop.permute.xlu0 %2539
    %2542 = vrot.lane.b32.xlu0 %v2526, 96
    %v2543 = vpop.permute.xlu0 %2542
    %2544 = vrot.lane.b32.xlu0 %v2526, 64
    %v2545 = vpop.permute.xlu0 %2544
    %2546 = vrot.lane.b32.xlu0 %v2526, 32
    %v2547 = vpop.permute.xlu0 %2546
    %v2549 = vsel %vm968, %v2524, 0
    %v2552 = vsel %vm968, %v2525, 0
    %2554 = vmatprep.subr.bf16.mxu0 0
    %2555 = vmatpush1.bf16.xpose.msra.mxu0 %v2552
    %2556 = vmatprep.subr.bf16.mxu0 0
    %2557 = vmatpush1.bf16.xpose.msra.mxu0 0
    %2558 = vmatprep.subr.bf16.mxu0 0
    %2559 = vmatpush1.bf16.xpose.msra.mxu0 0
    %2560 = vmatprep.subr.bf16.mxu0 0
    %2561 = vmatpush1.bf16.xpose.msra.mxu0 0
    %2562 = vmatprep.subr.bf16.mxu0 0
    %2563 = vmatpush1.bf16.xpose.msra.mxu0 0
    %2564 = vmatprep.subr.bf16.mxu0 0
    %2565 = vmatpush1.bf16.xpose.msra.mxu0 0
    %2566 = vmatprep.subr.bf16.mxu0 0
    %2567 = vmatpush1.bf16.xpose.msra.mxu0 0
    %2568 = vmatprep.subr.bf16.mxu0 0
    %2569 = vmatpush1.bf16.xpose.msra.mxu0 0
    %2570 = vmatprep.subr.bf16.mxu0 0
    %2571 = vmatpush1.bf16.xpose.msra.mxu0 0
    %2572 = vmatprep.subr.bf16.mxu0 0
    %2573 = vmatpush1.bf16.xpose.msra.mxu0 0
    %2574 = vmatprep.subr.bf16.mxu0 0
    %2575 = vmatpush1.bf16.xpose.msra.mxu0 0
    %2576 = vmatprep.subr.bf16.mxu0 0
    %2577 = vmatpush1.bf16.xpose.msra.mxu0 0
    %2578 = vmatprep.subr.bf16.mxu0 0
    %2579 = vmatpush1.bf16.xpose.msra.mxu0 0
    %2580 = vmatprep.subr.bf16.mxu0 0
    %2581 = vmatpush1.bf16.xpose.msra.mxu0 0
    %2582 = vmatprep.subr.bf16.mxu0 0
    %2583 = vmatpush1.bf16.xpose.msra.mxu0 0
    %2584 = vmatprep.subr.bf16.mxu0 0
    %2585 = vmatpush1.bf16.xpose.msra.mxu0 0
    %2586 = vmatprep.mubr.bf16.mxu0 0
    %2587 = vmatmul.mubr.bf16.gmra.mrb[0].mxu0 %v2549
    %v2588 = vpop.f32.mrb[0].mxu0
    %v2589 = vadd.f32 0.0, %v2588
    %v2590 = vpop.f32.mrb[0].mxu0
    %v2591 = vpop.f32.mrb[0].mxu0
    %v2592 = vpop.f32.mrb[0].mxu0
    %2593 = vdwg.mxu0
    %v2595 = vsel %vm968, %v2529, 0
    %v2598 = vsel %vm968, %v2536, 0
    %2600 = vmatprep.subr.bf16.mxu0 0
    %2601 = vmatpush1.bf16.xpose.msra.mxu0 %v2598
    %2602 = vmatprep.subr.bf16.mxu0 0
    %2603 = vmatpush1.bf16.xpose.msra.mxu0 0
    %2604 = vmatprep.subr.bf16.mxu0 0
    %2605 = vmatpush1.bf16.xpose.msra.mxu0 0
    %2606 = vmatprep.subr.bf16.mxu0 0
    %2607 = vmatpush1.bf16.xpose.msra.mxu0 0
    %2608 = vmatprep.subr.bf16.mxu0 0
    %2609 = vmatpush1.bf16.xpose.msra.mxu0 0
    %2610 = vmatprep.subr.bf16.mxu0 0
    %2611 = vmatpush1.bf16.xpose.msra.mxu0 0
    %2612 = vmatprep.subr.bf16.mxu0 0
    %2613 = vmatpush1.bf16.xpose.msra.mxu0 0
    %2614 = vmatprep.subr.bf16.mxu0 0
    %2615 = vmatpush1.bf16.xpose.msra.mxu0 0
    %2616 = vmatprep.subr.bf16.mxu0 0
    %2617 = vmatpush1.bf16.xpose.msra.mxu0 0
    %2618 = vmatprep.subr.bf16.mxu0 0
    %2619 = vmatpush1.bf16.xpose.msra.mxu0 0
    %2620 = vmatprep.subr.bf16.mxu0 0
    %2621 = vmatpush1.bf16.xpose.msra.mxu0 0
    %2622 = vmatprep.subr.bf16.mxu0 0
    %2623 = vmatpush1.bf16.xpose.msra.mxu0 0
    %2624 = vmatprep.subr.bf16.mxu0 0
    %2625 = vmatpush1.bf16.xpose.msra.mxu0 0
    %2626 = vmatprep.subr.bf16.mxu0 0
    %2627 = vmatpush1.bf16.xpose.msra.mxu0 0
    %2628 = vmatprep.subr.bf16.mxu0 0
    %2629 = vmatpush1.bf16.xpose.msra.mxu0 0
    %2630 = vmatprep.subr.bf16.mxu0 0
    %2631 = vmatpush1.bf16.xpose.msra.mxu0 0
    %2632 = vmatprep.mubr.bf16.mxu0 0
    %2633 = vmatmul.mubr.bf16.gmra.mrb[0].mxu0 %v2595
    %v2634 = vpop.f32.mrb[0].mxu0
    %v2635 = vadd.f32 0.0, %v2634
    %v2636 = vpop.f32.mrb[0].mxu0
    %v2637 = vpop.f32.mrb[0].mxu0
    %v2638 = vpop.f32.mrb[0].mxu0
    %2639 = vdwg.mxu0
    %v2641 = vsel %vm968, %v2531, 0
    %v2644 = vsel %vm968, %v2538, 0
    %2646 = vmatprep.subr.bf16.mxu0 0
    %2647 = vmatpush1.bf16.xpose.msra.mxu0 %v2644
    %2648 = vmatprep.subr.bf16.mxu0 0
    %2649 = vmatpush1.bf16.xpose.msra.mxu0 0
    %2650 = vmatprep.subr.bf16.mxu0 0
    %2651 = vmatpush1.bf16.xpose.msra.mxu0 0
    %2652 = vmatprep.subr.bf16.mxu0 0
    %2653 = vmatpush1.bf16.xpose.msra.mxu0 0
    %2654 = vmatprep.subr.bf16.mxu0 0
    %2655 = vmatpush1.bf16.xpose.msra.mxu0 0
    %2656 = vmatprep.subr.bf16.mxu0 0
    %2657 = vmatpush1.bf16.xpose.msra.mxu0 0
    %2658 = vmatprep.subr.bf16.mxu0 0
    %2659 = vmatpush1.bf16.xpose.msra.mxu0 0
    %2660 = vmatprep.subr.bf16.mxu0 0
    %2661 = vmatpush1.bf16.xpose.msra.mxu0 0
    %2662 = vmatprep.subr.bf16.mxu0 0
    %2663 = vmatpush1.bf16.xpose.msra.mxu0 0
    %2664 = vmatprep.subr.bf16.mxu0 0
    %2665 = vmatpush1.bf16.xpose.msra.mxu0 0
    %2666 = vmatprep.subr.bf16.mxu0 0
    %2667 = vmatpush1.bf16.xpose.msra.mxu0 0
    %2668 = vmatprep.subr.bf16.mxu0 0
    %2669 = vmatpush1.bf16.xpose.msra.mxu0 0
    %2670 = vmatprep.subr.bf16.mxu0 0
    %2671 = vmatpush1.bf16.xpose.msra.mxu0 0
    %2672 = vmatprep.subr.bf16.mxu0 0
    %2673 = vmatpush1.bf16.xpose.msra.mxu0 0
    %2674 = vmatprep.subr.bf16.mxu0 0
    %2675 = vmatpush1.bf16.xpose.msra.mxu0 0
    %2676 = vmatprep.subr.bf16.mxu0 0
    %2677 = vmatpush1.bf16.xpose.msra.mxu0 0
    %2678 = vmatprep.mubr.bf16.mxu0 0
    %2679 = vmatmul.mubr.bf16.gmra.mrb[0].mxu0 %v2641
    %v2680 = vpop.f32.mrb[0].mxu0
    %v2681 = vadd.f32 0.0, %v2680
    %v2682 = vpop.f32.mrb[0].mxu0
    %v2683 = vpop.f32.mrb[0].mxu0
    %v2684 = vpop.f32.mrb[0].mxu0
    %2685 = vdwg.mxu0
    %v2687 = vsel %vm968, %v2533, 0
    %v2690 = vsel %vm968, %v2540, 0
    %2692 = vmatprep.subr.bf16.mxu0 0
    %2693 = vmatpush1.bf16.xpose.msra.mxu0 %v2690
    %2694 = vmatprep.subr.bf16.mxu0 0
    %2695 = vmatpush1.bf16.xpose.msra.mxu0 0
    %2696 = vmatprep.subr.bf16.mxu0 0
    %2697 = vmatpush1.bf16.xpose.msra.mxu0 0
    %2698 = vmatprep.subr.bf16.mxu0 0
    %2699 = vmatpush1.bf16.xpose.msra.mxu0 0
    %2700 = vmatprep.subr.bf16.mxu0 0
    %2701 = vmatpush1.bf16.xpose.msra.mxu0 0
    %2702 = vmatprep.subr.bf16.mxu0 0
    %2703 = vmatpush1.bf16.xpose.msra.mxu0 0
    %2704 = vmatprep.subr.bf16.mxu0 0
    %2705 = vmatpush1.bf16.xpose.msra.mxu0 0
    %2706 = vmatprep.subr.bf16.mxu0 0
    %2707 = vmatpush1.bf16.xpose.msra.mxu0 0
    %2708 = vmatprep.subr.bf16.mxu0 0
    %2709 = vmatpush1.bf16.xpose.msra.mxu0 0
    %2710 = vmatprep.subr.bf16.mxu0 0
    %2711 = vmatpush1.bf16.xpose.msra.mxu0 0
    %2712 = vmatprep.subr.bf16.mxu0 0
    %2713 = vmatpush1.bf16.xpose.msra.mxu0 0
    %2714 = vmatprep.subr.bf16.mxu0 0
    %2715 = vmatpush1.bf16.xpose.msra.mxu0 0
    %2716 = vmatprep.subr.bf16.mxu0 0
    %2717 = vmatpush1.bf16.xpose.msra.mxu0 0
    %2718 = vmatprep.subr.bf16.mxu0 0
    %2719 = vmatpush1.bf16.xpose.msra.mxu0 0
    %2720 = vmatprep.subr.bf16.mxu0 0
    %2721 = vmatpush1.bf16.xpose.msra.mxu0 0
    %2722 = vmatprep.subr.bf16.mxu0 0
    %2723 = vmatpush1.bf16.xpose.msra.mxu0 0
    %2724 = vmatprep.mubr.bf16.mxu0 0
    %2725 = vmatmul.mubr.bf16.gmra.mrb[0].mxu0 %v2687
    %v2726 = vpop.f32.mrb[0].mxu0
    %v2727 = vadd.f32 0.0, %v2726
    %v2728 = vpop.f32.mrb[0].mxu0
    %v2729 = vpop.f32.mrb[0].mxu0
    %v2730 = vpop.f32.mrb[0].mxu0
    %2731 = vdwg.mxu0
    %v2732 = vmul.f32 %v2589, 0.17677669
    %v2733 = vmul.f32 %v2635, 0.17677669
    %v2734 = vmul.f32 %v2681, 0.17677669
    %v2735 = vmul.f32 %v2727, 0.17677669
    %v2736 = vadd.f32 %v2732, %v127
    %v2737 = vadd.f32 %v2733, %v127
    %v2738 = vadd.f32 %v2734, %v127
    %v2739 = vadd.f32 %v2735, %v127
    %v2740 = vsel %vm1161, %v2736, -inf
    %2741 = vmax.xlane.f32.xlu0 %v2740
    %v2742 = vpop.xlane.xlu0 %2741
    %v2743 = vsel %vm1161, %v2737, -inf
    %2744 = vmax.xlane.f32.xlu0 %v2743
    %v2745 = vpop.xlane.xlu0 %2744
    %v2746 = vsel %vm1161, %v2738, -inf
    %2747 = vmax.xlane.f32.xlu0 %v2746
    %v2748 = vpop.xlane.xlu0 %2747
    %v2749 = vsel %vm1161, %v2739, -inf
    %2750 = vmax.xlane.f32.xlu0 %v2749
    %v2751 = vpop.xlane.xlu0 %2750
    %v2752 = vsub.f32 %v2736, %v2742
    %v2753 = vsub.f32 %v2737, %v2745
    %v2754 = vsub.f32 %v2738, %v2748
    %v2755 = vsub.f32 %v2739, %v2751
    %v2756 = vmul.f32 %v2752, 1.442695
    %v2757 = vpow.pop %v2756
    %v2758 = vmul.f32 %v2753, 1.442695
    %v2759 = vpow.pop %v2758
    %v2760 = vmul.f32 %v2754, 1.442695
    %v2761 = vpow.pop %v2760
    %v2762 = vmul.f32 %v2755, 1.442695
    %v2763 = vpow.pop %v2762
    %v2764 = vsel %vm1161, %v2757, 0.0
    %2765 = vadd.xlane.f32.xlu0 %v2764
    %v2766 = vpop.xlane.xlu0 %2765
    %v2767 = vsel %vm1161, %v2759, 0.0
    %2768 = vadd.xlane.f32.xlu0 %v2767
    %v2769 = vpop.xlane.xlu0 %2768
    %v2770 = vsel %vm1161, %v2761, 0.0
    %2771 = vadd.xlane.f32.xlu0 %v2770
    %v2772 = vpop.xlane.xlu0 %2771
    %v2773 = vsel %vm1161, %v2763, 0.0
    %2774 = vadd.xlane.f32.xlu0 %v2773
    %v2775 = vpop.xlane.xlu0 %2774
    %v2776 = vrcp.pop %v2766
    %v2777 = vrcp.pop %v2769
    %v2778 = vrcp.pop %v2772
    %v2779 = vrcp.pop %v2775
    %v2780 = vmul.f32 %v2757, %v2776
    %v2781 = vmul.f32 %v2759, %v2777
    %v2782 = vmul.f32 %v2761, %v2778
    %v2783 = vmul.f32 %v2763, %v2779
    %v2784 = vpack.c.bf16 %v2780, %v2780
    %v2785 = vpack.c.bf16 %v2781, %v2781
    %v2786 = vpack.c.bf16 %v2782, %v2782
    %v2787 = vpack.c.bf16 %v2783, %v2783
    %v2789 = vsel %vm1161, %v2784, 0
    %v2792 = vsel %vm1213, %v2526, 0
    %2794 = vmatprep.subr.bf16.mxu0 0
    %2795 = vmatpush1.bf16.msra.mxu0 %v2792
    %2796 = vmatprep.subr.bf16.mxu0 0
    %2797 = vmatpush1.bf16.msra.mxu0 0
    %2798 = vmatprep.subr.bf16.mxu0 0
    %2799 = vmatpush1.bf16.msra.mxu0 0
    %2800 = vmatprep.subr.bf16.mxu0 0
    %2801 = vmatpush1.bf16.msra.mxu0 0
    %2802 = vmatprep.subr.bf16.mxu0 0
    %2803 = vmatpush1.bf16.msra.mxu0 0
    %2804 = vmatprep.subr.bf16.mxu0 0
    %2805 = vmatpush1.bf16.msra.mxu0 0
    %2806 = vmatprep.subr.bf16.mxu0 0
    %2807 = vmatpush1.bf16.msra.mxu0 0
    %2808 = vmatprep.subr.bf16.mxu0 0
    %2809 = vmatpush1.bf16.msra.mxu0 0
    %2810 = vmatprep.subr.bf16.mxu0 0
    %2811 = vmatpush1.bf16.msra.mxu0 0
    %2812 = vmatprep.subr.bf16.mxu0 0
    %2813 = vmatpush1.bf16.msra.mxu0 0
    %2814 = vmatprep.subr.bf16.mxu0 0
    %2815 = vmatpush1.bf16.msra.mxu0 0
    %2816 = vmatprep.subr.bf16.mxu0 0
    %2817 = vmatpush1.bf16.msra.mxu0 0
    %2818 = vmatprep.subr.bf16.mxu0 0
    %2819 = vmatpush1.bf16.msra.mxu0 0
    %2820 = vmatprep.subr.bf16.mxu0 0
    %2821 = vmatpush1.bf16.msra.mxu0 0
    %2822 = vmatprep.subr.bf16.mxu0 0
    %2823 = vmatpush1.bf16.msra.mxu0 0
    %2824 = vmatprep.subr.bf16.mxu0 0
    %2825 = vmatpush1.bf16.msra.mxu0 0
    %2826 = vmatprep.mubr.bf16.mxu0 0
    %2827 = vmatmul.mubr.bf16.gmra.mrb[0].mxu0 %v2789
    %v2828 = vpop.f32.mrb[0].mxu0
    %v2829 = vadd.f32 0.0, %v2828
    %v2830 = vpop.f32.mrb[0].mxu0
    %v2831 = vpop.f32.mrb[0].mxu0
    %v2832 = vpop.f32.mrb[0].mxu0
    %2833 = vdwg.mxu0
    %v2835 = vsel %vm1161, %v2785, 0
    %v2838 = vsel %vm1213, %v2543, 0
    %2840 = vmatprep.subr.bf16.mxu0 0
    %2841 = vmatpush1.bf16.msra.mxu0 %v2838
    %2842 = vmatprep.subr.bf16.mxu0 0
    %2843 = vmatpush1.bf16.msra.mxu0 0
    %2844 = vmatprep.subr.bf16.mxu0 0
    %2845 = vmatpush1.bf16.msra.mxu0 0
    %2846 = vmatprep.subr.bf16.mxu0 0
    %2847 = vmatpush1.bf16.msra.mxu0 0
    %2848 = vmatprep.subr.bf16.mxu0 0
    %2849 = vmatpush1.bf16.msra.mxu0 0
    %2850 = vmatprep.subr.bf16.mxu0 0
    %2851 = vmatpush1.bf16.msra.mxu0 0
    %2852 = vmatprep.subr.bf16.mxu0 0
    %2853 = vmatpush1.bf16.msra.mxu0 0
    %2854 = vmatprep.subr.bf16.mxu0 0
    %2855 = vmatpush1.bf16.msra.mxu0 0
    %2856 = vmatprep.subr.bf16.mxu0 0
    %2857 = vmatpush1.bf16.msra.mxu0 0
    %2858 = vmatprep.subr.bf16.mxu0 0
    %2859 = vmatpush1.bf16.msra.mxu0 0
    %2860 = vmatprep.subr.bf16.mxu0 0
    %2861 = vmatpush1.bf16.msra.mxu0 0
    %2862 = vmatprep.subr.bf16.mxu0 0
    %2863 = vmatpush1.bf16.msra.mxu0 0
    %2864 = vmatprep.subr.bf16.mxu0 0
    %2865 = vmatpush1.bf16.msra.mxu0 0
    %2866 = vmatprep.subr.bf16.mxu0 0
    %2867 = vmatpush1.bf16.msra.mxu0 0
    %2868 = vmatprep.subr.bf16.mxu0 0
    %2869 = vmatpush1.bf16.msra.mxu0 0
    %2870 = vmatprep.subr.bf16.mxu0 0
    %2871 = vmatpush1.bf16.msra.mxu0 0
    %2872 = vmatprep.mubr.bf16.mxu0 0
    %2873 = vmatmul.mubr.bf16.gmra.mrb[0].mxu0 %v2835
    %v2874 = vpop.f32.mrb[0].mxu0
    %v2875 = vadd.f32 0.0, %v2874
    %v2876 = vpop.f32.mrb[0].mxu0
    %v2877 = vpop.f32.mrb[0].mxu0
    %v2878 = vpop.f32.mrb[0].mxu0
    %2879 = vdwg.mxu0
    %v2881 = vsel %vm1161, %v2786, 0
    %v2884 = vsel %vm1213, %v2545, 0
    %2886 = vmatprep.subr.bf16.mxu0 0
    %2887 = vmatpush1.bf16.msra.mxu0 %v2884
    %2888 = vmatprep.subr.bf16.mxu0 0
    %2889 = vmatpush1.bf16.msra.mxu0 0
    %2890 = vmatprep.subr.bf16.mxu0 0
    %2891 = vmatpush1.bf16.msra.mxu0 0
    %2892 = vmatprep.subr.bf16.mxu0 0
    %2893 = vmatpush1.bf16.msra.mxu0 0
    %2894 = vmatprep.subr.bf16.mxu0 0
    %2895 = vmatpush1.bf16.msra.mxu0 0
    %2896 = vmatprep.subr.bf16.mxu0 0
    %2897 = vmatpush1.bf16.msra.mxu0 0
    %2898 = vmatprep.subr.bf16.mxu0 0
    %2899 = vmatpush1.bf16.msra.mxu0 0
    %2900 = vmatprep.subr.bf16.mxu0 0
    %2901 = vmatpush1.bf16.msra.mxu0 0
    %2902 = vmatprep.subr.bf16.mxu0 0
    %2903 = vmatpush1.bf16.msra.mxu0 0
    %2904 = vmatprep.subr.bf16.mxu0 0
    %2905 = vmatpush1.bf16.msra.mxu0 0
    %2906 = vmatprep.subr.bf16.mxu0 0
    %2907 = vmatpush1.bf16.msra.mxu0 0
    %2908 = vmatprep.subr.bf16.mxu0 0
    %2909 = vmatpush1.bf16.msra.mxu0 0
    %2910 = vmatprep.subr.bf16.mxu0 0
    %2911 = vmatpush1.bf16.msra.mxu0 0
    %2912 = vmatprep.subr.bf16.mxu0 0
    %2913 = vmatpush1.bf16.msra.mxu0 0
    %2914 = vmatprep.subr.bf16.mxu0 0
    %2915 = vmatpush1.bf16.msra.mxu0 0
    %2916 = vmatprep.subr.bf16.mxu0 0
    %2917 = vmatpush1.bf16.msra.mxu0 0
    %2918 = vmatprep.mubr.bf16.mxu0 0
    %2919 = vmatmul.mubr.bf16.gmra.mrb[0].mxu0 %v2881
    %v2920 = vpop.f32.mrb[0].mxu0
    %v2921 = vadd.f32 0.0, %v2920
    %v2922 = vpop.f32.mrb[0].mxu0
    %v2923 = vpop.f32.mrb[0].mxu0
    %v2924 = vpop.f32.mrb[0].mxu0
    %2925 = vdwg.mxu0
    %v2927 = vsel %vm1161, %v2787, 0
    %v2930 = vsel %vm1213, %v2547, 0
    %2932 = vmatprep.subr.bf16.mxu0 0
    %2933 = vmatpush1.bf16.msra.mxu0 %v2930
    %2934 = vmatprep.subr.bf16.mxu0 0
    %2935 = vmatpush1.bf16.msra.mxu0 0
    %2936 = vmatprep.subr.bf16.mxu0 0
    %2937 = vmatpush1.bf16.msra.mxu0 0
    %2938 = vmatprep.subr.bf16.mxu0 0
    %2939 = vmatpush1.bf16.msra.mxu0 0
    %2940 = vmatprep.subr.bf16.mxu0 0
    %2941 = vmatpush1.bf16.msra.mxu0 0
    %2942 = vmatprep.subr.bf16.mxu0 0
    %2943 = vmatpush1.bf16.msra.mxu0 0
    %2944 = vmatprep.subr.bf16.mxu0 0
    %2945 = vmatpush1.bf16.msra.mxu0 0
    %2946 = vmatprep.subr.bf16.mxu0 0
    %2947 = vmatpush1.bf16.msra.mxu0 0
    %2948 = vmatprep.subr.bf16.mxu0 0
    %2949 = vmatpush1.bf16.msra.mxu0 0
    %2950 = vmatprep.subr.bf16.mxu0 0
    %2951 = vmatpush1.bf16.msra.mxu0 0
    %2952 = vmatprep.subr.bf16.mxu0 0
    %2953 = vmatpush1.bf16.msra.mxu0 0
    %2954 = vmatprep.subr.bf16.mxu0 0
    %2955 = vmatpush1.bf16.msra.mxu0 0
    %2956 = vmatprep.subr.bf16.mxu0 0
    %2957 = vmatpush1.bf16.msra.mxu0 0
    %2958 = vmatprep.subr.bf16.mxu0 0
    %2959 = vmatpush1.bf16.msra.mxu0 0
    %2960 = vmatprep.subr.bf16.mxu0 0
    %2961 = vmatpush1.bf16.msra.mxu0 0
    %2962 = vmatprep.subr.bf16.mxu0 0
    %2963 = vmatpush1.bf16.msra.mxu0 0
    %2964 = vmatprep.mubr.bf16.mxu0 0
    %2965 = vmatmul.mubr.bf16.gmra.mrb[0].mxu0 %v2927
    %v2966 = vpop.f32.mrb[0].mxu0
    %v2967 = vadd.f32 0.0, %v2966
    %v2968 = vpop.f32.mrb[0].mxu0
    %v2969 = vpop.f32.mrb[0].mxu0
    %v2970 = vpop.f32.mrb[0].mxu0
    %2971 = vdwg.mxu0
    %2973 = vrot.lane.b32.xlu0 %v2875, 32
    %v2974 = vpop.permute.xlu0 %2973
    %2977 = vrot.lane.b32.xlu0 %v2921, 64
    %v2978 = vpop.permute.xlu0 %2977
    %2981 = vrot.lane.b32.xlu0 %v2967, 96
    %v2982 = vpop.permute.xlu0 %2981
    %v2984 = vsel %vm968, %v2829, %v2974
    %v2985 = vsel %vm1408, %v2984, %v2978
    %v2986 = vsel %vm1410, %v2985, %v2982
    %v2987 = vpack.c.bf16 %v2986, %v2986
    %s2988 = scalar_lea.vmem %s9, 64
    %v2989 = vld [vmem:[%s2988] sm:$0xf]
    %v2990 = vld [vmem:[%s2988 + $0x4] sm:$0xf]
    %v2991 = vld [vmem:[%s2988 + $0x8] sm:$0xf]
    %v2992 = vld [vmem:[%s2988 + $0xc] sm:$0xf]
    %v2993 = vld [vmem:[%s2988 + $0x10] sm:$0xf]
    %v2994 = vld [vmem:[%s2988 + $0x14] sm:$0xf]
    %v2995 = vld [vmem:[%s2988 + $0x18] sm:$0xf]
    %v2996 = vld [vmem:[%s2988 + $0x1c] sm:$0xf]
    %v2997 = vld [vmem:[%s2988 + $0x20] sm:$0xf]
    %v2998 = vld [vmem:[%s2988 + $0x24] sm:$0xf]
    %v2999 = vld [vmem:[%s2988 + $0x28] sm:$0xf]
    %v3000 = vld [vmem:[%s2988 + $0x2c] sm:$0xf]
    %v3001 = vld [vmem:[%s2988 + $0x30] sm:$0xf]
    %v3002 = vld [vmem:[%s2988 + $0x34] sm:$0xf]
    %v3003 = vld [vmem:[%s2988 + $0x38] sm:$0xf]
    %v3004 = vld [vmem:[%s2988 + $0x3c] sm:$0xf]
    %s3005 = scalar_lea.vmem %s10, 1
    %v3006 = vld [vmem:[%s3005] sm:$0x1]
    %v3008 = vlaneseq
    %v3009 = vshrl.u32 %v3008, 7
    %v3010 = vsub.s32 0, %v3009
    %v3011 = vrot.slane %v3006, %v3010
    %v3029 = vunpack.c.l.b16 %v2989
    %v3030 = vunpack.c.l.b16 %v2990
    %v3031 = vunpack.c.l.b16 %v2991
    %v3032 = vunpack.c.l.b16 %v2992
    %v3033 = vunpack.c.l.b16 %v2993
    %v3034 = vunpack.c.l.b16 %v2994
    %v3035 = vunpack.c.l.b16 %v2995
    %v3036 = vunpack.c.l.b16 %v2996
    %v3037 = vunpack.c.l.b16 %v2997
    %v3038 = vunpack.c.l.b16 %v2998
    %v3039 = vunpack.c.l.b16 %v2999
    %v3040 = vunpack.c.l.b16 %v3000
    %v3041 = vunpack.c.l.b16 %v3001
    %v3042 = vunpack.c.l.b16 %v3002
    %v3043 = vunpack.c.l.b16 %v3003
    %v3044 = vunpack.c.l.b16 %v3004
    %v3045 = vpack.c.b16 %v3030, %v3029
    %v3046 = vpack.c.b16 %v3032, %v3031
    %v3047 = vpack.c.b16 %v3034, %v3033
    %v3048 = vpack.c.b16 %v3036, %v3035
    %v3049 = vpack.c.b16 %v3038, %v3037
    %v3050 = vpack.c.b16 %v3040, %v3039
    %v3051 = vpack.c.b16 %v3042, %v3041
    %v3052 = vpack.c.b16 %v3044, %v3043
    %3061 = vmatprep.subr.bf16.mxu0 0
    %3062 = vmatpush1.bf16.msra.mxu0 %v3045
    %3063 = vmatprep.subr.bf16.mxu0 0
    %3064 = vmatpush1.bf16.msra.mxu0 %v3046
    %3065 = vmatprep.subr.bf16.mxu0 0
    %3066 = vmatpush1.bf16.msra.mxu0 %v3047
    %3067 = vmatprep.subr.bf16.mxu0 0
    %3068 = vmatpush1.bf16.msra.mxu0 %v3048
    %3069 = vmatprep.subr.bf16.mxu0 0
    %3070 = vmatpush1.bf16.msra.mxu0 %v3049
    %3071 = vmatprep.subr.bf16.mxu0 0
    %3072 = vmatpush1.bf16.msra.mxu0 %v3050
    %3073 = vmatprep.subr.bf16.mxu0 0
    %3074 = vmatpush1.bf16.msra.mxu0 %v3051
    %3075 = vmatprep.subr.bf16.mxu0 0
    %3076 = vmatpush1.bf16.msra.mxu0 %v3052
    %3077 = vmatprep.subr.bf16.mxu0 0
    %3078 = vmatpush1.bf16.msra.mxu0 0
    %3079 = vmatprep.subr.bf16.mxu0 0
    %3080 = vmatpush1.bf16.msra.mxu0 0
    %3081 = vmatprep.subr.bf16.mxu0 0
    %3082 = vmatpush1.bf16.msra.mxu0 0
    %3083 = vmatprep.subr.bf16.mxu0 0
    %3084 = vmatpush1.bf16.msra.mxu0 0
    %3085 = vmatprep.subr.bf16.mxu0 0
    %3086 = vmatpush1.bf16.msra.mxu0 0
    %3087 = vmatprep.subr.bf16.mxu0 0
    %3088 = vmatpush1.bf16.msra.mxu0 0
    %3089 = vmatprep.subr.bf16.mxu0 0
    %3090 = vmatpush1.bf16.msra.mxu0 0
    %3091 = vmatprep.subr.bf16.mxu0 0
    %3092 = vmatpush1.bf16.msra.mxu0 0
    %3093 = vmatprep.mubr.bf16.mxu0 0
    %3094 = vmatmul.mubr.bf16.gmra.mrb[0].mxu0 %v2987
    %v3095 = vpop.f32.mrb[0].mxu0
    %v3096 = vadd.f32 %v3011, %v3095
    %v3097 = vpop.f32.mrb[0].mxu0
    %v3098 = vpop.f32.mrb[0].mxu0
    %v3099 = vpop.f32.mrb[0].mxu0
    %3100 = vdwg.mxu0
    %v3101 = vadd.f32 %v2233, %v3096
    %s3102 = scalar_lea.vmem %s11, 1
    %v3103 = vld [vmem:[%s3102] sm:$0x1]
    %s3104 = scalar_lea.vmem %s12, 1
    %v3105 = vld [vmem:[%s3104] sm:$0x1]
    %3106 = vadd.xlane.f32.xlu0 %v3101
    %v3107 = vpop.xlane.xlu0 %3106
    %v3108 = vmul.f32 %v3107, %v661
    %v3109 = vsub.f32 %v3101, %v3108
    %v3110 = vmul.f32 %v3109, %v3109
    %3111 = vadd.xlane.f32.xlu0 %v3110
    %v3112 = vpop.xlane.xlu0 %3111
    %v3113 = vmul.f32 %v3112, %v661
    %v3114 = vadd.f32 %v3113, 1e-05
    %v3115 = vrsqrt.pop %v3114
    %v3116 = vmul.f32 %v3109, %v3115
    %v3118 = vlaneseq
    %v3119 = vshrl.u32 %v3118, 7
    %v3120 = vsub.s32 0, %v3119
    %v3121 = vrot.slane %v3103, %v3120
    %v3123 = vmul.f32 %v3116, %v3121
    %v3125 = vlaneseq
    %v3126 = vshrl.u32 %v3125, 7
    %v3127 = vsub.s32 0, %v3126
    %v3128 = vrot.slane %v3105, %v3127
    %v3130 = vadd.f32 %v3123, %v3128
    %v3131 = vpack.c.bf16 %v3130, %v3130
    %s3132 = scalar_lea.vmem %s13, 256
    %v3133 = vld [vmem:[%s3132] sm:$0xff]
    %v3134 = vld [vmem:[%s3132 + $0x8] sm:$0xff]
    %v3135 = vld [vmem:[%s3132 + $0x10] sm:$0xff]
    %v3136 = vld [vmem:[%s3132 + $0x18] sm:$0xff]
    %v3137 = vld [vmem:[%s3132 + $0x20] sm:$0xff]
    %v3138 = vld [vmem:[%s3132 + $0x28] sm:$0xff]
    %v3139 = vld [vmem:[%s3132 + $0x30] sm:$0xff]
    %v3140 = vld [vmem:[%s3132 + $0x38] sm:$0xff]
    %v3141 = vld [vmem:[%s3132 + $0x40] sm:$0xff]
    %v3142 = vld [vmem:[%s3132 + $0x48] sm:$0xff]
    %v3143 = vld [vmem:[%s3132 + $0x50] sm:$0xff]
    %v3144 = vld [vmem:[%s3132 + $0x58] sm:$0xff]
    %v3145 = vld [vmem:[%s3132 + $0x60] sm:$0xff]
    %v3146 = vld [vmem:[%s3132 + $0x68] sm:$0xff]
    %v3147 = vld [vmem:[%s3132 + $0x70] sm:$0xff]
    %v3148 = vld [vmem:[%s3132 + $0x78] sm:$0xff]
    %v3149 = vld [vmem:[%s3132 + $0x80] sm:$0xff]
    %v3150 = vld [vmem:[%s3132 + $0x88] sm:$0xff]
    %v3151 = vld [vmem:[%s3132 + $0x90] sm:$0xff]
    %v3152 = vld [vmem:[%s3132 + $0x98] sm:$0xff]
    %v3153 = vld [vmem:[%s3132 + $0xa0] sm:$0xff]
    %v3154 = vld [vmem:[%s3132 + $0xa8] sm:$0xff]
    %v3155 = vld [vmem:[%s3132 + $0xb0] sm:$0xff]
    %v3156 = vld [vmem:[%s3132 + $0xb8] sm:$0xff]
    %v3157 = vld [vmem:[%s3132 + $0xc0] sm:$0xff]
    %v3158 = vld [vmem:[%s3132 + $0xc8] sm:$0xff]
    %v3159 = vld [vmem:[%s3132 + $0xd0] sm:$0xff]
    %v3160 = vld [vmem:[%s3132 + $0xd8] sm:$0xff]
    %v3161 = vld [vmem:[%s3132 + $0xe0] sm:$0xff]
    %v3162 = vld [vmem:[%s3132 + $0xe8] sm:$0xff]
    %v3163 = vld [vmem:[%s3132 + $0xf0] sm:$0xff]
    %v3164 = vld [vmem:[%s3132 + $0xf8] sm:$0xff]
    %s3165 = scalar_lea.vmem %s14, 4
    %v3166 = vld [vmem:[%s3165] sm:$0xf]
    %v3168 = vlaneseq
    %v3169 = vshrl.u32 %v3168, 7
    %v3170 = vsub.s32 0, %v3169
    %v3171 = vrot.slane %v3166, %v3170
    %v3172 = vlaneseq
    %v3173 = vshrl.u32 %v3172, 7
    %v3174 = vsub.s32 1, %v3173
    %v3175 = vrot.slane %v3166, %v3174
    %v3176 = vlaneseq
    %v3177 = vshrl.u32 %v3176, 7
    %v3178 = vsub.s32 2, %v3177
    %v3179 = vrot.slane %v3166, %v3178
    %v3180 = vlaneseq
    %v3181 = vshrl.u32 %v3180, 7
    %v3182 = vsub.s32 3, %v3181
    %v3183 = vrot.slane %v3166, %v3182
    %v3220 = vunpack.c.l.b16 %v3133
    %v3221 = vunpack.c.h.b16 %v3133
    %v3222 = vunpack.c.l.b16 %v3134
    %v3223 = vunpack.c.h.b16 %v3134
    %v3224 = vunpack.c.l.b16 %v3135
    %v3225 = vunpack.c.h.b16 %v3135
    %v3226 = vunpack.c.l.b16 %v3136
    %v3227 = vunpack.c.h.b16 %v3136
    %v3228 = vunpack.c.l.b16 %v3137
    %v3229 = vunpack.c.h.b16 %v3137
    %v3230 = vunpack.c.l.b16 %v3138
    %v3231 = vunpack.c.h.b16 %v3138
    %v3232 = vunpack.c.l.b16 %v3139
    %v3233 = vunpack.c.h.b16 %v3139
    %v3234 = vunpack.c.l.b16 %v3140
    %v3235 = vunpack.c.h.b16 %v3140
    %v3236 = vunpack.c.l.b16 %v3141
    %v3237 = vunpack.c.h.b16 %v3141
    %v3238 = vunpack.c.l.b16 %v3142
    %v3239 = vunpack.c.h.b16 %v3142
    %v3240 = vunpack.c.l.b16 %v3143
    %v3241 = vunpack.c.h.b16 %v3143
    %v3242 = vunpack.c.l.b16 %v3144
    %v3243 = vunpack.c.h.b16 %v3144
    %v3244 = vunpack.c.l.b16 %v3145
    %v3245 = vunpack.c.h.b16 %v3145
    %v3246 = vunpack.c.l.b16 %v3146
    %v3247 = vunpack.c.h.b16 %v3146
    %v3248 = vunpack.c.l.b16 %v3147
    %v3249 = vunpack.c.h.b16 %v3147
    %v3250 = vunpack.c.l.b16 %v3148
    %v3251 = vunpack.c.h.b16 %v3148
    %v3252 = vunpack.c.l.b16 %v3149
    %v3253 = vunpack.c.h.b16 %v3149
    %v3254 = vunpack.c.l.b16 %v3150
    %v3255 = vunpack.c.h.b16 %v3150
    %v3256 = vunpack.c.l.b16 %v3151
    %v3257 = vunpack.c.h.b16 %v3151
    %v3258 = vunpack.c.l.b16 %v3152
    %v3259 = vunpack.c.h.b16 %v3152
    %v3260 = vunpack.c.l.b16 %v3153
    %v3261 = vunpack.c.h.b16 %v3153
    %v3262 = vunpack.c.l.b16 %v3154
    %v3263 = vunpack.c.h.b16 %v3154
    %v3264 = vunpack.c.l.b16 %v3155
    %v3265 = vunpack.c.h.b16 %v3155
    %v3266 = vunpack.c.l.b16 %v3156
    %v3267 = vunpack.c.h.b16 %v3156
    %v3268 = vunpack.c.l.b16 %v3157
    %v3269 = vunpack.c.h.b16 %v3157
    %v3270 = vunpack.c.l.b16 %v3158
    %v3271 = vunpack.c.h.b16 %v3158
    %v3272 = vunpack.c.l.b16 %v3159
    %v3273 = vunpack.c.h.b16 %v3159
    %v3274 = vunpack.c.l.b16 %v3160
    %v3275 = vunpack.c.h.b16 %v3160
    %v3276 = vunpack.c.l.b16 %v3161
    %v3277 = vunpack.c.h.b16 %v3161
    %v3278 = vunpack.c.l.b16 %v3162
    %v3279 = vunpack.c.h.b16 %v3162
    %v3280 = vunpack.c.l.b16 %v3163
    %v3281 = vunpack.c.h.b16 %v3163
    %v3282 = vunpack.c.l.b16 %v3164
    %v3283 = vunpack.c.h.b16 %v3164
    %v3284 = vpack.c.b16 %v3224, %v3220
    %v3285 = vpack.c.b16 %v3225, %v3221
    %v3286 = vpack.c.b16 %v3226, %v3222
    %v3287 = vpack.c.b16 %v3227, %v3223
    %v3288 = vpack.c.b16 %v3232, %v3228
    %v3289 = vpack.c.b16 %v3233, %v3229
    %v3290 = vpack.c.b16 %v3234, %v3230
    %v3291 = vpack.c.b16 %v3235, %v3231
    %v3292 = vpack.c.b16 %v3240, %v3236
    %v3293 = vpack.c.b16 %v3241, %v3237
    %v3294 = vpack.c.b16 %v3242, %v3238
    %v3295 = vpack.c.b16 %v3243, %v3239
    %v3296 = vpack.c.b16 %v3248, %v3244
    %v3297 = vpack.c.b16 %v3249, %v3245
    %v3298 = vpack.c.b16 %v3250, %v3246
    %v3299 = vpack.c.b16 %v3251, %v3247
    %v3300 = vpack.c.b16 %v3256, %v3252
    %v3301 = vpack.c.b16 %v3257, %v3253
    %v3302 = vpack.c.b16 %v3258, %v3254
    %v3303 = vpack.c.b16 %v3259, %v3255
    %v3304 = vpack.c.b16 %v3264, %v3260
    %v3305 = vpack.c.b16 %v3265, %v3261
    %v3306 = vpack.c.b16 %v3266, %v3262
    %v3307 = vpack.c.b16 %v3267, %v3263
    %v3308 = vpack.c.b16 %v3272, %v3268
    %v3309 = vpack.c.b16 %v3273, %v3269
    %v3310 = vpack.c.b16 %v3274, %v3270
    %v3311 = vpack.c.b16 %v3275, %v3271
    %v3312 = vpack.c.b16 %v3280, %v3276
    %v3313 = vpack.c.b16 %v3281, %v3277
    %v3314 = vpack.c.b16 %v3282, %v3278
    %v3315 = vpack.c.b16 %v3283, %v3279
    %3348 = vmatprep.subr.bf16.mxu0 %v3285
    %3349 = vmatpush1.bf16.msra.mxu0 %v3284
    %3350 = vmatprep.subr.bf16.mxu0 %v3289
    %3351 = vmatpush1.bf16.msra.mxu0 %v3288
    %3352 = vmatprep.subr.bf16.mxu0 %v3293
    %3353 = vmatpush1.bf16.msra.mxu0 %v3292
    %3354 = vmatprep.subr.bf16.mxu0 %v3297
    %3355 = vmatpush1.bf16.msra.mxu0 %v3296
    %3356 = vmatprep.subr.bf16.mxu0 %v3301
    %3357 = vmatpush1.bf16.msra.mxu0 %v3300
    %3358 = vmatprep.subr.bf16.mxu0 %v3305
    %3359 = vmatpush1.bf16.msra.mxu0 %v3304
    %3360 = vmatprep.subr.bf16.mxu0 %v3309
    %3361 = vmatpush1.bf16.msra.mxu0 %v3308
    %3362 = vmatprep.subr.bf16.mxu0 %v3313
    %3363 = vmatpush1.bf16.msra.mxu0 %v3312
    %3364 = vmatprep.subr.bf16.mxu0 0
    %3365 = vmatpush1.bf16.msra.mxu0 0
    %3366 = vmatprep.subr.bf16.mxu0 0
    %3367 = vmatpush1.bf16.msra.mxu0 0
    %3368 = vmatprep.subr.bf16.mxu0 0
    %3369 = vmatpush1.bf16.msra.mxu0 0
    %3370 = vmatprep.subr.bf16.mxu0 0
    %3371 = vmatpush1.bf16.msra.mxu0 0
    %3372 = vmatprep.subr.bf16.mxu0 0
    %3373 = vmatpush1.bf16.msra.mxu0 0
    %3374 = vmatprep.subr.bf16.mxu0 0
    %3375 = vmatpush1.bf16.msra.mxu0 0
    %3376 = vmatprep.subr.bf16.mxu0 0
    %3377 = vmatpush1.bf16.msra.mxu0 0
    %3378 = vmatprep.subr.bf16.mxu0 0
    %3379 = vmatpush1.bf16.msra.mxu0 0
    %3380 = vmatprep.mubr.bf16.mxu0 0
    %3381 = vmatmul.mubr.bf16.gmra.mrb[0].mxu0 %v3131
    %v3382 = vpop.f32.mrb[0].mxu0
    %v3383 = vadd.f32 %v3171, %v3382
    %v3384 = vpop.f32.mrb[0].mxu0
    %v3385 = vadd.f32 %v3175, %v3384
    %v3386 = vpop.f32.mrb[0].mxu0
    %v3387 = vpop.f32.mrb[0].mxu0
    %3388 = vdwg.mxu0
    %3389 = vmatprep.subr.bf16.mxu0 %v3287
    %3390 = vmatpush1.bf16.msra.mxu0 %v3286
    %3391 = vmatprep.subr.bf16.mxu0 %v3291
    %3392 = vmatpush1.bf16.msra.mxu0 %v3290
    %3393 = vmatprep.subr.bf16.mxu0 %v3295
    %3394 = vmatpush1.bf16.msra.mxu0 %v3294
    %3395 = vmatprep.subr.bf16.mxu0 %v3299
    %3396 = vmatpush1.bf16.msra.mxu0 %v3298
    %3397 = vmatprep.subr.bf16.mxu0 %v3303
    %3398 = vmatpush1.bf16.msra.mxu0 %v3302
    %3399 = vmatprep.subr.bf16.mxu0 %v3307
    %3400 = vmatpush1.bf16.msra.mxu0 %v3306
    %3401 = vmatprep.subr.bf16.mxu0 %v3311
    %3402 = vmatpush1.bf16.msra.mxu0 %v3310
    %3403 = vmatprep.subr.bf16.mxu0 %v3315
    %3404 = vmatpush1.bf16.msra.mxu0 %v3314
    %3405 = vmatprep.subr.bf16.mxu0 0
    %3406 = vmatpush1.bf16.msra.mxu0 0
    %3407 = vmatprep.subr.bf16.mxu0 0
    %3408 = vmatpush1.bf16.msra.mxu0 0
    %3409 = vmatprep.subr.bf16.mxu0 0
    %3410 = vmatpush1.bf16.msra.mxu0 0
    %3411 = vmatprep.subr.bf16.mxu0 0
    %3412 = vmatpush1.bf16.msra.mxu0 0
    %3413 = vmatprep.subr.bf16.mxu0 0
    %3414 = vmatpush1.bf16.msra.mxu0 0
    %3415 = vmatprep.subr.bf16.mxu0 0
    %3416 = vmatpush1.bf16.msra.mxu0 0
    %3417 = vmatprep.subr.bf16.mxu0 0
    %3418 = vmatpush1.bf16.msra.mxu0 0
    %3419 = vmatprep.subr.bf16.mxu0 0
    %3420 = vmatpush1.bf16.msra.mxu0 0
    %3421 = vmatprep.mubr.bf16.mxu0 0
    %3422 = vmatmul.mubr.bf16.gmra.mrb[0].mxu0 %v3131
    %v3423 = vpop.f32.mrb[0].mxu0
    %v3424 = vadd.f32 %v3179, %v3423
    %v3425 = vpop.f32.mrb[0].mxu0
    %v3426 = vadd.f32 %v3183, %v3425
    %v3427 = vpop.f32.mrb[0].mxu0
    %v3428 = vpop.f32.mrb[0].mxu0
    %3429 = vdwg.mxu0
    %v3430 = vmul.f32 %v3383, 0.5
    %v3431 = vmul.f32 %v3385, 0.5
    %v3432 = vmul.f32 %v3424, 0.5
    %v3433 = vmul.f32 %v3426, 0.5
    %v3434 = vmul.f32 %v3383, %v3383
    %v3435 = vmul.f32 %v3385, %v3385
    %v3436 = vmul.f32 %v3424, %v3424
    %v3437 = vmul.f32 %v3426, %v3426
    %v3438 = vmul.f32 %v3383, %v3434
    %v3439 = vmul.f32 %v3385, %v3435
    %v3440 = vmul.f32 %v3424, %v3436
    %v3441 = vmul.f32 %v3426, %v3437
    %v3442 = vmul.f32 %v3438, 0.044715
    %v3443 = vmul.f32 %v3439, 0.044715
    %v3444 = vmul.f32 %v3440, 0.044715
    %v3445 = vmul.f32 %v3441, 0.044715
    %v3446 = vadd.f32 %v3383, %v3442
    %v3447 = vadd.f32 %v3385, %v3443
    %v3448 = vadd.f32 %v3424, %v3444
    %v3449 = vadd.f32 %v3426, %v3445
    %v3450 = vmul.f32 %v3446, 0.7978845
    %v3451 = vmul.f32 %v3447, 0.7978845
    %v3452 = vmul.f32 %v3448, 0.7978845
    %v3453 = vmul.f32 %v3449, 0.7978845
    %v3454 = vtanh.pop %v3450
    %v3455 = vtanh.pop %v3451
    %v3456 = vtanh.pop %v3452
    %v3457 = vtanh.pop %v3453
    %v3458 = vadd.f32 %v3454, 1.0
    %v3459 = vadd.f32 %v3455, 1.0
    %v3460 = vadd.f32 %v3456, 1.0
    %v3461 = vadd.f32 %v3457, 1.0
    %v3462 = vmul.f32 %v3430, %v3458
    %v3463 = vmul.f32 %v3431, %v3459
    %v3464 = vmul.f32 %v3432, %v3460
    %v3465 = vmul.f32 %v3433, %v3461
    %v3466 = vpack.c.bf16 %v3462, %v3462
    %v3467 = vpack.c.bf16 %v3463, %v3463
    %v3468 = vpack.c.bf16 %v3464, %v3464
    %v3469 = vpack.c.bf16 %v3465, %v3465
    %s3470 = scalar_lea.vmem %s15, 256
    %v3471 = vld [vmem:[%s3470] sm:$0xf]
    %v3472 = vld [vmem:[%s3470 + $0x4] sm:$0xf]
    %v3473 = vld [vmem:[%s3470 + $0x8] sm:$0xf]
    %v3474 = vld [vmem:[%s3470 + $0xc] sm:$0xf]
    %v3475 = vld [vmem:[%s3470 + $0x10] sm:$0xf]
    %v3476 = vld [vmem:[%s3470 + $0x14] sm:$0xf]
    %v3477 = vld [vmem:[%s3470 + $0x18] sm:$0xf]
    %v3478 = vld [vmem:[%s3470 + $0x1c] sm:$0xf]
    %v3479 = vld [vmem:[%s3470 + $0x20] sm:$0xf]
    %v3480 = vld [vmem:[%s3470 + $0x24] sm:$0xf]
    %v3481 = vld [vmem:[%s3470 + $0x28] sm:$0xf]
    %v3482 = vld [vmem:[%s3470 + $0x2c] sm:$0xf]
    %v3483 = vld [vmem:[%s3470 + $0x30] sm:$0xf]
    %v3484 = vld [vmem:[%s3470 + $0x34] sm:$0xf]
    %v3485 = vld [vmem:[%s3470 + $0x38] sm:$0xf]
    %v3486 = vld [vmem:[%s3470 + $0x3c] sm:$0xf]
    %v3487 = vld [vmem:[%s3470 + $0x40] sm:$0xf]
    %v3488 = vld [vmem:[%s3470 + $0x44] sm:$0xf]
    %v3489 = vld [vmem:[%s3470 + $0x48] sm:$0xf]
    %v3490 = vld [vmem:[%s3470 + $0x4c] sm:$0xf]
    %v3491 = vld [vmem:[%s3470 + $0x50] sm:$0xf]
    %v3492 = vld [vmem:[%s3470 + $0x54] sm:$0xf]
    %v3493 = vld [vmem:[%s3470 + $0x58] sm:$0xf]
    %v3494 = vld [vmem:[%s3470 + $0x5c] sm:$0xf]
    %v3495 = vld [vmem:[%s3470 + $0x60] sm:$0xf]
    %v3496 = vld [vmem:[%s3470 + $0x64] sm:$0xf]
    %v3497 = vld [vmem:[%s3470 + $0x68] sm:$0xf]
    %v3498 = vld [vmem:[%s3470 + $0x6c] sm:$0xf]
    %v3499 = vld [vmem:[%s3470 + $0x70] sm:$0xf]
    %v3500 = vld [vmem:[%s3470 + $0x74] sm:$0xf]
    %v3501 = vld [vmem:[%s3470 + $0x78] sm:$0xf]
    %v3502 = vld [vmem:[%s3470 + $0x7c] sm:$0xf]
    %v3503 = vld [vmem:[%s3470 + $0x80] sm:$0xf]
    %v3504 = vld [vmem:[%s3470 + $0x84] sm:$0xf]
    %v3505 = vld [vmem:[%s3470 + $0x88] sm:$0xf]
    %v3506 = vld [vmem:[%s3470 + $0x8c] sm:$0xf]
    %v3507 = vld [vmem:[%s3470 + $0x90] sm:$0xf]
    %v3508 = vld [vmem:[%s3470 + $0x94] sm:$0xf]
    %v3509 = vld [vmem:[%s3470 + $0x98] sm:$0xf]
    %v3510 = vld [vmem:[%s3470 + $0x9c] sm:$0xf]
    %v3511 = vld [vmem:[%s3470 + $0xa0] sm:$0xf]
    %v3512 = vld [vmem:[%s3470 + $0xa4] sm:$0xf]
    %v3513 = vld [vmem:[%s3470 + $0xa8] sm:$0xf]
    %v3514 = vld [vmem:[%s3470 + $0xac] sm:$0xf]
    %v3515 = vld [vmem:[%s3470 + $0xb0] sm:$0xf]
    %v3516 = vld [vmem:[%s3470 + $0xb4] sm:$0xf]
    %v3517 = vld [vmem:[%s3470 + $0xb8] sm:$0xf]
    %v3518 = vld [vmem:[%s3470 + $0xbc] sm:$0xf]
    %v3519 = vld [vmem:[%s3470 + $0xc0] sm:$0xf]
    %v3520 = vld [vmem:[%s3470 + $0xc4] sm:$0xf]
    %v3521 = vld [vmem:[%s3470 + $0xc8] sm:$0xf]
    %v3522 = vld [vmem:[%s3470 + $0xcc] sm:$0xf]
    %v3523 = vld [vmem:[%s3470 + $0xd0] sm:$0xf]
    %v3524 = vld [vmem:[%s3470 + $0xd4] sm:$0xf]
    %v3525 = vld [vmem:[%s3470 + $0xd8] sm:$0xf]
    %v3526 = vld [vmem:[%s3470 + $0xdc] sm:$0xf]
    %v3527 = vld [vmem:[%s3470 + $0xe0] sm:$0xf]
    %v3528 = vld [vmem:[%s3470 + $0xe4] sm:$0xf]
    %v3529 = vld [vmem:[%s3470 + $0xe8] sm:$0xf]
    %v3530 = vld [vmem:[%s3470 + $0xec] sm:$0xf]
    %v3531 = vld [vmem:[%s3470 + $0xf0] sm:$0xf]
    %v3532 = vld [vmem:[%s3470 + $0xf4] sm:$0xf]
    %v3533 = vld [vmem:[%s3470 + $0xf8] sm:$0xf]
    %v3534 = vld [vmem:[%s3470 + $0xfc] sm:$0xf]
    %v3599 = vunpack.c.l.b16 %v3471
    %v3600 = vunpack.c.l.b16 %v3472
    %v3601 = vunpack.c.l.b16 %v3473
    %v3602 = vunpack.c.l.b16 %v3474
    %v3603 = vunpack.c.l.b16 %v3475
    %v3604 = vunpack.c.l.b16 %v3476
    %v3605 = vunpack.c.l.b16 %v3477
    %v3606 = vunpack.c.l.b16 %v3478
    %v3607 = vunpack.c.l.b16 %v3479
    %v3608 = vunpack.c.l.b16 %v3480
    %v3609 = vunpack.c.l.b16 %v3481
    %v3610 = vunpack.c.l.b16 %v3482
    %v3611 = vunpack.c.l.b16 %v3483
    %v3612 = vunpack.c.l.b16 %v3484
    %v3613 = vunpack.c.l.b16 %v3485
    %v3614 = vunpack.c.l.b16 %v3486
    %v3615 = vunpack.c.l.b16 %v3487
    %v3616 = vunpack.c.l.b16 %v3488
    %v3617 = vunpack.c.l.b16 %v3489
    %v3618 = vunpack.c.l.b16 %v3490
    %v3619 = vunpack.c.l.b16 %v3491
    %v3620 = vunpack.c.l.b16 %v3492
    %v3621 = vunpack.c.l.b16 %v3493
    %v3622 = vunpack.c.l.b16 %v3494
    %v3623 = vunpack.c.l.b16 %v3495
    %v3624 = vunpack.c.l.b16 %v3496
    %v3625 = vunpack.c.l.b16 %v3497
    %v3626 = vunpack.c.l.b16 %v3498
    %v3627 = vunpack.c.l.b16 %v3499
    %v3628 = vunpack.c.l.b16 %v3500
    %v3629 = vunpack.c.l.b16 %v3501
    %v3630 = vunpack.c.l.b16 %v3502
    %v3631 = vunpack.c.l.b16 %v3503
    %v3632 = vunpack.c.l.b16 %v3504
    %v3633 = vunpack.c.l.b16 %v3505
    %v3634 = vunpack.c.l.b16 %v3506
    %v3635 = vunpack.c.l.b16 %v3507
    %v3636 = vunpack.c.l.b16 %v3508
    %v3637 = vunpack.c.l.b16 %v3509
    %v3638 = vunpack.c.l.b16 %v3510
    %v3639 = vunpack.c.l.b16 %v3511
    %v3640 = vunpack.c.l.b16 %v3512
    %v3641 = vunpack.c.l.b16 %v3513
    %v3642 = vunpack.c.l.b16 %v3514
    %v3643 = vunpack.c.l.b16 %v3515
    %v3644 = vunpack.c.l.b16 %v3516
    %v3645 = vunpack.c.l.b16 %v3517
    %v3646 = vunpack.c.l.b16 %v3518
    %v3647 = vunpack.c.l.b16 %v3519
    %v3648 = vunpack.c.l.b16 %v3520
    %v3649 = vunpack.c.l.b16 %v3521
    %v3650 = vunpack.c.l.b16 %v3522
    %v3651 = vunpack.c.l.b16 %v3523
    %v3652 = vunpack.c.l.b16 %v3524
    %v3653 = vunpack.c.l.b16 %v3525
    %v3654 = vunpack.c.l.b16 %v3526
    %v3655 = vunpack.c.l.b16 %v3527
    %v3656 = vunpack.c.l.b16 %v3528
    %v3657 = vunpack.c.l.b16 %v3529
    %v3658 = vunpack.c.l.b16 %v3530
    %v3659 = vunpack.c.l.b16 %v3531
    %v3660 = vunpack.c.l.b16 %v3532
    %v3661 = vunpack.c.l.b16 %v3533
    %v3662 = vunpack.c.l.b16 %v3534
    %v3663 = vpack.c.b16 %v3600, %v3599
    %v3664 = vpack.c.b16 %v3602, %v3601
    %v3665 = vpack.c.b16 %v3604, %v3603
    %v3666 = vpack.c.b16 %v3606, %v3605
    %v3667 = vpack.c.b16 %v3608, %v3607
    %v3668 = vpack.c.b16 %v3610, %v3609
    %v3669 = vpack.c.b16 %v3612, %v3611
    %v3670 = vpack.c.b16 %v3614, %v3613
    %v3671 = vpack.c.b16 %v3616, %v3615
    %v3672 = vpack.c.b16 %v3618, %v3617
    %v3673 = vpack.c.b16 %v3620, %v3619
    %v3674 = vpack.c.b16 %v3622, %v3621
    %v3675 = vpack.c.b16 %v3624, %v3623
    %v3676 = vpack.c.b16 %v3626, %v3625
    %v3677 = vpack.c.b16 %v3628, %v3627
    %v3678 = vpack.c.b16 %v3630, %v3629
    %v3679 = vpack.c.b16 %v3632, %v3631
    %v3680 = vpack.c.b16 %v3634, %v3633
    %v3681 = vpack.c.b16 %v3636, %v3635
    %v3682 = vpack.c.b16 %v3638, %v3637
    %v3683 = vpack.c.b16 %v3640, %v3639
    %v3684 = vpack.c.b16 %v3642, %v3641
    %v3685 = vpack.c.b16 %v3644, %v3643
    %v3686 = vpack.c.b16 %v3646, %v3645
    %v3687 = vpack.c.b16 %v3648, %v3647
    %v3688 = vpack.c.b16 %v3650, %v3649
    %v3689 = vpack.c.b16 %v3652, %v3651
    %v3690 = vpack.c.b16 %v3654, %v3653
    %v3691 = vpack.c.b16 %v3656, %v3655
    %v3692 = vpack.c.b16 %v3658, %v3657
    %v3693 = vpack.c.b16 %v3660, %v3659
    %v3694 = vpack.c.b16 %v3662, %v3661
    %3727 = vmatprep.subr.bf16.mxu0 0
    %3728 = vmatpush1.bf16.msra.mxu0 %v3663
    %3729 = vmatprep.subr.bf16.mxu0 0
    %3730 = vmatpush1.bf16.msra.mxu0 %v3664
    %3731 = vmatprep.subr.bf16.mxu0 0
    %3732 = vmatpush1.bf16.msra.mxu0 %v3665
    %3733 = vmatprep.subr.bf16.mxu0 0
    %3734 = vmatpush1.bf16.msra.mxu0 %v3666
    %3735 = vmatprep.subr.bf16.mxu0 0
    %3736 = vmatpush1.bf16.msra.mxu0 %v3667
    %3737 = vmatprep.subr.bf16.mxu0 0
    %3738 = vmatpush1.bf16.msra.mxu0 %v3668
    %3739 = vmatprep.subr.bf16.mxu0 0
    %3740 = vmatpush1.bf16.msra.mxu0 %v3669
    %3741 = vmatprep.subr.bf16.mxu0 0
    %3742 = vmatpush1.bf16.msra.mxu0 %v3670
    %3743 = vmatprep.subr.bf16.mxu0 0
    %3744 = vmatpush1.bf16.msra.mxu0 %v3671
    %3745 = vmatprep.subr.bf16.mxu0 0
    %3746 = vmatpush1.bf16.msra.mxu0 %v3672
    %3747 = vmatprep.subr.bf16.mxu0 0
    %3748 = vmatpush1.bf16.msra.mxu0 %v3673
    %3749 = vmatprep.subr.bf16.mxu0 0
    %3750 = vmatpush1.bf16.msra.mxu0 %v3674
    %3751 = vmatprep.subr.bf16.mxu0 0
    %3752 = vmatpush1.bf16.msra.mxu0 %v3675
    %3753 = vmatprep.subr.bf16.mxu0 0
    %3754 = vmatpush1.bf16.msra.mxu0 %v3676
    %3755 = vmatprep.subr.bf16.mxu0 0
    %3756 = vmatpush1.bf16.msra.mxu0 %v3677
    %3757 = vmatprep.subr.bf16.mxu0 0
    %3758 = vmatpush1.bf16.msra.mxu0 %v3678
    %3759 = vmatprep.mubr.bf16.mxu0 %v3467
    %3760 = vmatmul.mubr.bf16.gmra.mrb[0].mxu0 %v3466
    %v3761 = vpop.f32.mrb[0].mxu0
    %v3762 = vadd.f32 0.0, %v3761
    %v3763 = vpop.f32.mrb[0].mxu0
    %v3764 = vpop.f32.mrb[0].mxu0
    %v3765 = vpop.f32.mrb[0].mxu0
    %3766 = vdwg.mxu0
    %3767 = vmatprep.subr.bf16.mxu0 0
    %3768 = vmatpush1.bf16.msra.mxu0 %v3679
    %3769 = vmatprep.subr.bf16.mxu0 0
    %3770 = vmatpush1.bf16.msra.mxu0 %v3680
    %3771 = vmatprep.subr.bf16.mxu0 0
    %3772 = vmatpush1.bf16.msra.mxu0 %v3681
    %3773 = vmatprep.subr.bf16.mxu0 0
    %3774 = vmatpush1.bf16.msra.mxu0 %v3682
    %3775 = vmatprep.subr.bf16.mxu0 0
    %3776 = vmatpush1.bf16.msra.mxu0 %v3683
    %3777 = vmatprep.subr.bf16.mxu0 0
    %3778 = vmatpush1.bf16.msra.mxu0 %v3684
    %3779 = vmatprep.subr.bf16.mxu0 0
    %3780 = vmatpush1.bf16.msra.mxu0 %v3685
    %3781 = vmatprep.subr.bf16.mxu0 0
    %3782 = vmatpush1.bf16.msra.mxu0 %v3686
    %3783 = vmatprep.subr.bf16.mxu0 0
    %3784 = vmatpush1.bf16.msra.mxu0 %v3687
    %3785 = vmatprep.subr.bf16.mxu0 0
    %3786 = vmatpush1.bf16.msra.mxu0 %v3688
    %3787 = vmatprep.subr.bf16.mxu0 0
    %3788 = vmatpush1.bf16.msra.mxu0 %v3689
    %3789 = vmatprep.subr.bf16.mxu0 0
    %3790 = vmatpush1.bf16.msra.mxu0 %v3690
    %3791 = vmatprep.subr.bf16.mxu0 0
    %3792 = vmatpush1.bf16.msra.mxu0 %v3691
    %3793 = vmatprep.subr.bf16.mxu0 0
    %3794 = vmatpush1.bf16.msra.mxu0 %v3692
    %3795 = vmatprep.subr.bf16.mxu0 0
    %3796 = vmatpush1.bf16.msra.mxu0 %v3693
    %3797 = vmatprep.subr.bf16.mxu0 0
    %3798 = vmatpush1.bf16.msra.mxu0 %v3694
    %3799 = vmatprep.mubr.bf16.mxu0 %v3469
    %3800 = vmatmul.mubr.bf16.gmra.mrb[0].mxu0 %v3468
    %v3801 = vpop.f32.mrb[0].mxu0
    %v3802 = vadd.f32 %v3762, %v3801
    %v3803 = vpop.f32.mrb[0].mxu0
    %v3804 = vpop.f32.mrb[0].mxu0
    %v3805 = vpop.f32.mrb[0].mxu0
    %3806 = vdwg.mxu0
    %v3807 = vadd.f32 %v3101, %v3802
    %s3808 = scalar_lea.vmem %s16, 1
    %v3809 = vld [vmem:[%s3808] sm:$0x1]
    %v3811 = vlaneseq
    %v3812 = vshrl.u32 %v3811, 7
    %v3813 = vsub.s32 0, %v3812
    %v3814 = vrot.slane %v3809, %v3813
    %v3816 = vadd.f32 %v3807, %v3814
    %v3818 = vrot.slane %v3816, 3
    %v3820 = vrot.slane %v3816, 6
    %vm3822 = vcmask 1040384
    %v3823 = vsel %vm3822, %v3818, %v3820
    %v3824 = vld [vmem:[%s17] sm:$0x1]
    %v3825 = vld [vmem:[%s18] sm:$0x1]
    %vm3826 = vcmask 1041408
    %v3827 = vsel %vm3826, %v3823, 0.0
    %3828 = vadd.xlane.f32.xlu0 %v3827
    %v3829 = vpop.xlane.xlu0 %3828
    %v3830 = vmul.f32 %v3829, %v661
    %v3831 = vsub.f32 %v3823, %v3830
    %v3832 = vmul.f32 %v3831, %v3831
    %v3833 = vsel %vm3826, %v3832, 0.0
    %3834 = vadd.xlane.f32.xlu0 %v3833
    %v3835 = vpop.xlane.xlu0 %3834
    %v3836 = vmul.f32 %v3835, %v661
    %v3837 = vadd.f32 %v3836, 1e-05
    %v3838 = vrsqrt.pop %v3837
    %v3839 = vmul.f32 %v3831, %v3838
    %v3841 = vlaneseq
    %v3842 = vshrl.u32 %v3841, 7
    %v3843 = vsub.s32 0, %v3842
    %v3844 = vrot.slane %v3824, %v3843
    %v3846 = vmul.f32 %v3839, %v3844
    %v3848 = vlaneseq
    %v3849 = vshrl.u32 %v3848, 7
    %v3850 = vsub.s32 0, %v3849
    %v3851 = vrot.slane %v3825, %v3850
    %v3853 = vadd.f32 %v3846, %v3851
    %v3854 = vpack.c.bf16 %v3853, %v3853
    %v3855 = vld [vmem:[#allocation7] sm:$0xf]
    %v3856 = vld [vmem:[#allocation7 + $0x4] sm:$0xf]
    %v3857 = vld [vmem:[#allocation7 + $0x8] sm:$0xf]
    %v3858 = vld [vmem:[#allocation7 + $0xc] sm:$0xf]
    %v3859 = vld [vmem:[#allocation7 + $0x10] sm:$0xf]
    %v3860 = vld [vmem:[#allocation7 + $0x14] sm:$0xf]
    %v3861 = vld [vmem:[#allocation7 + $0x18] sm:$0xf]
    %v3862 = vld [vmem:[#allocation7 + $0x1c] sm:$0xf]
    %v3863 = vld [vmem:[#allocation7 + $0x20] sm:$0xf]
    %v3864 = vld [vmem:[#allocation7 + $0x24] sm:$0xf]
    %v3865 = vld [vmem:[#allocation7 + $0x28] sm:$0xf]
    %v3866 = vld [vmem:[#allocation7 + $0x2c] sm:$0xf]
    %v3867 = vld [vmem:[#allocation7 + $0x30] sm:$0xf]
    %v3868 = vld [vmem:[#allocation7 + $0x34] sm:$0xf]
    %v3869 = vld [vmem:[#allocation7 + $0x38] sm:$0xf]
    %v3870 = vld [vmem:[#allocation7 + $0x3c] sm:$0xf]
    %v3871 = vld [vmem:[%s20] sm:$0x1]
    %v3873 = vlaneseq
    %v3874 = vshrl.u32 %v3873, 7
    %v3875 = vsub.s32 0, %v3874
    %v3876 = vrot.slane %v3871, %v3875
    %v3894 = vunpack.c.l.b16 %v3855
    %v3895 = vunpack.c.l.b16 %v3856
    %v3896 = vunpack.c.l.b16 %v3857
    %v3897 = vunpack.c.l.b16 %v3858
    %v3898 = vunpack.c.l.b16 %v3859
    %v3899 = vunpack.c.l.b16 %v3860
    %v3900 = vunpack.c.l.b16 %v3861
    %v3901 = vunpack.c.l.b16 %v3862
    %v3902 = vunpack.c.l.b16 %v3863
    %v3903 = vunpack.c.l.b16 %v3864
    %v3904 = vunpack.c.l.b16 %v3865
    %v3905 = vunpack.c.l.b16 %v3866
    %v3906 = vunpack.c.l.b16 %v3867
    %v3907 = vunpack.c.l.b16 %v3868
    %v3908 = vunpack.c.l.b16 %v3869
    %v3909 = vunpack.c.l.b16 %v3870
    %v3910 = vpack.c.b16 %v3895, %v3894
    %v3911 = vpack.c.b16 %v3897, %v3896
    %v3912 = vpack.c.b16 %v3899, %v3898
    %v3913 = vpack.c.b16 %v3901, %v3900
    %v3914 = vpack.c.b16 %v3903, %v3902
    %v3915 = vpack.c.b16 %v3905, %v3904
    %v3916 = vpack.c.b16 %v3907, %v3906
    %v3917 = vpack.c.b16 %v3909, %v3908
    %3926 = vmatprep.subr.bf16.mxu0 0
    %3927 = vmatpush1.bf16.msra.mxu0 %v3910
    %3928 = vmatprep.subr.bf16.mxu0 0
    %3929 = vmatpush1.bf16.msra.mxu0 %v3911
    %3930 = vmatprep.subr.bf16.mxu0 0
    %3931 = vmatpush1.bf16.msra.mxu0 %v3912
    %3932 = vmatprep.subr.bf16.mxu0 0
    %3933 = vmatpush1.bf16.msra.mxu0 %v3913
    %3934 = vmatprep.subr.bf16.mxu0 0
    %3935 = vmatpush1.bf16.msra.mxu0 %v3914
    %3936 = vmatprep.subr.bf16.mxu0 0
    %3937 = vmatpush1.bf16.msra.mxu0 %v3915
    %3938 = vmatprep.subr.bf16.mxu0 0
    %3939 = vmatpush1.bf16.msra.mxu0 %v3916
    %3940 = vmatprep.subr.bf16.mxu0 0
    %3941 = vmatpush1.bf16.msra.mxu0 %v3917
    %3942 = vmatprep.subr.bf16.mxu0 0
    %3943 = vmatpush1.bf16.msra.mxu0 0
    %3944 = vmatprep.subr.bf16.mxu0 0
    %3945 = vmatpush1.bf16.msra.mxu0 0
    %3946 = vmatprep.subr.bf16.mxu0 0
    %3947 = vmatpush1.bf16.msra.mxu0 0
    %3948 = vmatprep.subr.bf16.mxu0 0
    %3949 = vmatpush1.bf16.msra.mxu0 0
    %3950 = vmatprep.subr.bf16.mxu0 0
    %3951 = vmatpush1.bf16.msra.mxu0 0
    %3952 = vmatprep.subr.bf16.mxu0 0
    %3953 = vmatpush1.bf16.msra.mxu0 0
    %3954 = vmatprep.subr.bf16.mxu0 0
    %3955 = vmatpush1.bf16.msra.mxu0 0
    %3956 = vmatprep.subr.bf16.mxu0 0
    %3957 = vmatpush1.bf16.msra.mxu0 0
    %3958 = vmatprep.mubr.bf16.mxu0 0
    %3959 = vmatmul.mubr.bf16.gmra.mrb[0].mxu0 %v3854
    %v3960 = vpop.f32.mrb[0].mxu0
    %v3961 = vadd.f32 %v3876, %v3960
    %v3962 = vpop.f32.mrb[0].mxu0
    %v3963 = vpop.f32.mrb[0].mxu0
    %v3964 = vpop.f32.mrb[0].mxu0
    %3965 = vdwg.mxu0
    %3966 = vst [vmem:[#allocation8] sm:$0x3] %v3961
    // Predicated region
    $region98: #{model_forward.1} parent=1 // pred_check
      _
    $region99: #{model_forward.1} parent=1 // pred_check_branch
      %3968 = sbr.rel (0) target = $region101
    $region100: #{model_forward.1} parent=1 // pred_region
      %s3970 = ssub.s32 32, 32
      %3971 = vsyncadd [#allocation4], %s3970
      %s3973 = sshll.u32 [#allocation8], 4
      %s3974 = int_to_ptr.vmem [resolvable:$true] %s3973
      %3976 = dma.vmem_to_hbm [thread:$0]  %s3974, 32, %s21, [#allocation4]
    $region101: #{model_forward.1} parent=1 // pred_fallthru
      _
    // Predicated region
    $region102: #{model_forward.1} parent=1 // pred_check
      _
    $region103: #{model_forward.1} parent=1 // pred_check_branch
      %3978 = sbr.rel (0) target = $region105
    $region104: #{model_forward.1} parent=1 // pred_region
      %3979 = dma.done [#allocation4], 32
    $region105: #{model_forward.1} parent=1 // pred_fallthru
      _
    %3980 = vsyncpa [#allocation3], 1
    %3981 = vsyncpa [#allocation6], 1
    %3982 = vsyncpa [#allocation4], 1

</llo_original>
